<compile_context>
chip_gen: v7x
topology: tpu7x:2x2x1
jax: 0.10.0
libtpu: 0.0.40
codegen_flags: <defaults>
</compile_context>

<pallas_src>
import functools

import jax
import jax.numpy as jnp
from jax import lax
from jax.experimental import pallas as pl
from jax.experimental.pallas import tpu as pltpu


def _decoder_kernel(pts_ref, feat_ref, w1_ref, b1_ref, w2h_ref, w2p_ref,
                    b2_ref, w3h_ref, w3p_ref, b3_ref, out_ref, wmat_ref,
                    *, H, W):
    # points tile (batch-invariant): (TN, 3) f32
    pts = pts_ref[0]
    # point_spheres * [1, -1, 1]  — built from iota, no captured constant.
    col = lax.broadcasted_iota(jnp.int32, pts.shape, 1)
    pts = jnp.where(col == 1, -pts, pts)

    TN = pts.shape[0]
    HW = H * W

    # ---- Build the one-hot bilinear sampling matrix ONCE per point tile ----
    # (points do not depend on batch; batch is the innermost grid axis)
    @pl.when(pl.program_id(1) == 0)
    def _build_wmat():
        xg = pts[:, 0:1]                         # (TN, 1) normalized x -> width
        yg = pts[:, 1:2]                         # (TN, 1) normalized y -> height
        ix = (xg + 1.0) * 0.5 * (W - 1)          # align_corners=True
        iy = (yg + 1.0) * 0.5 * (H - 1)
        x0 = jnp.floor(ix)
        y0 = jnp.floor(iy)
        x1 = x0 + 1.0
        y1 = y0 + 1.0
        wx1 = ix - x0
        wx0 = 1.0 - wx1
        wy1 = iy - y0
        wy0 = 1.0 - wy1
        x0i, x1i = x0.astype(jnp.int32), x1.astype(jnp.int32)
        y0i, y1i = y0.astype(jnp.int32), y1.astype(jnp.int32)

        iota = lax.broadcasted_iota(jnp.int32, (TN, HW), 1)
        wmat = jnp.zeros((TN, HW), jnp.float32)
        for xi, yi, wx, wy in ((x0i, y0i, wx0, wy0), (x1i, y0i, wx1, wy0),
                               (x0i, y1i, wx0, wy1), (x1i, y1i, wx1, wy1)):
            # zeros padding: fold the OOB mask into the scalar corner weight
            inb = (xi >= 0) & (xi < W) & (yi >= 0) & (yi < H)     # (TN, 1)
            w = wx * wy * inb.astype(jnp.float32)                 # (TN, 1)
            idx = yi * W + xi                                     # (TN, 1)
            wmat = wmat + jnp.where(iota == idx, w, 0.0)
        wmat_ref[...] = wmat.astype(wmat_ref.dtype)

    # ---- Sampling matmul on the MXU: samp[TN, C] = wmat @ feat^T ----
    feat = feat_ref[0]                           # (C, HW) bf16
    wmat = wmat_ref[...]                         # (TN, HW) bf16
    samp = lax.dot_general(wmat, feat, (((1,), (1,)), ((), ())),
                           preferred_element_type=jnp.float32)     # (TN, C)

    # bottleneck -> relu
    h1 = jnp.maximum(
        jnp.dot(samp, w1_ref[...], preferred_element_type=jnp.float32)
        + b1_ref[...], 0.0)
    # fc(cat([h1, pts])) -> relu   (concat realized as two matmuls)
    h2 = jnp.maximum(
        jnp.dot(h1, w2h_ref[...], preferred_element_type=jnp.float32)
        + jnp.dot(pts, w2p_ref[...], preferred_element_type=jnp.float32)
        + b2_ref[...], 0.0)
    # point_offset(cat([h2, pts])) -> tanh
    off = jnp.tanh(
        jnp.dot(h2, w3h_ref[...], preferred_element_type=jnp.float32)
        + jnp.dot(pts, w3p_ref[...], preferred_element_type=jnp.float32)
        + b3_ref[...])

    out_ref[0] = pts + off


def small_decoder_forward(x_nchw, points, params, *, tile_n=128):
    B, C, H, W = x_nchw.shape
    N = points.shape[1]
    assert N % tile_n == 0, "N must be a multiple of tile_n"
    HW = H * W

    # Free reshape (no HBM transpose); bf16 halves feat DMA bytes.
    feats = x_nchw.reshape(B, C, HW).astype(jnp.bfloat16)
    pts = points.astype(jnp.float32)             # (1, N, 3) — NOT broadcast over batch

    kernel = functools.partial(_decoder_kernel, H=H, W=W)
    full2d = lambda shape: pl.BlockSpec(shape, lambda n, b: (0, 0))

    out = pl.pallas_call(
        kernel,
        out_shape=jax.ShapeDtypeStruct((B, N, 3), jnp.float32),
        # point tiles outer ("parallel", >=2 blocks keeps v7x's 2nd TC busy),
        # batch innermost ("arbitrary") so wmat scratch is reused across b.
        grid=(N // tile_n, B),
        in_specs=[
            pl.BlockSpec((1, tile_n, 3), lambda n, b: (0, n, 0)),  # points (batch-invariant)
            pl.BlockSpec((1, C, HW), lambda n, b: (b, 0, 0)),      # feature map of batch b
            full2d(params["w1"].shape),
            full2d(params["b1"].shape),
            full2d(params["w2h"].shape),
            full2d(params["w2p"].shape),
            full2d(params["b2"].shape),
            full2d(params["w3h"].shape),
            full2d(params["w3p"].shape),
            full2d(params["b3"].shape),
        ],
        out_specs=pl.BlockSpec((1, tile_n, 3), lambda n, b: (b, n, 0)),
        scratch_shapes=[pltpu.VMEM((tile_n, HW), jnp.bfloat16)],   # cached sampling matrix
        compiler_params=pltpu.CompilerParams(
            dimension_semantics=("parallel", "arbitrary")),
    )(pts, feats, params["w1"], params["b1"], params["w2h"], params["w2p"],
      params["b2"], params["w3h"], params["w3p"], params["b3"])
    return out


def reference_forward(x_nchw, points, params):
    """Pure-JAX f32 reference (mirrors the PyTorch forward with P=None)."""
    B, C, H, W = x_nchw.shape
    N = points.shape[1]
    pts = jnp.broadcast_to(points, (B, N, 3)) * jnp.array([1.0, -1.0, 1.0], jnp.float32)
    xg = (pts[..., 0] + 1.0) * 0.5 * (W - 1)
    yg = (pts[..., 1] + 1.0) * 0.5 * (H - 1)
    x0 = jnp.floor(xg)
    y0 = jnp.floor(yg)
    x1, y1 = x0 + 1.0, y0 + 1.0
    wx1 = xg - x0
    wx0 = 1.0 - wx1
    wy1 = yg - y0
    wy0 = 1.0 - wy1
    feat = jnp.transpose(x_nchw, (0, 2, 3, 1)).reshape(B, H * W, C)

    def gather(xi, yi, w):
        xi_i = xi.astype(jnp.int32)
        yi_i = yi.astype(jnp.int32)
        inb = (xi_i >= 0) & (xi_i < W) & (yi_i >= 0) & (yi_i < H)
        xc = jnp.clip(xi_i, 0, W - 1)
        yc = jnp.clip(yi_i, 0, H - 1)
        vals = jnp.take_along_axis(feat, (yc * W + xc)[..., None], axis=1)  # (B, N, C)
        return vals * (w * inb)[..., None]

    samp = (gather(x0, y0, wx0 * wy0) + gather(x1, y0, wx1 * wy0)
            + gather(x0, y1, wx0 * wy1) + gather(x1, y1, wx1 * wy1))
    h1 = jax.nn.relu(samp @ params["w1"] + params["b1"])
    h2 = jax.nn.relu(h1 @ params["w2h"] + pts @ params["w2p"] + params["b2"])
    off = jnp.tanh(h2 @ params["w3h"] + pts @ params["w3p"] + params["b3"])
    return pts + off


if __name__ == "__main__":
    # Small shapes consistent with the module: x is NCHW with C = input_dim.
    B, C, H, W = 2, 64, 8, 8      # input_dim = 64
    hidden = 32                   # hidden_dim = 32
    N = 256                       # number of sphere points (2 tiles of 128)

    key = jax.random.PRNGKey(0)
    ks = jax.random.split(key, 10)
    x = jax.random.normal(ks[0], (B, C, H, W), jnp.float32)
    points = jax.random.normal(ks[1], (1, N, 3), jnp.float32)   # self.points buffer

    # Deterministic synthetic parameters (Linear weights stored as (in, out)).
    params = {
        "w1": 0.1 * jax.random.normal(ks[2], (C, hidden), jnp.float32),        # bottleneck
        "b1": 0.1 * jax.random.normal(ks[3], (1, hidden), jnp.float32),
        "w2h": 0.1 * jax.random.normal(ks[4], (hidden, hidden), jnp.float32),  # fc, feature part
        "w2p": 0.1 * jax.random.normal(ks[5], (3, hidden), jnp.float32),       # fc, point part
        "b2": 0.1 * jax.random.normal(ks[6], (1, hidden), jnp.float32),
        "w3h": 0.1 * jax.random.normal(ks[7], (hidden, 3), jnp.float32),       # point_offset, feature part
        "w3p": 0.1 * jax.random.normal(ks[8], (3, 3), jnp.float32),            # point_offset, point part
        "b3": 0.1 * jax.random.normal(ks[9], (1, 3), jnp.float32),
    }

    out = small_decoder_forward(x, points, params)
    jax.block_until_ready(out)

    ref = reference_forward(x, points, params)
    assert out.shape == (B, N, 3)
    err = float(jnp.max(jnp.abs(out - ref)))
    assert jnp.allclose(out, ref, atol=2e-2, rtol=2e-2), err
    print("KERNEL_OK")
</pallas_src>

<mosaic_0001>
module attributes {stable_mosaic.version = 11 : i64} {
  func.func @_decoder_kernel(%arg0: i32, %arg1: i32, %arg2: memref<1x128x3xf32, #tpu.memory_space<vmem>>, %arg3: memref<1x64x64xbf16, #tpu.memory_space<vmem>>, %arg4: memref<64x32xf32, #tpu.memory_space<vmem>>, %arg5: memref<1x32xf32, #tpu.memory_space<vmem>>, %arg6: memref<32x32xf32, #tpu.memory_space<vmem>>, %arg7: memref<3x32xf32, #tpu.memory_space<vmem>>, %arg8: memref<1x32xf32, #tpu.memory_space<vmem>>, %arg9: memref<32x3xf32, #tpu.memory_space<vmem>>, %arg10: memref<3x3xf32, #tpu.memory_space<vmem>>, %arg11: memref<1x3xf32, #tpu.memory_space<vmem>>, %arg12: memref<1x128x3xf32, #tpu.memory_space<vmem>>, %arg13: memref<128x64xbf16, #tpu.memory_space<vmem>>) attributes {dimension_semantics = [#tpu.dimension_semantics<parallel>, #tpu.dimension_semantics<arbitrary>], iteration_bounds = array<i64: 2, 2>, scalar_prefetch = 0 : i64, scratch_operands = 1 : i64, tpu.core_type = #tpu.core_type<tc>, window_params = [{transform_indices = @transform_0, window_bounds = array<i64: 1, 128, 3>}, {transform_indices = @transform_1, window_bounds = array<i64: 1, 64, 64>}, {pipeline_mode = #tpu.pipeline_mode<synchronous>, transform_indices = @transform_2, window_bounds = array<i64: 64, 32>}, {pipeline_mode = #tpu.pipeline_mode<synchronous>, transform_indices = @transform_3, window_bounds = array<i64: 1, 32>}, {pipeline_mode = #tpu.pipeline_mode<synchronous>, transform_indices = @transform_4, window_bounds = array<i64: 32, 32>}, {pipeline_mode = #tpu.pipeline_mode<synchronous>, transform_indices = @transform_5, window_bounds = array<i64: 3, 32>}, {pipeline_mode = #tpu.pipeline_mode<synchronous>, transform_indices = @transform_6, window_bounds = array<i64: 1, 32>}, {pipeline_mode = #tpu.pipeline_mode<synchronous>, transform_indices = @transform_7, window_bounds = array<i64: 32, 3>}, {pipeline_mode = #tpu.pipeline_mode<synchronous>, transform_indices = @transform_8, window_bounds = array<i64: 3, 3>}, {pipeline_mode = #tpu.pipeline_mode<synchronous>, transform_indices = @transform_9, window_bounds = array<i64: 1, 3>}, {transform_indices = @transform_10, window_bounds = array<i64: 1, 128, 3>}]} {
    %c0 = arith.constant 0 : index
    %c0_0 = arith.constant 0 : index
    %c0_1 = arith.constant 0 : index
    %0 = vector.load %arg2[%c0, %c0_0, %c0_1] : memref<1x128x3xf32, #tpu.memory_space<vmem>>, vector<1x128x3xf32>
    %1 = vector.shape_cast %0 : vector<1x128x3xf32> to vector<128x3xf32>
    %2 = tpu.iota {dimensions = array<i32: 1>} : vector<128x3xi32>
    %c1_i32 = arith.constant 1 : i32
    %3 = vector.broadcast %c1_i32 : i32 to vector<128x3xi32>
    %4 = arith.cmpi eq, %2, %3 : vector<128x3xi32>
    %cst = arith.constant 0.000000e+00 : f32
    %5 = vector.broadcast %cst : f32 to vector<128x3xf32>
    %6 = arith.subf %5, %1 : vector<128x3xf32>
    %7 = arith.select %4, %6, %1 : vector<128x3xi1>, vector<128x3xf32>
    %c0_i32 = arith.constant 0 : i32
    %8 = arith.cmpi eq, %arg1, %c0_i32 : i32
    %9 = arith.extui %8 : i1 to i32
    %c0_i32_2 = arith.constant 0 : i32
    %10 = arith.cmpi ne, %9, %c0_i32_2 : i32
    scf.if %10 {
      %45 = vector.extract_strided_slice %7 {offsets = [0, 0], sizes = [128, 1], strides = [1, 1]} : vector<128x3xf32> to vector<128x1xf32>
      %46 = vector.extract_strided_slice %7 {offsets = [0, 1], sizes = [128, 1], strides = [1, 1]} : vector<128x3xf32> to vector<128x1xf32>
      %cst_35 = arith.constant 1.000000e+00 : f32
      %47 = vector.broadcast %cst_35 : f32 to vector<128x1xf32>
      %48 = arith.addf %45, %47 : vector<128x1xf32>
      %cst_36 = arith.constant 5.000000e-01 : f32
      %49 = vector.broadcast %cst_36 : f32 to vector<128x1xf32>
      %50 = arith.mulf %48, %49 : vector<128x1xf32>
      %cst_37 = arith.constant 7.000000e+00 : f32
      %51 = vector.broadcast %cst_37 : f32 to vector<128x1xf32>
      %52 = arith.mulf %50, %51 : vector<128x1xf32>
      %cst_38 = arith.constant 1.000000e+00 : f32
      %53 = vector.broadcast %cst_38 : f32 to vector<128x1xf32>
      %54 = arith.addf %46, %53 : vector<128x1xf32>
      %cst_39 = arith.constant 5.000000e-01 : f32
      %55 = vector.broadcast %cst_39 : f32 to vector<128x1xf32>
      %56 = arith.mulf %54, %55 : vector<128x1xf32>
      %cst_40 = arith.constant 7.000000e+00 : f32
      %57 = vector.broadcast %cst_40 : f32 to vector<128x1xf32>
      %58 = arith.mulf %56, %57 : vector<128x1xf32>
      %59 = math.floor %52 : vector<128x1xf32>
      %60 = math.floor %58 : vector<128x1xf32>
      %cst_41 = arith.constant 1.000000e+00 : f32
      %61 = vector.broadcast %cst_41 : f32 to vector<128x1xf32>
      %62 = arith.addf %59, %61 : vector<128x1xf32>
      %cst_42 = arith.constant 1.000000e+00 : f32
      %63 = vector.broadcast %cst_42 : f32 to vector<128x1xf32>
      %64 = arith.addf %60, %63 : vector<128x1xf32>
      %65 = arith.subf %52, %59 : vector<128x1xf32>
      %cst_43 = arith.constant 1.000000e+00 : f32
      %66 = vector.broadcast %cst_43 : f32 to vector<128x1xf32>
      %67 = arith.subf %66, %65 : vector<128x1xf32>
      %68 = arith.subf %58, %60 : vector<128x1xf32>
      %cst_44 = arith.constant 1.000000e+00 : f32
      %69 = vector.broadcast %cst_44 : f32 to vector<128x1xf32>
      %70 = arith.subf %69, %68 : vector<128x1xf32>
      %71 = arith.fptosi %59 : vector<128x1xf32> to vector<128x1xi32>
      %72 = arith.fptosi %62 : vector<128x1xf32> to vector<128x1xi32>
      %73 = arith.fptosi %60 : vector<128x1xf32> to vector<128x1xi32>
      %74 = arith.fptosi %64 : vector<128x1xf32> to vector<128x1xi32>
      %75 = tpu.iota {dimensions = array<i32: 1>} : vector<128x64xi32>
      %cst_45 = arith.constant 0.000000e+00 : f32
      %76 = vector.broadcast %cst_45 : f32 to vector<128x64xf32>
      %c0_i32_46 = arith.constant 0 : i32
      %77 = vector.broadcast %c0_i32_46 : i32 to vector<128x1xi32>
      %78 = arith.cmpi sge, %71, %77 : vector<128x1xi32>
      %c8_i32 = arith.constant 8 : i32
      %79 = vector.broadcast %c8_i32 : i32 to vector<128x1xi32>
      %80 = arith.cmpi slt, %71, %79 : vector<128x1xi32>
      %81 = arith.andi %78, %80 : vector<128x1xi1>
      %c0_i32_47 = arith.constant 0 : i32
      %82 = vector.broadcast %c0_i32_47 : i32 to vector<128x1xi32>
      %83 = arith.cmpi sge, %73, %82 : vector<128x1xi32>
      %84 = arith.andi %81, %83 : vector<128x1xi1>
      %c8_i32_48 = arith.constant 8 : i32
      %85 = vector.broadcast %c8_i32_48 : i32 to vector<128x1xi32>
      %86 = arith.cmpi slt, %73, %85 : vector<128x1xi32>
      %87 = arith.andi %84, %86 : vector<128x1xi1>
      %88 = arith.mulf %67, %70 : vector<128x1xf32>
      %89 = arith.extui %87 : vector<128x1xi1> to vector<128x1xi32>
      %90 = arith.sitofp %89 : vector<128x1xi32> to vector<128x1xf32>
      %91 = arith.mulf %88, %90 : vector<128x1xf32>
      %c8_i32_49 = arith.constant 8 : i32
      %92 = vector.broadcast %c8_i32_49 : i32 to vector<128x1xi32>
      %93 = arith.muli %73, %92 : vector<128x1xi32>
      %94 = arith.addi %93, %71 : vector<128x1xi32>
      %95 = vector.broadcast %94 : vector<128x1xi32> to vector<128x64xi32>
      %96 = arith.cmpi eq, %75, %95 : vector<128x64xi32>
      %cst_50 = arith.constant 0.000000e+00 : f32
      %97 = vector.shape_cast %91 : vector<128x1xf32> to vector<128x1xf32>
      %98 = vector.broadcast %97 : vector<128x1xf32> to vector<128x64xf32>
      %99 = vector.broadcast %cst_50 : f32 to vector<128x64xf32>
      %100 = arith.select %96, %98, %99 : vector<128x64xi1>, vector<128x64xf32>
      %101 = arith.addf %76, %100 : vector<128x64xf32>
      %c0_i32_51 = arith.constant 0 : i32
      %102 = vector.broadcast %c0_i32_51 : i32 to vector<128x1xi32>
      %103 = arith.cmpi sge, %72, %102 : vector<128x1xi32>
      %c8_i32_52 = arith.constant 8 : i32
      %104 = vector.broadcast %c8_i32_52 : i32 to vector<128x1xi32>
      %105 = arith.cmpi slt, %72, %104 : vector<128x1xi32>
      %106 = arith.andi %103, %105 : vector<128x1xi1>
      %c0_i32_53 = arith.constant 0 : i32
      %107 = vector.broadcast %c0_i32_53 : i32 to vector<128x1xi32>
      %108 = arith.cmpi sge, %73, %107 : vector<128x1xi32>
      %109 = arith.andi %106, %108 : vector<128x1xi1>
      %c8_i32_54 = arith.constant 8 : i32
      %110 = vector.broadcast %c8_i32_54 : i32 to vector<128x1xi32>
      %111 = arith.cmpi slt, %73, %110 : vector<128x1xi32>
      %112 = arith.andi %109, %111 : vector<128x1xi1>
      %113 = arith.mulf %65, %70 : vector<128x1xf32>
      %114 = arith.extui %112 : vector<128x1xi1> to vector<128x1xi32>
      %115 = arith.sitofp %114 : vector<128x1xi32> to vector<128x1xf32>
      %116 = arith.mulf %113, %115 : vector<128x1xf32>
      %c8_i32_55 = arith.constant 8 : i32
      %117 = vector.broadcast %c8_i32_55 : i32 to vector<128x1xi32>
      %118 = arith.muli %73, %117 : vector<128x1xi32>
      %119 = arith.addi %118, %72 : vector<128x1xi32>
      %120 = vector.broadcast %119 : vector<128x1xi32> to vector<128x64xi32>
      %121 = arith.cmpi eq, %75, %120 : vector<128x64xi32>
      %cst_56 = arith.constant 0.000000e+00 : f32
      %122 = vector.shape_cast %116 : vector<128x1xf32> to vector<128x1xf32>
      %123 = vector.broadcast %122 : vector<128x1xf32> to vector<128x64xf32>
      %124 = vector.broadcast %cst_56 : f32 to vector<128x64xf32>
      %125 = arith.select %121, %123, %124 : vector<128x64xi1>, vector<128x64xf32>
      %126 = arith.addf %101, %125 : vector<128x64xf32>
      %c0_i32_57 = arith.constant 0 : i32
      %127 = vector.broadcast %c0_i32_57 : i32 to vector<128x1xi32>
      %128 = arith.cmpi sge, %71, %127 : vector<128x1xi32>
      %c8_i32_58 = arith.constant 8 : i32
      %129 = vector.broadcast %c8_i32_58 : i32 to vector<128x1xi32>
      %130 = arith.cmpi slt, %71, %129 : vector<128x1xi32>
      %131 = arith.andi %128, %130 : vector<128x1xi1>
      %c0_i32_59 = arith.constant 0 : i32
      %132 = vector.broadcast %c0_i32_59 : i32 to vector<128x1xi32>
      %133 = arith.cmpi sge, %74, %132 : vector<128x1xi32>
      %134 = arith.andi %131, %133 : vector<128x1xi1>
      %c8_i32_60 = arith.constant 8 : i32
      %135 = vector.broadcast %c8_i32_60 : i32 to vector<128x1xi32>
      %136 = arith.cmpi slt, %74, %135 : vector<128x1xi32>
      %137 = arith.andi %134, %136 : vector<128x1xi1>
      %138 = arith.mulf %67, %68 : vector<128x1xf32>
      %139 = arith.extui %137 : vector<128x1xi1> to vector<128x1xi32>
      %140 = arith.sitofp %139 : vector<128x1xi32> to vector<128x1xf32>
      %141 = arith.mulf %138, %140 : vector<128x1xf32>
      %c8_i32_61 = arith.constant 8 : i32
      %142 = vector.broadcast %c8_i32_61 : i32 to vector<128x1xi32>
      %143 = arith.muli %74, %142 : vector<128x1xi32>
      %144 = arith.addi %143, %71 : vector<128x1xi32>
      %145 = vector.broadcast %144 : vector<128x1xi32> to vector<128x64xi32>
      %146 = arith.cmpi eq, %75, %145 : vector<128x64xi32>
      %cst_62 = arith.constant 0.000000e+00 : f32
      %147 = vector.shape_cast %141 : vector<128x1xf32> to vector<128x1xf32>
      %148 = vector.broadcast %147 : vector<128x1xf32> to vector<128x64xf32>
      %149 = vector.broadcast %cst_62 : f32 to vector<128x64xf32>
      %150 = arith.select %146, %148, %149 : vector<128x64xi1>, vector<128x64xf32>
      %151 = arith.addf %126, %150 : vector<128x64xf32>
      %c0_i32_63 = arith.constant 0 : i32
      %152 = vector.broadcast %c0_i32_63 : i32 to vector<128x1xi32>
      %153 = arith.cmpi sge, %72, %152 : vector<128x1xi32>
      %c8_i32_64 = arith.constant 8 : i32
      %154 = vector.broadcast %c8_i32_64 : i32 to vector<128x1xi32>
      %155 = arith.cmpi slt, %72, %154 : vector<128x1xi32>
      %156 = arith.andi %153, %155 : vector<128x1xi1>
      %c0_i32_65 = arith.constant 0 : i32
      %157 = vector.broadcast %c0_i32_65 : i32 to vector<128x1xi32>
      %158 = arith.cmpi sge, %74, %157 : vector<128x1xi32>
      %159 = arith.andi %156, %158 : vector<128x1xi1>
      %c8_i32_66 = arith.constant 8 : i32
      %160 = vector.broadcast %c8_i32_66 : i32 to vector<128x1xi32>
      %161 = arith.cmpi slt, %74, %160 : vector<128x1xi32>
      %162 = arith.andi %159, %161 : vector<128x1xi1>
      %163 = arith.mulf %65, %68 : vector<128x1xf32>
      %164 = arith.extui %162 : vector<128x1xi1> to vector<128x1xi32>
      %165 = arith.sitofp %164 : vector<128x1xi32> to vector<128x1xf32>
      %166 = arith.mulf %163, %165 : vector<128x1xf32>
      %c8_i32_67 = arith.constant 8 : i32
      %167 = vector.broadcast %c8_i32_67 : i32 to vector<128x1xi32>
      %168 = arith.muli %74, %167 : vector<128x1xi32>
      %169 = arith.addi %168, %72 : vector<128x1xi32>
      %170 = vector.broadcast %169 : vector<128x1xi32> to vector<128x64xi32>
      %171 = arith.cmpi eq, %75, %170 : vector<128x64xi32>
      %cst_68 = arith.constant 0.000000e+00 : f32
      %172 = vector.shape_cast %166 : vector<128x1xf32> to vector<128x1xf32>
      %173 = vector.broadcast %172 : vector<128x1xf32> to vector<128x64xf32>
      %174 = vector.broadcast %cst_68 : f32 to vector<128x64xf32>
      %175 = arith.select %171, %173, %174 : vector<128x64xi1>, vector<128x64xf32>
      %176 = arith.addf %151, %175 : vector<128x64xf32>
      %177 = arith.truncf %176 : vector<128x64xf32> to vector<128x64xbf16>
      %c0_69 = arith.constant 0 : index
      %c0_70 = arith.constant 0 : index
      %178 = vector.load %arg13[%c0_69, %c0_70] : memref<128x64xbf16, #tpu.memory_space<vmem>>, vector<128x64xbf16>
      tpu.vector_store %arg13[%c0_69, %c0_70], %177 {strides = array<i32>} : memref<128x64xbf16, #tpu.memory_space<vmem>>, vector<128x64xbf16>,
    } else {
    }
    %c0_3 = arith.constant 0 : index
    %c0_4 = arith.constant 0 : index
    %c0_5 = arith.constant 0 : index
    %11 = vector.load %arg3[%c0_3, %c0_4, %c0_5] : memref<1x64x64xbf16, #tpu.memory_space<vmem>>, vector<1x64x64xbf16>
    %12 = vector.shape_cast %11 : vector<1x64x64xbf16> to vector<64x64xbf16>
    %c0_6 = arith.constant 0 : index
    %c0_7 = arith.constant 0 : index
    %13 = vector.load %arg13[%c0_6, %c0_7] : memref<128x64xbf16, #tpu.memory_space<vmem>>, vector<128x64xbf16>
    %cst_8 = arith.constant dense<0.000000e+00> : vector<128x64xf32>
    %14 = tpu.matmul %13, %12, %cst_8 {dimension_numbers = #tpu.dot_dimension_numbers<[1], [1], [0], [0], [0, 0, 1, 0], [], []>} : vector<128x64xbf16>, vector<64x64xbf16>, vector<128x64xf32> -> vector<128x64xf32>
    %c0_9 = arith.constant 0 : index
    %c0_10 = arith.constant 0 : index
    %15 = vector.load %arg4[%c0_9, %c0_10] : memref<64x32xf32, #tpu.memory_space<vmem>>, vector<64x32xf32>
    %cst_11 = arith.constant dense<0.000000e+00> : vector<128x32xf32>
    %16 = tpu.matmul %14, %15, %cst_11 {dimension_numbers = #tpu.dot_dimension_numbers<[1], [0], [0], [1], [0, 0, 1, 1], [], []>} : vector<128x64xf32>, vector<64x32xf32>, vector<128x32xf32> -> vector<128x32xf32>
    %c0_12 = arith.constant 0 : index
    %c0_13 = arith.constant 0 : index
    %17 = vector.load %arg5[%c0_12, %c0_13] : memref<1x32xf32, #tpu.memory_space<vmem>>, vector<1x32xf32>
    %18 = vector.broadcast %17 : vector<1x32xf32> to vector<128x32xf32>
    %19 = arith.addf %16, %18 : vector<128x32xf32>
    %cst_14 = arith.constant 0.000000e+00 : f32
    %20 = vector.broadcast %cst_14 : f32 to vector<128x32xf32>
    %21 = arith.maximumf %19, %20 : vector<128x32xf32>
    %c0_15 = arith.constant 0 : index
    %c0_16 = arith.constant 0 : index
    %22 = vector.load %arg6[%c0_15, %c0_16] : memref<32x32xf32, #tpu.memory_space<vmem>>, vector<32x32xf32>
    %cst_17 = arith.constant dense<0.000000e+00> : vector<128x32xf32>
    %23 = tpu.matmul %21, %22, %cst_17 {dimension_numbers = #tpu.dot_dimension_numbers<[1], [0], [0], [1], [0, 0, 1, 1], [], []>} : vector<128x32xf32>, vector<32x32xf32>, vector<128x32xf32> -> vector<128x32xf32>
    %c0_18 = arith.constant 0 : index
    %c0_19 = arith.constant 0 : index
    %24 = vector.load %arg7[%c0_18, %c0_19] : memref<3x32xf32, #tpu.memory_space<vmem>>, vector<3x32xf32>
    %cst_20 = arith.constant dense<0.000000e+00> : vector<128x32xf32>
    %25 = tpu.matmul %7, %24, %cst_20 {dimension_numbers = #tpu.dot_dimension_numbers<[1], [0], [0], [1], [0, 0, 1, 1], [], []>} : vector<128x3xf32>, vector<3x32xf32>, vector<128x32xf32> -> vector<128x32xf32>
    %26 = arith.addf %23, %25 : vector<128x32xf32>
    %c0_21 = arith.constant 0 : index
    %c0_22 = arith.constant 0 : index
    %27 = vector.load %arg8[%c0_21, %c0_22] : memref<1x32xf32, #tpu.memory_space<vmem>>, vector<1x32xf32>
    %28 = vector.broadcast %27 : vector<1x32xf32> to vector<128x32xf32>
    %29 = arith.addf %26, %28 : vector<128x32xf32>
    %cst_23 = arith.constant 0.000000e+00 : f32
    %30 = vector.broadcast %cst_23 : f32 to vector<128x32xf32>
    %31 = arith.maximumf %29, %30 : vector<128x32xf32>
    %c0_24 = arith.constant 0 : index
    %c0_25 = arith.constant 0 : index
    %32 = vector.load %arg9[%c0_24, %c0_25] : memref<32x3xf32, #tpu.memory_space<vmem>>, vector<32x3xf32>
    %cst_26 = arith.constant dense<0.000000e+00> : vector<128x3xf32>
    %33 = tpu.matmul %31, %32, %cst_26 {dimension_numbers = #tpu.dot_dimension_numbers<[1], [0], [0], [1], [0, 0, 1, 1], [], []>} : vector<128x32xf32>, vector<32x3xf32>, vector<128x3xf32> -> vector<128x3xf32>
    %c0_27 = arith.constant 0 : index
    %c0_28 = arith.constant 0 : index
    %34 = vector.load %arg10[%c0_27, %c0_28] : memref<3x3xf32, #tpu.memory_space<vmem>>, vector<3x3xf32>
    %cst_29 = arith.constant dense<0.000000e+00> : vector<128x3xf32>
    %35 = tpu.matmul %7, %34, %cst_29 {dimension_numbers = #tpu.dot_dimension_numbers<[1], [0], [0], [1], [0, 0, 1, 1], [], []>} : vector<128x3xf32>, vector<3x3xf32>, vector<128x3xf32> -> vector<128x3xf32>
    %36 = arith.addf %33, %35 : vector<128x3xf32>
    %c0_30 = arith.constant 0 : index
    %c0_31 = arith.constant 0 : index
    %37 = vector.load %arg11[%c0_30, %c0_31] : memref<1x3xf32, #tpu.memory_space<vmem>>, vector<1x3xf32>
    %38 = vector.broadcast %37 : vector<1x3xf32> to vector<128x3xf32>
    %39 = arith.addf %36, %38 : vector<128x3xf32>
    %40 = math.tanh %39 : vector<128x3xf32>
    %41 = arith.addf %7, %40 : vector<128x3xf32>
    %c0_32 = arith.constant 0 : index
    %c0_33 = arith.constant 0 : index
    %c0_34 = arith.constant 0 : index
    %42 = vector.load %arg12[%c0_32, %c0_33, %c0_34] : memref<1x128x3xf32, #tpu.memory_space<vmem>>, vector<1x128x3xf32>
    %43 = vector.shape_cast %42 : vector<1x128x3xf32> to vector<128x3xf32>
    %44 = vector.shape_cast %41 : vector<128x3xf32> to vector<1x128x3xf32>
    tpu.vector_store %arg12[%c0_32, %c0_33, %c0_34], %44 {strides = array<i32>} : memref<1x128x3xf32, #tpu.memory_space<vmem>>, vector<1x128x3xf32>,
    return
  }
  func.func @transform_0(%arg0: i32, %arg1: i32) -> (i32, i32, i32) {
    %c0_i32 = arith.constant 0 : i32
    %c0_i32_0 = arith.constant 0 : i32
    %c0_i32_1 = arith.constant 0 : i32
    return %c0_i32, %arg0, %c0_i32_0 : i32, i32, i32
  }
  func.func @transform_1(%arg0: i32, %arg1: i32) -> (i32, i32, i32) {
    %c0_i32 = arith.constant 0 : i32
    %c0_i32_0 = arith.constant 0 : i32
    %c0_i32_1 = arith.constant 0 : i32
    return %arg1, %c0_i32, %c0_i32_0 : i32, i32, i32
  }
  func.func @transform_2(%arg0: i32, %arg1: i32) -> (i32, i32) {
    %c0_i32 = arith.constant 0 : i32
    %c0_i32_0 = arith.constant 0 : i32
    %c0_i32_1 = arith.constant 0 : i32
    return %c0_i32, %c0_i32_0 : i32, i32
  }
  func.func @transform_3(%arg0: i32, %arg1: i32) -> (i32, i32) {
    %c0_i32 = arith.constant 0 : i32
    %c0_i32_0 = arith.constant 0 : i32
    %c0_i32_1 = arith.constant 0 : i32
    return %c0_i32, %c0_i32_0 : i32, i32
  }
  func.func @transform_4(%arg0: i32, %arg1: i32) -> (i32, i32) {
    %c0_i32 = arith.constant 0 : i32
    %c0_i32_0 = arith.constant 0 : i32
    %c0_i32_1 = arith.constant 0 : i32
    return %c0_i32, %c0_i32_0 : i32, i32
  }
  func.func @transform_5(%arg0: i32, %arg1: i32) -> (i32, i32) {
    %c0_i32 = arith.constant 0 : i32
    %c0_i32_0 = arith.constant 0 : i32
    %c0_i32_1 = arith.constant 0 : i32
    return %c0_i32, %c0_i32_0 : i32, i32
  }
  func.func @transform_6(%arg0: i32, %arg1: i32) -> (i32, i32) {
    %c0_i32 = arith.constant 0 : i32
    %c0_i32_0 = arith.constant 0 : i32
    %c0_i32_1 = arith.constant 0 : i32
    return %c0_i32, %c0_i32_0 : i32, i32
  }
  func.func @transform_7(%arg0: i32, %arg1: i32) -> (i32, i32) {
    %c0_i32 = arith.constant 0 : i32
    %c0_i32_0 = arith.constant 0 : i32
    %c0_i32_1 = arith.constant 0 : i32
    return %c0_i32, %c0_i32_0 : i32, i32
  }
  func.func @transform_8(%arg0: i32, %arg1: i32) -> (i32, i32) {
    %c0_i32 = arith.constant 0 : i32
    %c0_i32_0 = arith.constant 0 : i32
    %c0_i32_1 = arith.constant 0 : i32
    return %c0_i32, %c0_i32_0 : i32, i32
  }
  func.func @transform_9(%arg0: i32, %arg1: i32) -> (i32, i32) {
    %c0_i32 = arith.constant 0 : i32
    %c0_i32_0 = arith.constant 0 : i32
    %c0_i32_1 = arith.constant 0 : i32
    return %c0_i32, %c0_i32_0 : i32, i32
  }
  func.func @transform_10(%arg0: i32, %arg1: i32) -> (i32, i32, i32) {
    %c0_i32 = arith.constant 0 : i32
    %c0_i32_0 = arith.constant 0 : i32
    return %arg1, %arg0, %c0_i32 : i32, i32, i32
  }
}

</mosaic_0001>

<llo_original>
// kernel: tpu_custom_call.1
$region0: #{tpu_custom_call.1}
  #allocation0 [shape = 'u32[]', space=smem, size = 0x4, offset = 0x4, fixed_abs, tag = 'smem constant byte address 0x4 - core index']
  #allocation1 [shape = 'u32[144,128]{1,0:T(1,128)}', space=vmem, size = 0x12000, scoped, tag = 'internal scratch']
  #allocation2 [shape = 'bf16[128,64]{1,0:T(16,128)(2,1)}', space=vmem, size = 0x8000, scoped, tag = 'scratch operand']
  %s0 = inlined_call_operand.vmem [shape: f32[1,256,3], index: 0, kind: input, shape index: {}]
  %s1 = inlined_call_operand.vmem [shape: bf16[2,64,64], index: 1, kind: input, shape index: {}]
  %s2 = inlined_call_operand.vmem [shape: f32[64,32], index: 2, kind: input, shape index: {}]
  %s3 = inlined_call_operand.vmem [shape: f32[1,32], index: 3, kind: input, shape index: {}]
  %s4 = inlined_call_operand.vmem [shape: f32[32,32], index: 4, kind: input, shape index: {}]
  %s5 = inlined_call_operand.vmem [shape: f32[3,32], index: 5, kind: input, shape index: {}]
  %s6 = inlined_call_operand.vmem [shape: f32[1,32], index: 6, kind: input, shape index: {}]
  %s7 = inlined_call_operand.vmem [shape: f32[32,3], index: 7, kind: input, shape index: {}]
  %s8 = inlined_call_operand.vmem [shape: f32[3,3], index: 8, kind: input, shape index: {}]
  %s9 = inlined_call_operand.vmem [shape: f32[1,3], index: 9, kind: input, shape index: {}]
  %s10 = inlined_call_operand.vmem [shape: f32[2,256,3], index: 10, kind: output, shape index: {}]
  %s11 = sld [smem:[#allocation0]]
  $region77: #{tpu_custom_call.1} parent=0
    _
  %s13 = ssub.s32 1, %s11
  %s14 = scalar_select 0, %s13, %s11
  loop: start=0, step=1, limit=6
  $region2: #{tpu_custom_call.1} parent=0 // loop_pre_header
    _
  $region3: #{tpu_custom_call.1} parent=0 // loop_header
    %s16 = sphi 0, %s20
    %p17 = scmp.ge.s32.totalorder %s16, 6
    %s23 = sphi 0, %s35
    %s24 = sphi 0, %s31
    %s25 = sphi 0, %s23
    %s26 = sphi 0, %s24
    %s27 = sphi 0, %s25
    %s28 = sphi 0, %s26
    %s38 = sphi 0, %s40
    %s41 = sphi 0, %s38
    %s42 = sphi 0, %s41
    %s58 = sphi 0, %s42
    %s64 = sphi 0, %s66
    %s67 = sphi 0, %s64
    %s68 = sphi 0, %s67
    %s84 = sphi 0, %s68
    %s88 = sphi 0, %s88
    %s90 = sphi 0, %s88
    %s91 = sphi 0, %s90
    %s105 = sphi 0, %s91
    %s109 = sphi 0, %s109
    %s111 = sphi 0, %s109
    %s112 = sphi 0, %s111
    %s126 = sphi 0, %s112
    %s130 = sphi 0, %s130
    %s132 = sphi 0, %s130
    %s133 = sphi 0, %s132
    %s147 = sphi 0, %s133
    %s151 = sphi 0, %s151
    %s153 = sphi 0, %s151
    %s154 = sphi 0, %s153
    %s168 = sphi 0, %s154
    %s172 = sphi 0, %s172
    %s174 = sphi 0, %s172
    %s175 = sphi 0, %s174
    %s189 = sphi 0, %s175
    %s193 = sphi 0, %s193
    %s195 = sphi 0, %s193
    %s196 = sphi 0, %s195
    %s210 = sphi 0, %s196
    %s214 = sphi 0, %s214
    %s216 = sphi 0, %s214
    %s217 = sphi 0, %s216
    %s231 = sphi 0, %s217
    %s235 = sphi 0, %s235
    %s237 = sphi 0, %s235
    %s238 = sphi 0, %s237
    %s252 = sphi 0, %s238
    %s260 = sphi 0, %s262
    %s263 = sphi 0, %s260
    %s264 = sphi 0, %s263
    %s280 = sphi 0, %s264
  $region4: #{tpu_custom_call.1} parent=0 // loop_header_branch
    %19 = sbr.rel (%p17) target = $region8
  $region5: #{tpu_custom_call.1} parent=0 // loop_body
    %s21 = ssub.s32 %s16, 1
    %s22 = ssub.s32 %s16, 2
    %s29 = sadd.s32 1, %s24
    %p30 = scmp.ge.s32.totalorder %s29, 2
    %s31 = scalar_select %p30, 0, %s29
    %s32 = sadd.s32 1, %s23
    %s33 = scalar_select %p30, %s32, %s23
    %p34 = scmp.ge.s32.totalorder %s33, 2
    %s35 = scalar_select %p34, 0, %s33
    %s36 = ssub.s32 %s23, %s35
    %p37 = scmp.eq.s32.totalorder %s36, 0
    %s39 = sadd.s32 %s38, 1
    %s40 = scalar_select %p37, %s38, %s39
    %p43 = pneg %p37
    %p44 = scmp.eq.s32.totalorder %s16, 3
    %p45 = por %p43, %p44
    %p46 = scmp.ne.s32.totalorder %s38, %s41
    %p47 = scmp.eq.s32.totalorder %s16, 0
    %p48 = por %p46, %p47
    %p49 = scmp.ne.s32.totalorder %s38, %s41
    %p50 = scmp.eq.s32.totalorder %s21, 3
    %p51 = por %p49, %p50
    %p52 = scmp.ne.s32.totalorder %s41, %s42
    %p53 = scmp.eq.s32.totalorder %s21, 0
    %p54 = por %p52, %p53
    %p55 = scmp.ne.s32.totalorder %s41, %s42
    %p56 = scmp.eq.s32.totalorder %s22, 3
    %p57 = por %p55, %p56
    %p59 = scmp.ne.s32.totalorder %s42, %s58
    %p60 = scmp.eq.s32.totalorder %s22, 0
    %p61 = por %p59, %p60
    %s62 = ssub.s32 %s24, %s31
    %p63 = scmp.eq.s32.totalorder %s62, 0
    %s65 = sadd.s32 %s64, 1
    %s66 = scalar_select %p63, %s64, %s65
    %p69 = pneg %p63
    %p70 = scmp.eq.s32.totalorder %s16, 3
    %p71 = por %p69, %p70
    %p72 = scmp.ne.s32.totalorder %s64, %s67
    %p73 = scmp.eq.s32.totalorder %s16, 0
    %p74 = por %p72, %p73
    %p75 = scmp.ne.s32.totalorder %s64, %s67
    %p76 = scmp.eq.s32.totalorder %s21, 3
    %p77 = por %p75, %p76
    %p78 = scmp.ne.s32.totalorder %s67, %s68
    %p79 = scmp.eq.s32.totalorder %s21, 0
    %p80 = por %p78, %p79
    %p81 = scmp.ne.s32.totalorder %s67, %s68
    %p82 = scmp.eq.s32.totalorder %s22, 3
    %p83 = por %p81, %p82
    %p85 = scmp.ne.s32.totalorder %s68, %s84
    %p86 = scmp.eq.s32.totalorder %s22, 0
    %p87 = por %p85, %p86
    %s89 = sadd.s32 %s88, 1
    %p92 = scmp.eq.s32.totalorder %s16, 3
    %p93 = scmp.ne.s32.totalorder %s88, %s90
    %p94 = scmp.eq.s32.totalorder %s16, 0
    %p95 = por %p93, %p94
    %p96 = scmp.ne.s32.totalorder %s88, %s90
    %p97 = scmp.eq.s32.totalorder %s21, 3
    %p98 = por %p96, %p97
    %p99 = scmp.ne.s32.totalorder %s90, %s91
    %p100 = scmp.eq.s32.totalorder %s21, 0
    %p101 = por %p99, %p100
    %p102 = scmp.ne.s32.totalorder %s90, %s91
    %p103 = scmp.eq.s32.totalorder %s22, 3
    %p104 = por %p102, %p103
    %p106 = scmp.ne.s32.totalorder %s91, %s105
    %p107 = scmp.eq.s32.totalorder %s22, 0
    %p108 = por %p106, %p107
    %s110 = sadd.s32 %s109, 1
    %p113 = scmp.eq.s32.totalorder %s16, 3
    %p114 = scmp.ne.s32.totalorder %s109, %s111
    %p115 = scmp.eq.s32.totalorder %s16, 0
    %p116 = por %p114, %p115
    %p117 = scmp.ne.s32.totalorder %s109, %s111
    %p118 = scmp.eq.s32.totalorder %s21, 3
    %p119 = por %p117, %p118
    %p120 = scmp.ne.s32.totalorder %s111, %s112
    %p121 = scmp.eq.s32.totalorder %s21, 0
    %p122 = por %p120, %p121
    %p123 = scmp.ne.s32.totalorder %s111, %s112
    %p124 = scmp.eq.s32.totalorder %s22, 3
    %p125 = por %p123, %p124
    %p127 = scmp.ne.s32.totalorder %s112, %s126
    %p128 = scmp.eq.s32.totalorder %s22, 0
    %p129 = por %p127, %p128
    %s131 = sadd.s32 %s130, 1
    %p134 = scmp.eq.s32.totalorder %s16, 3
    %p135 = scmp.ne.s32.totalorder %s130, %s132
    %p136 = scmp.eq.s32.totalorder %s16, 0
    %p137 = por %p135, %p136
    %p138 = scmp.ne.s32.totalorder %s130, %s132
    %p139 = scmp.eq.s32.totalorder %s21, 3
    %p140 = por %p138, %p139
    %p141 = scmp.ne.s32.totalorder %s132, %s133
    %p142 = scmp.eq.s32.totalorder %s21, 0
    %p143 = por %p141, %p142
    %p144 = scmp.ne.s32.totalorder %s132, %s133
    %p145 = scmp.eq.s32.totalorder %s22, 3
    %p146 = por %p144, %p145
    %p148 = scmp.ne.s32.totalorder %s133, %s147
    %p149 = scmp.eq.s32.totalorder %s22, 0
    %p150 = por %p148, %p149
    %s152 = sadd.s32 %s151, 1
    %p155 = scmp.eq.s32.totalorder %s16, 3
    %p156 = scmp.ne.s32.totalorder %s151, %s153
    %p157 = scmp.eq.s32.totalorder %s16, 0
    %p158 = por %p156, %p157
    %p159 = scmp.ne.s32.totalorder %s151, %s153
    %p160 = scmp.eq.s32.totalorder %s21, 3
    %p161 = por %p159, %p160
    %p162 = scmp.ne.s32.totalorder %s153, %s154
    %p163 = scmp.eq.s32.totalorder %s21, 0
    %p164 = por %p162, %p163
    %p165 = scmp.ne.s32.totalorder %s153, %s154
    %p166 = scmp.eq.s32.totalorder %s22, 3
    %p167 = por %p165, %p166
    %p169 = scmp.ne.s32.totalorder %s154, %s168
    %p170 = scmp.eq.s32.totalorder %s22, 0
    %p171 = por %p169, %p170
    %s173 = sadd.s32 %s172, 1
    %p176 = scmp.eq.s32.totalorder %s16, 3
    %p177 = scmp.ne.s32.totalorder %s172, %s174
    %p178 = scmp.eq.s32.totalorder %s16, 0
    %p179 = por %p177, %p178
    %p180 = scmp.ne.s32.totalorder %s172, %s174
    %p181 = scmp.eq.s32.totalorder %s21, 3
    %p182 = por %p180, %p181
    %p183 = scmp.ne.s32.totalorder %s174, %s175
    %p184 = scmp.eq.s32.totalorder %s21, 0
    %p185 = por %p183, %p184
    %p186 = scmp.ne.s32.totalorder %s174, %s175
    %p187 = scmp.eq.s32.totalorder %s22, 3
    %p188 = por %p186, %p187
    %p190 = scmp.ne.s32.totalorder %s175, %s189
    %p191 = scmp.eq.s32.totalorder %s22, 0
    %p192 = por %p190, %p191
    %s194 = sadd.s32 %s193, 1
    %p197 = scmp.eq.s32.totalorder %s16, 3
    %p198 = scmp.ne.s32.totalorder %s193, %s195
    %p199 = scmp.eq.s32.totalorder %s16, 0
    %p200 = por %p198, %p199
    %p201 = scmp.ne.s32.totalorder %s193, %s195
    %p202 = scmp.eq.s32.totalorder %s21, 3
    %p203 = por %p201, %p202
    %p204 = scmp.ne.s32.totalorder %s195, %s196
    %p205 = scmp.eq.s32.totalorder %s21, 0
    %p206 = por %p204, %p205
    %p207 = scmp.ne.s32.totalorder %s195, %s196
    %p208 = scmp.eq.s32.totalorder %s22, 3
    %p209 = por %p207, %p208
    %p211 = scmp.ne.s32.totalorder %s196, %s210
    %p212 = scmp.eq.s32.totalorder %s22, 0
    %p213 = por %p211, %p212
    %s215 = sadd.s32 %s214, 1
    %p218 = scmp.eq.s32.totalorder %s16, 3
    %p219 = scmp.ne.s32.totalorder %s214, %s216
    %p220 = scmp.eq.s32.totalorder %s16, 0
    %p221 = por %p219, %p220
    %p222 = scmp.ne.s32.totalorder %s214, %s216
    %p223 = scmp.eq.s32.totalorder %s21, 3
    %p224 = por %p222, %p223
    %p225 = scmp.ne.s32.totalorder %s216, %s217
    %p226 = scmp.eq.s32.totalorder %s21, 0
    %p227 = por %p225, %p226
    %p228 = scmp.ne.s32.totalorder %s216, %s217
    %p229 = scmp.eq.s32.totalorder %s22, 3
    %p230 = por %p228, %p229
    %p232 = scmp.ne.s32.totalorder %s217, %s231
    %p233 = scmp.eq.s32.totalorder %s22, 0
    %p234 = por %p232, %p233
    %s236 = sadd.s32 %s235, 1
    %p239 = scmp.eq.s32.totalorder %s16, 3
    %p240 = scmp.ne.s32.totalorder %s235, %s237
    %p241 = scmp.eq.s32.totalorder %s16, 0
    %p242 = por %p240, %p241
    %p243 = scmp.ne.s32.totalorder %s235, %s237
    %p244 = scmp.eq.s32.totalorder %s21, 3
    %p245 = por %p243, %p244
    %p246 = scmp.ne.s32.totalorder %s237, %s238
    %p247 = scmp.eq.s32.totalorder %s21, 0
    %p248 = por %p246, %p247
    %p249 = scmp.ne.s32.totalorder %s237, %s238
    %p250 = scmp.eq.s32.totalorder %s22, 3
    %p251 = por %p249, %p250
    %p253 = scmp.ne.s32.totalorder %s238, %s252
    %p254 = scmp.eq.s32.totalorder %s22, 0
    %p255 = por %p253, %p254
    %s256 = ssub.s32 %s24, %s31
    %s257 = ssub.s32 %s23, %s35
    %s258 = sor.u32 %s256, %s257
    %p259 = scmp.eq.s32.totalorder %s258, 0
    %s261 = sadd.s32 %s260, 1
    %s262 = scalar_select %p259, %s260, %s261
    %p265 = pneg %p259
    %p266 = scmp.eq.s32.totalorder %s16, 3
    %p267 = por %p265, %p266
    %p268 = scmp.ne.s32.totalorder %s260, %s263
    %p269 = scmp.eq.s32.totalorder %s16, 0
    %p270 = por %p268, %p269
    %p271 = scmp.ne.s32.totalorder %s260, %s263
    %p272 = scmp.eq.s32.totalorder %s21, 3
    %p273 = por %p271, %p272
    %p274 = scmp.ne.s32.totalorder %s263, %s264
    %p275 = scmp.eq.s32.totalorder %s21, 0
    %p276 = por %p274, %p275
    %p277 = scmp.ne.s32.totalorder %s263, %s264
    %p278 = scmp.eq.s32.totalorder %s22, 3
    %p279 = por %p277, %p278
    %p281 = scmp.ne.s32.totalorder %s264, %s280
    %p282 = scmp.eq.s32.totalorder %s22, 0
    %p283 = por %p281, %p282
    %p284 = scmp.le.s32.totalorder 1, %s16
    %p285 = scmp.lt.s32.totalorder %s16, 5
    %p286 = pnand %p284, %p285
    %p287 = pneg %p286
    // Predicated region
    $region9: #{tpu_custom_call.1} parent=5 // pred_check
      _
    $region10: #{tpu_custom_call.1} parent=5 // pred_check_branch
      %289 = sbr.rel (%p286) target = $region12
    $region11: #{tpu_custom_call.1} parent=5 // pred_region
      %s290 = ssub.s32 %s16, 1
      // Predicated region
      $region13: #{tpu_custom_call.1} parent=11 // pred_check
        %p291 = pneg %p101
      $region14: #{tpu_custom_call.1} parent=11 // pred_check_branch
        %293 = sbr.rel (%p291) target = $region16
      $region15: #{tpu_custom_call.1} parent=11 // pred_region
        _
      $region16: #{tpu_custom_call.1} parent=11 // pred_fallthru
        _
      // Predicated region
      $region17: #{tpu_custom_call.1} parent=11 // pred_check
        %p294 = pneg %p122
      $region18: #{tpu_custom_call.1} parent=11 // pred_check_branch
        %296 = sbr.rel (%p294) target = $region20
      $region19: #{tpu_custom_call.1} parent=11 // pred_region
        _
      $region20: #{tpu_custom_call.1} parent=11 // pred_fallthru
        _
      // Predicated region
      $region21: #{tpu_custom_call.1} parent=11 // pred_check
        %p297 = pneg %p143
      $region22: #{tpu_custom_call.1} parent=11 // pred_check_branch
        %299 = sbr.rel (%p297) target = $region24
      $region23: #{tpu_custom_call.1} parent=11 // pred_region
        _
      $region24: #{tpu_custom_call.1} parent=11 // pred_fallthru
        _
      // Predicated region
      $region25: #{tpu_custom_call.1} parent=11 // pred_check
        %p300 = pneg %p164
      $region26: #{tpu_custom_call.1} parent=11 // pred_check_branch
        %302 = sbr.rel (%p300) target = $region28
      $region27: #{tpu_custom_call.1} parent=11 // pred_region
        _
      $region28: #{tpu_custom_call.1} parent=11 // pred_fallthru
        _
      // Predicated region
      $region29: #{tpu_custom_call.1} parent=11 // pred_check
        %p303 = pneg %p185
      $region30: #{tpu_custom_call.1} parent=11 // pred_check_branch
        %305 = sbr.rel (%p303) target = $region32
      $region31: #{tpu_custom_call.1} parent=11 // pred_region
        _
      $region32: #{tpu_custom_call.1} parent=11 // pred_fallthru
        _
      // Predicated region
      $region33: #{tpu_custom_call.1} parent=11 // pred_check
        %p306 = pneg %p206
      $region34: #{tpu_custom_call.1} parent=11 // pred_check_branch
        %308 = sbr.rel (%p306) target = $region36
      $region35: #{tpu_custom_call.1} parent=11 // pred_region
        _
      $region36: #{tpu_custom_call.1} parent=11 // pred_fallthru
        _
      // Predicated region
      $region37: #{tpu_custom_call.1} parent=11 // pred_check
        %p309 = pneg %p227
      $region38: #{tpu_custom_call.1} parent=11 // pred_check_branch
        %311 = sbr.rel (%p309) target = $region40
      $region39: #{tpu_custom_call.1} parent=11 // pred_region
        _
      $region40: #{tpu_custom_call.1} parent=11 // pred_fallthru
        _
      // Predicated region
      $region41: #{tpu_custom_call.1} parent=11 // pred_check
        %p312 = pneg %p248
      $region42: #{tpu_custom_call.1} parent=11 // pred_check_branch
        %314 = sbr.rel (%p312) target = $region44
      $region43: #{tpu_custom_call.1} parent=11 // pred_region
        _
      $region44: #{tpu_custom_call.1} parent=11 // pred_fallthru
        _
    $region12: #{tpu_custom_call.1} parent=5 // pred_fallthru
      _
    %p315 = scmp.lt.s32.totalorder %s16, 4
    // Predicated region
    $region45: #{tpu_custom_call.1} parent=5 // pred_check
      %p316 = pneg %p315
    $region46: #{tpu_custom_call.1} parent=5 // pred_check_branch
      %318 = sbr.rel (%p316) target = $region48
    $region47: #{tpu_custom_call.1} parent=5 // pred_region
      // Predicated region
      $region49: #{tpu_custom_call.1} parent=47 // pred_check
        %p319 = pneg %p48
      $region50: #{tpu_custom_call.1} parent=47 // pred_check_branch
        %321 = sbr.rel (%p319) target = $region52
      $region51: #{tpu_custom_call.1} parent=47 // pred_region
        %s322 = smul.u32 16, %s23
        %p323 = scmp.lt.s32.totalorder %s322, 31
        %s324 = scalar_select %p323, %s322, 31
        %s325 = smul.addr %s324, 8
        %s326 = scalar_lea.vmem %s0, %s325
        %s327 = smul.u32 16, %s23
      $region52: #{tpu_custom_call.1} parent=47 // pred_fallthru
        _
      // Predicated region
      $region53: #{tpu_custom_call.1} parent=47 // pred_check
        %p328 = pneg %p74
      $region54: #{tpu_custom_call.1} parent=47 // pred_check_branch
        %330 = sbr.rel (%p328) target = $region56
      $region55: #{tpu_custom_call.1} parent=47 // pred_region
        %p331 = scmp.lt.s32.totalorder %s24, 1
        %s332 = scalar_select %p331, %s24, 1
        %s333 = smul.addr %s332, 8
        %s334 = smul.addr %s333, 4
        %s335 = scalar_lea.vmem %s1, %s334
      $region56: #{tpu_custom_call.1} parent=47 // pred_fallthru
        _
    $region48: #{tpu_custom_call.1} parent=5 // pred_fallthru
      _
    %p336 = scmp.le.s32.totalorder 1, %s16
    %p337 = scmp.lt.s32.totalorder %s16, 5
    %p338 = pnand %p336, %p337
    %p339 = pneg %p338
    // Predicated region
    $region57: #{tpu_custom_call.1} parent=5 // pred_check
      _
    $region58: #{tpu_custom_call.1} parent=5 // pred_check_branch
      %341 = sbr.rel (%p338) target = $region60
    $region59: #{tpu_custom_call.1} parent=5 // pred_region
      %s342 = ssub.s32 %s16, 1
      %s343 = smul.u32 16, %s25
      %p344 = scmp.lt.s32.totalorder %s343, 31
      %s345 = scalar_select %p344, %s343, 31
      %s346 = smul.addr %s345, 8
      %s347 = scalar_lea.vmem %s0, %s346
      %p348 = pneg %p54
      %p349 = pneg %p51
      %p350 = scmp.lt.s32.totalorder %s26, 1
      %s351 = scalar_select %p350, %s26, 1
      %s352 = smul.addr %s351, 8
      %s353 = smul.addr %s352, 4
      %s354 = scalar_lea.vmem %s1, %s353
      %p355 = pneg %p80
      %p356 = pneg %p77
      %p357 = pneg %p101
      %p358 = pneg %p98
      %p359 = pneg %p122
      %p360 = pneg %p119
      %p361 = pneg %p143
      %p362 = pneg %p140
      %p363 = pneg %p164
      %p364 = pneg %p161
      %p365 = pneg %p185
      %p366 = pneg %p182
      %p367 = pneg %p206
      %p368 = pneg %p203
      %p369 = pneg %p227
      %p370 = pneg %p224
      %p371 = pneg %p248
      %p372 = pneg %p245
      %p373 = pneg %p276
      %p374 = pneg %p273
      %s375 = smul.u32 16, %s25
      %p376 = scmp.lt.s32.totalorder %s26, 1
      %s377 = scalar_select %p376, %s26, 1
      %p378 = scmp.lt.s32.totalorder %s375, 31
      %s379 = scalar_select %p378, %s375, 31
      %s380 = smul.addr %s377, 32
      %s381 = sadd.s32 %s379, %s380
      %s382 = smul.addr %s381, 8
      %s383 = scalar_lea.vmem %s10, %s382
      %s384 = smul.u32 16, %s25
      %p385 = scmp.lt.s32.totalorder %s384, 31
      %s386 = scalar_select %p385, %s384, 31
      %s387 = smul.addr %s386, 8
      %s388 = scalar_lea.vmem %s0, %s387
      %s389 = smul.u32 16, %s25
      %p390 = scmp.lt.s32.totalorder %s26, 1
      %s391 = scalar_select %p390, %s26, 1
      %s392 = smul.addr %s391, 8
      %s393 = smul.addr %s392, 4
      %s394 = scalar_lea.vmem %s1, %s393
      %s395 = smul.u32 16, %s25
      %p396 = scmp.lt.s32.totalorder %s26, 1
      %s397 = scalar_select %p396, %s26, 1
      %p398 = scmp.lt.s32.totalorder %s395, 31
      %s399 = scalar_select %p398, %s395, 31
      %s400 = smul.addr %s397, 32
      %s401 = sadd.s32 %s399, %s400
      %s402 = smul.addr %s401, 8
      %s403 = scalar_lea.vmem %s10, %s402
      %s404 = smul.u32 16, %s25
      %v406 = vld [vmem:[%s388] sm:$0xff]
      %v407 = vld [vmem:[%s388 + $0x8] sm:$0xff]
      %v408 = vld [vmem:[%s388 + $0x10] sm:$0xff]
      %v409 = vld [vmem:[%s388 + $0x18] sm:$0xff]
      %v410 = vld [vmem:[%s388 + $0x20] sm:$0xff]
      %v411 = vld [vmem:[%s388 + $0x28] sm:$0xff]
      %v412 = vld [vmem:[%s388 + $0x30] sm:$0xff]
      %v413 = vld [vmem:[%s388 + $0x38] sm:$0xff]
      %v414 = vld [vmem:[%s388 + $0x40] sm:$0xff]
      %v415 = vld [vmem:[%s388 + $0x48] sm:$0xff]
      %v416 = vld [vmem:[%s388 + $0x50] sm:$0xff]
      %v417 = vld [vmem:[%s388 + $0x58] sm:$0xff]
      %v418 = vld [vmem:[%s388 + $0x60] sm:$0xff]
      %v419 = vld [vmem:[%s388 + $0x68] sm:$0xff]
      %v420 = vld [vmem:[%s388 + $0x70] sm:$0xff]
      %v421 = vld [vmem:[%s388 + $0x78] sm:$0xff]
      %v422 = vlaneseq
      %v423 = vand.u32 %v422, 127
      %vm424 = vcmp.eq.s32.totalorder %v423, 1
      %v425 = vsub.f32 0.0, %v406
      %v426 = vsub.f32 0.0, %v407
      %v427 = vsub.f32 0.0, %v408
      %v428 = vsub.f32 0.0, %v409
      %v429 = vsub.f32 0.0, %v410
      %v430 = vsub.f32 0.0, %v411
      %v431 = vsub.f32 0.0, %v412
      %v432 = vsub.f32 0.0, %v413
      %v433 = vsub.f32 0.0, %v414
      %v434 = vsub.f32 0.0, %v415
      %v435 = vsub.f32 0.0, %v416
      %v436 = vsub.f32 0.0, %v417
      %v437 = vsub.f32 0.0, %v418
      %v438 = vsub.f32 0.0, %v419
      %v439 = vsub.f32 0.0, %v420
      %v440 = vsub.f32 0.0, %v421
      %v441 = vsel %vm424, %v425, %v406
      %v442 = vsel %vm424, %v426, %v407
      %v443 = vsel %vm424, %v427, %v408
      %v444 = vsel %vm424, %v428, %v409
      %v445 = vsel %vm424, %v429, %v410
      %v446 = vsel %vm424, %v430, %v411
      %v447 = vsel %vm424, %v431, %v412
      %v448 = vsel %vm424, %v432, %v413
      %v449 = vsel %vm424, %v433, %v414
      %v450 = vsel %vm424, %v434, %v415
      %v451 = vsel %vm424, %v435, %v416
      %v452 = vsel %vm424, %v436, %v417
      %v453 = vsel %vm424, %v437, %v418
      %v454 = vsel %vm424, %v438, %v419
      %v455 = vsel %vm424, %v439, %v420
      %v456 = vsel %vm424, %v440, %v421
      %p457 = scmp.eq.s32.totalorder %s26, 0
      // Predicated region
      $region61: #{tpu_custom_call.1} parent=59 // pred_check
        %p458 = pneg %p457
      $region62: #{tpu_custom_call.1} parent=59 // pred_check_branch
        %460 = sbr.rel (%p458) target = $region64
      $region63: #{tpu_custom_call.1} parent=59 // pred_region
        %v461 = vadd.f32 %v441, 1.0
        %v462 = vadd.f32 %v442, 1.0
        %v463 = vadd.f32 %v443, 1.0
        %v464 = vadd.f32 %v444, 1.0
        %v465 = vadd.f32 %v445, 1.0
        %v466 = vadd.f32 %v446, 1.0
        %v467 = vadd.f32 %v447, 1.0
        %v468 = vadd.f32 %v448, 1.0
        %v469 = vadd.f32 %v449, 1.0
        %v470 = vadd.f32 %v450, 1.0
        %v471 = vadd.f32 %v451, 1.0
        %v472 = vadd.f32 %v452, 1.0
        %v473 = vadd.f32 %v453, 1.0
        %v474 = vadd.f32 %v454, 1.0
        %v475 = vadd.f32 %v455, 1.0
        %v476 = vadd.f32 %v456, 1.0
        %v477 = vmul.f32 %v461, 0.5
        %v478 = vmul.f32 %v462, 0.5
        %v479 = vmul.f32 %v463, 0.5
        %v480 = vmul.f32 %v464, 0.5
        %v481 = vmul.f32 %v465, 0.5
        %v482 = vmul.f32 %v466, 0.5
        %v483 = vmul.f32 %v467, 0.5
        %v484 = vmul.f32 %v468, 0.5
        %v485 = vmul.f32 %v469, 0.5
        %v486 = vmul.f32 %v470, 0.5
        %v487 = vmul.f32 %v471, 0.5
        %v488 = vmul.f32 %v472, 0.5
        %v489 = vmul.f32 %v473, 0.5
        %v490 = vmul.f32 %v474, 0.5
        %v491 = vmul.f32 %v475, 0.5
        %v492 = vmul.f32 %v476, 0.5
        %v493 = vmul.f32 %v477, 7.0
        %v494 = vmul.f32 %v478, 7.0
        %v495 = vmul.f32 %v479, 7.0
        %v496 = vmul.f32 %v480, 7.0
        %v497 = vmul.f32 %v481, 7.0
        %v498 = vmul.f32 %v482, 7.0
        %v499 = vmul.f32 %v483, 7.0
        %v500 = vmul.f32 %v484, 7.0
        %v501 = vmul.f32 %v485, 7.0
        %v502 = vmul.f32 %v486, 7.0
        %v503 = vmul.f32 %v487, 7.0
        %v504 = vmul.f32 %v488, 7.0
        %v505 = vmul.f32 %v489, 7.0
        %v506 = vmul.f32 %v490, 7.0
        %v507 = vmul.f32 %v491, 7.0
        %v508 = vmul.f32 %v492, 7.0
        %v509 = vfloor.f32 %v493
        %v510 = vfloor.f32 %v494
        %v511 = vfloor.f32 %v495
        %v512 = vfloor.f32 %v496
        %v513 = vfloor.f32 %v497
        %v514 = vfloor.f32 %v498
        %v515 = vfloor.f32 %v499
        %v516 = vfloor.f32 %v500
        %v517 = vfloor.f32 %v501
        %v518 = vfloor.f32 %v502
        %v519 = vfloor.f32 %v503
        %v520 = vfloor.f32 %v504
        %v521 = vfloor.f32 %v505
        %v522 = vfloor.f32 %v506
        %v523 = vfloor.f32 %v507
        %v524 = vfloor.f32 %v508
        %v525 = vadd.f32 %v509, 1.0
        %v526 = vadd.f32 %v510, 1.0
        %v527 = vadd.f32 %v511, 1.0
        %v528 = vadd.f32 %v512, 1.0
        %v529 = vadd.f32 %v513, 1.0
        %v530 = vadd.f32 %v514, 1.0
        %v531 = vadd.f32 %v515, 1.0
        %v532 = vadd.f32 %v516, 1.0
        %v533 = vadd.f32 %v517, 1.0
        %v534 = vadd.f32 %v518, 1.0
        %v535 = vadd.f32 %v519, 1.0
        %v536 = vadd.f32 %v520, 1.0
        %v537 = vadd.f32 %v521, 1.0
        %v538 = vadd.f32 %v522, 1.0
        %v539 = vadd.f32 %v523, 1.0
        %v540 = vadd.f32 %v524, 1.0
        %v541 = vsub.f32 %v493, %v509
        %v542 = vsub.f32 %v494, %v510
        %v543 = vsub.f32 %v495, %v511
        %v544 = vsub.f32 %v496, %v512
        %v545 = vsub.f32 %v497, %v513
        %v546 = vsub.f32 %v498, %v514
        %v547 = vsub.f32 %v499, %v515
        %v548 = vsub.f32 %v500, %v516
        %v549 = vsub.f32 %v501, %v517
        %v550 = vsub.f32 %v502, %v518
        %v551 = vsub.f32 %v503, %v519
        %v552 = vsub.f32 %v504, %v520
        %v553 = vsub.f32 %v505, %v521
        %v554 = vsub.f32 %v506, %v522
        %v555 = vsub.f32 %v507, %v523
        %v556 = vsub.f32 %v508, %v524
        %v557 = vsub.f32 1.0, %v541
        %v558 = vsub.f32 1.0, %v542
        %v559 = vsub.f32 1.0, %v543
        %v560 = vsub.f32 1.0, %v544
        %v561 = vsub.f32 1.0, %v545
        %v562 = vsub.f32 1.0, %v546
        %v563 = vsub.f32 1.0, %v547
        %v564 = vsub.f32 1.0, %v548
        %v565 = vsub.f32 1.0, %v549
        %v566 = vsub.f32 1.0, %v550
        %v567 = vsub.f32 1.0, %v551
        %v568 = vsub.f32 1.0, %v552
        %v569 = vsub.f32 1.0, %v553
        %v570 = vsub.f32 1.0, %v554
        %v571 = vsub.f32 1.0, %v555
        %v572 = vsub.f32 1.0, %v556
        %v573 = vcvt.f32.s32.to.zero.pseudo %v509
        %v574 = vcvt.f32.s32.to.zero.pseudo %v510
        %v575 = vcvt.f32.s32.to.zero.pseudo %v511
        %v576 = vcvt.f32.s32.to.zero.pseudo %v512
        %v577 = vcvt.f32.s32.to.zero.pseudo %v513
        %v578 = vcvt.f32.s32.to.zero.pseudo %v514
        %v579 = vcvt.f32.s32.to.zero.pseudo %v515
        %v580 = vcvt.f32.s32.to.zero.pseudo %v516
        %v581 = vcvt.f32.s32.to.zero.pseudo %v517
        %v582 = vcvt.f32.s32.to.zero.pseudo %v518
        %v583 = vcvt.f32.s32.to.zero.pseudo %v519
        %v584 = vcvt.f32.s32.to.zero.pseudo %v520
        %v585 = vcvt.f32.s32.to.zero.pseudo %v521
        %v586 = vcvt.f32.s32.to.zero.pseudo %v522
        %v587 = vcvt.f32.s32.to.zero.pseudo %v523
        %v588 = vcvt.f32.s32.to.zero.pseudo %v524
        %v589 = vcvt.f32.s32.to.zero.pseudo %v525
        %v590 = vcvt.f32.s32.to.zero.pseudo %v526
        %v591 = vcvt.f32.s32.to.zero.pseudo %v527
        %v592 = vcvt.f32.s32.to.zero.pseudo %v528
        %v593 = vcvt.f32.s32.to.zero.pseudo %v529
        %v594 = vcvt.f32.s32.to.zero.pseudo %v530
        %v595 = vcvt.f32.s32.to.zero.pseudo %v531
        %v596 = vcvt.f32.s32.to.zero.pseudo %v532
        %v597 = vcvt.f32.s32.to.zero.pseudo %v533
        %v598 = vcvt.f32.s32.to.zero.pseudo %v534
        %v599 = vcvt.f32.s32.to.zero.pseudo %v535
        %v600 = vcvt.f32.s32.to.zero.pseudo %v536
        %v601 = vcvt.f32.s32.to.zero.pseudo %v537
        %v602 = vcvt.f32.s32.to.zero.pseudo %v538
        %v603 = vcvt.f32.s32.to.zero.pseudo %v539
        %v604 = vcvt.f32.s32.to.zero.pseudo %v540
        %vm605 = vcmp.ge.s32.totalorder %v573, 0
        %vm606 = vcmp.ge.s32.totalorder %v574, 0
        %vm607 = vcmp.ge.s32.totalorder %v575, 0
        %vm608 = vcmp.ge.s32.totalorder %v576, 0
        %vm609 = vcmp.ge.s32.totalorder %v577, 0
        %vm610 = vcmp.ge.s32.totalorder %v578, 0
        %vm611 = vcmp.ge.s32.totalorder %v579, 0
        %vm612 = vcmp.ge.s32.totalorder %v580, 0
        %vm613 = vcmp.ge.s32.totalorder %v581, 0
        %vm614 = vcmp.ge.s32.totalorder %v582, 0
        %vm615 = vcmp.ge.s32.totalorder %v583, 0
        %vm616 = vcmp.ge.s32.totalorder %v584, 0
        %vm617 = vcmp.ge.s32.totalorder %v585, 0
        %vm618 = vcmp.ge.s32.totalorder %v586, 0
        %vm619 = vcmp.ge.s32.totalorder %v587, 0
        %vm620 = vcmp.ge.s32.totalorder %v588, 0
        %vm621 = vcmp.lt.s32.totalorder %v573, 8
        %vm622 = vcmp.lt.s32.totalorder %v574, 8
        %vm623 = vcmp.lt.s32.totalorder %v575, 8
        %vm624 = vcmp.lt.s32.totalorder %v576, 8
        %vm625 = vcmp.lt.s32.totalorder %v577, 8
        %vm626 = vcmp.lt.s32.totalorder %v578, 8
        %vm627 = vcmp.lt.s32.totalorder %v579, 8
        %vm628 = vcmp.lt.s32.totalorder %v580, 8
        %vm629 = vcmp.lt.s32.totalorder %v581, 8
        %vm630 = vcmp.lt.s32.totalorder %v582, 8
        %vm631 = vcmp.lt.s32.totalorder %v583, 8
        %vm632 = vcmp.lt.s32.totalorder %v584, 8
        %vm633 = vcmp.lt.s32.totalorder %v585, 8
        %vm634 = vcmp.lt.s32.totalorder %v586, 8
        %vm635 = vcmp.lt.s32.totalorder %v587, 8
        %vm636 = vcmp.lt.s32.totalorder %v588, 8
        %vm637 = vmand %vm605, %vm621
        %vm638 = vmand %vm606, %vm622
        %vm639 = vmand %vm607, %vm623
        %vm640 = vmand %vm608, %vm624
        %vm641 = vmand %vm609, %vm625
        %vm642 = vmand %vm610, %vm626
        %vm643 = vmand %vm611, %vm627
        %vm644 = vmand %vm612, %vm628
        %vm645 = vmand %vm613, %vm629
        %vm646 = vmand %vm614, %vm630
        %vm647 = vmand %vm615, %vm631
        %vm648 = vmand %vm616, %vm632
        %vm649 = vmand %vm617, %vm633
        %vm650 = vmand %vm618, %vm634
        %vm651 = vmand %vm619, %vm635
        %vm652 = vmand %vm620, %vm636
        %v653 = vsel %vm605, 1, 0
        %v654 = vsel %vm606, 1, 0
        %v655 = vsel %vm607, 1, 0
        %v656 = vsel %vm608, 1, 0
        %v657 = vsel %vm609, 1, 0
        %v658 = vsel %vm610, 1, 0
        %v659 = vsel %vm611, 1, 0
        %v660 = vsel %vm612, 1, 0
        %v661 = vsel %vm613, 1, 0
        %v662 = vsel %vm614, 1, 0
        %v663 = vsel %vm615, 1, 0
        %v664 = vsel %vm616, 1, 0
        %v665 = vsel %vm617, 1, 0
        %v666 = vsel %vm618, 1, 0
        %v667 = vsel %vm619, 1, 0
        %v668 = vsel %vm620, 1, 0
        %669 = vrot.lane.b32.xlu0 %v653, 127
        %v670 = vpop.permute.xlu0 %669
        %671 = vrot.lane.b32.xlu0 %v654, 127
        %v672 = vpop.permute.xlu0 %671
        %673 = vrot.lane.b32.xlu0 %v655, 127
        %v674 = vpop.permute.xlu0 %673
        %675 = vrot.lane.b32.xlu0 %v656, 127
        %v676 = vpop.permute.xlu0 %675
        %677 = vrot.lane.b32.xlu0 %v657, 127
        %v678 = vpop.permute.xlu0 %677
        %679 = vrot.lane.b32.xlu0 %v658, 127
        %v680 = vpop.permute.xlu0 %679
        %681 = vrot.lane.b32.xlu0 %v659, 127
        %v682 = vpop.permute.xlu0 %681
        %683 = vrot.lane.b32.xlu0 %v660, 127
        %v684 = vpop.permute.xlu0 %683
        %685 = vrot.lane.b32.xlu0 %v661, 127
        %v686 = vpop.permute.xlu0 %685
        %687 = vrot.lane.b32.xlu0 %v662, 127
        %v688 = vpop.permute.xlu0 %687
        %689 = vrot.lane.b32.xlu0 %v663, 127
        %v690 = vpop.permute.xlu0 %689
        %691 = vrot.lane.b32.xlu0 %v664, 127
        %v692 = vpop.permute.xlu0 %691
        %693 = vrot.lane.b32.xlu0 %v665, 127
        %v694 = vpop.permute.xlu0 %693
        %695 = vrot.lane.b32.xlu0 %v666, 127
        %v696 = vpop.permute.xlu0 %695
        %697 = vrot.lane.b32.xlu0 %v667, 127
        %v698 = vpop.permute.xlu0 %697
        %699 = vrot.lane.b32.xlu0 %v668, 127
        %v700 = vpop.permute.xlu0 %699
        %vm701 = vcmp.ne.s32.totalorder %v670, 0
        %vm702 = vcmp.ne.s32.totalorder %v672, 0
        %vm703 = vcmp.ne.s32.totalorder %v674, 0
        %vm704 = vcmp.ne.s32.totalorder %v676, 0
        %vm705 = vcmp.ne.s32.totalorder %v678, 0
        %vm706 = vcmp.ne.s32.totalorder %v680, 0
        %vm707 = vcmp.ne.s32.totalorder %v682, 0
        %vm708 = vcmp.ne.s32.totalorder %v684, 0
        %vm709 = vcmp.ne.s32.totalorder %v686, 0
        %vm710 = vcmp.ne.s32.totalorder %v688, 0
        %vm711 = vcmp.ne.s32.totalorder %v690, 0
        %vm712 = vcmp.ne.s32.totalorder %v692, 0
        %vm713 = vcmp.ne.s32.totalorder %v694, 0
        %vm714 = vcmp.ne.s32.totalorder %v696, 0
        %vm715 = vcmp.ne.s32.totalorder %v698, 0
        %vm716 = vcmp.ne.s32.totalorder %v700, 0
        %vm717 = vmand %vm637, %vm701
        %vm718 = vmand %vm638, %vm702
        %vm719 = vmand %vm639, %vm703
        %vm720 = vmand %vm640, %vm704
        %vm721 = vmand %vm641, %vm705
        %vm722 = vmand %vm642, %vm706
        %vm723 = vmand %vm643, %vm707
        %vm724 = vmand %vm644, %vm708
        %vm725 = vmand %vm645, %vm709
        %vm726 = vmand %vm646, %vm710
        %vm727 = vmand %vm647, %vm711
        %vm728 = vmand %vm648, %vm712
        %vm729 = vmand %vm649, %vm713
        %vm730 = vmand %vm650, %vm714
        %vm731 = vmand %vm651, %vm715
        %vm732 = vmand %vm652, %vm716
        %v733 = vsel %vm621, 1, 0
        %v734 = vsel %vm622, 1, 0
        %v735 = vsel %vm623, 1, 0
        %v736 = vsel %vm624, 1, 0
        %v737 = vsel %vm625, 1, 0
        %v738 = vsel %vm626, 1, 0
        %v739 = vsel %vm627, 1, 0
        %v740 = vsel %vm628, 1, 0
        %v741 = vsel %vm629, 1, 0
        %v742 = vsel %vm630, 1, 0
        %v743 = vsel %vm631, 1, 0
        %v744 = vsel %vm632, 1, 0
        %v745 = vsel %vm633, 1, 0
        %v746 = vsel %vm634, 1, 0
        %v747 = vsel %vm635, 1, 0
        %v748 = vsel %vm636, 1, 0
        %749 = vrot.lane.b32.xlu0 %v733, 127
        %v750 = vpop.permute.xlu0 %749
        %751 = vrot.lane.b32.xlu0 %v734, 127
        %v752 = vpop.permute.xlu0 %751
        %753 = vrot.lane.b32.xlu0 %v735, 127
        %v754 = vpop.permute.xlu0 %753
        %755 = vrot.lane.b32.xlu0 %v736, 127
        %v756 = vpop.permute.xlu0 %755
        %757 = vrot.lane.b32.xlu0 %v737, 127
        %v758 = vpop.permute.xlu0 %757
        %759 = vrot.lane.b32.xlu0 %v738, 127
        %v760 = vpop.permute.xlu0 %759
        %761 = vrot.lane.b32.xlu0 %v739, 127
        %v762 = vpop.permute.xlu0 %761
        %763 = vrot.lane.b32.xlu0 %v740, 127
        %v764 = vpop.permute.xlu0 %763
        %765 = vrot.lane.b32.xlu0 %v741, 127
        %v766 = vpop.permute.xlu0 %765
        %767 = vrot.lane.b32.xlu0 %v742, 127
        %v768 = vpop.permute.xlu0 %767
        %769 = vrot.lane.b32.xlu0 %v743, 127
        %v770 = vpop.permute.xlu0 %769
        %771 = vrot.lane.b32.xlu0 %v744, 127
        %v772 = vpop.permute.xlu0 %771
        %773 = vrot.lane.b32.xlu0 %v745, 127
        %v774 = vpop.permute.xlu0 %773
        %775 = vrot.lane.b32.xlu0 %v746, 127
        %v776 = vpop.permute.xlu0 %775
        %777 = vrot.lane.b32.xlu0 %v747, 127
        %v778 = vpop.permute.xlu0 %777
        %779 = vrot.lane.b32.xlu0 %v748, 127
        %v780 = vpop.permute.xlu0 %779
        %vm781 = vcmp.ne.s32.totalorder %v750, 0
        %vm782 = vcmp.ne.s32.totalorder %v752, 0
        %vm783 = vcmp.ne.s32.totalorder %v754, 0
        %vm784 = vcmp.ne.s32.totalorder %v756, 0
        %vm785 = vcmp.ne.s32.totalorder %v758, 0
        %vm786 = vcmp.ne.s32.totalorder %v760, 0
        %vm787 = vcmp.ne.s32.totalorder %v762, 0
        %vm788 = vcmp.ne.s32.totalorder %v764, 0
        %vm789 = vcmp.ne.s32.totalorder %v766, 0
        %vm790 = vcmp.ne.s32.totalorder %v768, 0
        %vm791 = vcmp.ne.s32.totalorder %v770, 0
        %vm792 = vcmp.ne.s32.totalorder %v772, 0
        %vm793 = vcmp.ne.s32.totalorder %v774, 0
        %vm794 = vcmp.ne.s32.totalorder %v776, 0
        %vm795 = vcmp.ne.s32.totalorder %v778, 0
        %vm796 = vcmp.ne.s32.totalorder %v780, 0
        %vm797 = vmand %vm717, %vm781
        %vm798 = vmand %vm718, %vm782
        %vm799 = vmand %vm719, %vm783
        %vm800 = vmand %vm720, %vm784
        %vm801 = vmand %vm721, %vm785
        %vm802 = vmand %vm722, %vm786
        %vm803 = vmand %vm723, %vm787
        %vm804 = vmand %vm724, %vm788
        %vm805 = vmand %vm725, %vm789
        %vm806 = vmand %vm726, %vm790
        %vm807 = vmand %vm727, %vm791
        %vm808 = vmand %vm728, %vm792
        %vm809 = vmand %vm729, %vm793
        %vm810 = vmand %vm730, %vm794
        %vm811 = vmand %vm731, %vm795
        %vm812 = vmand %vm732, %vm796
        %829 = vrot.lane.b32.xlu0 %v557, 127
        %v830 = vpop.permute.xlu0 %829
        %831 = vrot.lane.b32.xlu0 %v558, 127
        %v832 = vpop.permute.xlu0 %831
        %833 = vrot.lane.b32.xlu0 %v559, 127
        %v834 = vpop.permute.xlu0 %833
        %835 = vrot.lane.b32.xlu0 %v560, 127
        %v836 = vpop.permute.xlu0 %835
        %837 = vrot.lane.b32.xlu0 %v561, 127
        %v838 = vpop.permute.xlu0 %837
        %839 = vrot.lane.b32.xlu0 %v562, 127
        %v840 = vpop.permute.xlu0 %839
        %841 = vrot.lane.b32.xlu0 %v563, 127
        %v842 = vpop.permute.xlu0 %841
        %843 = vrot.lane.b32.xlu0 %v564, 127
        %v844 = vpop.permute.xlu0 %843
        %845 = vrot.lane.b32.xlu0 %v565, 127
        %v846 = vpop.permute.xlu0 %845
        %847 = vrot.lane.b32.xlu0 %v566, 127
        %v848 = vpop.permute.xlu0 %847
        %849 = vrot.lane.b32.xlu0 %v567, 127
        %v850 = vpop.permute.xlu0 %849
        %851 = vrot.lane.b32.xlu0 %v568, 127
        %v852 = vpop.permute.xlu0 %851
        %853 = vrot.lane.b32.xlu0 %v569, 127
        %v854 = vpop.permute.xlu0 %853
        %855 = vrot.lane.b32.xlu0 %v570, 127
        %v856 = vpop.permute.xlu0 %855
        %857 = vrot.lane.b32.xlu0 %v571, 127
        %v858 = vpop.permute.xlu0 %857
        %859 = vrot.lane.b32.xlu0 %v572, 127
        %v860 = vpop.permute.xlu0 %859
        %v877 = vmul.f32 %v557, %v830
        %v878 = vmul.f32 %v558, %v832
        %v879 = vmul.f32 %v559, %v834
        %v880 = vmul.f32 %v560, %v836
        %v881 = vmul.f32 %v561, %v838
        %v882 = vmul.f32 %v562, %v840
        %v883 = vmul.f32 %v563, %v842
        %v884 = vmul.f32 %v564, %v844
        %v885 = vmul.f32 %v565, %v846
        %v886 = vmul.f32 %v566, %v848
        %v887 = vmul.f32 %v567, %v850
        %v888 = vmul.f32 %v568, %v852
        %v889 = vmul.f32 %v569, %v854
        %v890 = vmul.f32 %v570, %v856
        %v891 = vmul.f32 %v571, %v858
        %v892 = vmul.f32 %v572, %v860
        %v893 = vsel %vm797, 1, 0
        %v894 = vsel %vm798, 1, 0
        %v895 = vsel %vm799, 1, 0
        %v896 = vsel %vm800, 1, 0
        %v897 = vsel %vm801, 1, 0
        %v898 = vsel %vm802, 1, 0
        %v899 = vsel %vm803, 1, 0
        %v900 = vsel %vm804, 1, 0
        %v901 = vsel %vm805, 1, 0
        %v902 = vsel %vm806, 1, 0
        %v903 = vsel %vm807, 1, 0
        %v904 = vsel %vm808, 1, 0
        %v905 = vsel %vm809, 1, 0
        %v906 = vsel %vm810, 1, 0
        %v907 = vsel %vm811, 1, 0
        %v908 = vsel %vm812, 1, 0
        %v909 = vcvt.s32.f32 %v893
        %v910 = vcvt.s32.f32 %v894
        %v911 = vcvt.s32.f32 %v895
        %v912 = vcvt.s32.f32 %v896
        %v913 = vcvt.s32.f32 %v897
        %v914 = vcvt.s32.f32 %v898
        %v915 = vcvt.s32.f32 %v899
        %v916 = vcvt.s32.f32 %v900
        %v917 = vcvt.s32.f32 %v901
        %v918 = vcvt.s32.f32 %v902
        %v919 = vcvt.s32.f32 %v903
        %v920 = vcvt.s32.f32 %v904
        %v921 = vcvt.s32.f32 %v905
        %v922 = vcvt.s32.f32 %v906
        %v923 = vcvt.s32.f32 %v907
        %v924 = vcvt.s32.f32 %v908
        %v925 = vmul.f32 %v877, %v909
        %v926 = vmul.f32 %v878, %v910
        %v927 = vmul.f32 %v879, %v911
        %v928 = vmul.f32 %v880, %v912
        %v929 = vmul.f32 %v881, %v913
        %v930 = vmul.f32 %v882, %v914
        %v931 = vmul.f32 %v883, %v915
        %v932 = vmul.f32 %v884, %v916
        %v933 = vmul.f32 %v885, %v917
        %v934 = vmul.f32 %v886, %v918
        %v935 = vmul.f32 %v887, %v919
        %v936 = vmul.f32 %v888, %v920
        %v937 = vmul.f32 %v889, %v921
        %v938 = vmul.f32 %v890, %v922
        %v939 = vmul.f32 %v891, %v923
        %v940 = vmul.f32 %v892, %v924
        %v941 = vmul.u32 %v573, 8
        %v942 = vmul.u32 %v574, 8
        %v943 = vmul.u32 %v575, 8
        %v944 = vmul.u32 %v576, 8
        %v945 = vmul.u32 %v577, 8
        %v946 = vmul.u32 %v578, 8
        %v947 = vmul.u32 %v579, 8
        %v948 = vmul.u32 %v580, 8
        %v949 = vmul.u32 %v581, 8
        %v950 = vmul.u32 %v582, 8
        %v951 = vmul.u32 %v583, 8
        %v952 = vmul.u32 %v584, 8
        %v953 = vmul.u32 %v585, 8
        %v954 = vmul.u32 %v586, 8
        %v955 = vmul.u32 %v587, 8
        %v956 = vmul.u32 %v588, 8
        %957 = vrot.lane.b32.xlu0 %v573, 1
        %v958 = vpop.permute.xlu0 %957
        %959 = vrot.lane.b32.xlu0 %v574, 1
        %v960 = vpop.permute.xlu0 %959
        %961 = vrot.lane.b32.xlu0 %v575, 1
        %v962 = vpop.permute.xlu0 %961
        %963 = vrot.lane.b32.xlu0 %v576, 1
        %v964 = vpop.permute.xlu0 %963
        %965 = vrot.lane.b32.xlu0 %v577, 1
        %v966 = vpop.permute.xlu0 %965
        %967 = vrot.lane.b32.xlu0 %v578, 1
        %v968 = vpop.permute.xlu0 %967
        %969 = vrot.lane.b32.xlu0 %v579, 1
        %v970 = vpop.permute.xlu0 %969
        %971 = vrot.lane.b32.xlu0 %v580, 1
        %v972 = vpop.permute.xlu0 %971
        %973 = vrot.lane.b32.xlu0 %v581, 1
        %v974 = vpop.permute.xlu0 %973
        %975 = vrot.lane.b32.xlu0 %v582, 1
        %v976 = vpop.permute.xlu0 %975
        %977 = vrot.lane.b32.xlu0 %v583, 1
        %v978 = vpop.permute.xlu0 %977
        %979 = vrot.lane.b32.xlu0 %v584, 1
        %v980 = vpop.permute.xlu0 %979
        %981 = vrot.lane.b32.xlu0 %v585, 1
        %v982 = vpop.permute.xlu0 %981
        %983 = vrot.lane.b32.xlu0 %v586, 1
        %v984 = vpop.permute.xlu0 %983
        %985 = vrot.lane.b32.xlu0 %v587, 1
        %v986 = vpop.permute.xlu0 %985
        %987 = vrot.lane.b32.xlu0 %v588, 1
        %v988 = vpop.permute.xlu0 %987
        %v989 = vadd.s32 %v941, %v958
        %v990 = vadd.s32 %v942, %v960
        %v991 = vadd.s32 %v943, %v962
        %v992 = vadd.s32 %v944, %v964
        %v993 = vadd.s32 %v945, %v966
        %v994 = vadd.s32 %v946, %v968
        %v995 = vadd.s32 %v947, %v970
        %v996 = vadd.s32 %v948, %v972
        %v997 = vadd.s32 %v949, %v974
        %v998 = vadd.s32 %v950, %v976
        %v999 = vadd.s32 %v951, %v978
        %v1000 = vadd.s32 %v952, %v980
        %v1001 = vadd.s32 %v953, %v982
        %v1002 = vadd.s32 %v954, %v984
        %v1003 = vadd.s32 %v955, %v986
        %v1004 = vadd.s32 %v956, %v988
        %1005 = vset.pattern.permute.xlu0 1
        %1006 = vperm.xlu0 %1005, %v989
        %v1007 = vpop.permute.xlu0 %1006
        %1008 = vset.pattern.permute.xlu0 1
        %1009 = vperm.xlu0 %1008, %v990
        %v1010 = vpop.permute.xlu0 %1009
        %1011 = vset.pattern.permute.xlu0 1
        %1012 = vperm.xlu0 %1011, %v991
        %v1013 = vpop.permute.xlu0 %1012
        %1014 = vset.pattern.permute.xlu0 1
        %1015 = vperm.xlu0 %1014, %v992
        %v1016 = vpop.permute.xlu0 %1015
        %1017 = vset.pattern.permute.xlu0 1
        %1018 = vperm.xlu0 %1017, %v993
        %v1019 = vpop.permute.xlu0 %1018
        %1020 = vset.pattern.permute.xlu0 1
        %1021 = vperm.xlu0 %1020, %v994
        %v1022 = vpop.permute.xlu0 %1021
        %1023 = vset.pattern.permute.xlu0 1
        %1024 = vperm.xlu0 %1023, %v995
        %v1025 = vpop.permute.xlu0 %1024
        %1026 = vset.pattern.permute.xlu0 1
        %1027 = vperm.xlu0 %1026, %v996
        %v1028 = vpop.permute.xlu0 %1027
        %1029 = vset.pattern.permute.xlu0 1
        %1030 = vperm.xlu0 %1029, %v997
        %v1031 = vpop.permute.xlu0 %1030
        %1032 = vset.pattern.permute.xlu0 1
        %1033 = vperm.xlu0 %1032, %v998
        %v1034 = vpop.permute.xlu0 %1033
        %1035 = vset.pattern.permute.xlu0 1
        %1036 = vperm.xlu0 %1035, %v999
        %v1037 = vpop.permute.xlu0 %1036
        %1038 = vset.pattern.permute.xlu0 1
        %1039 = vperm.xlu0 %1038, %v1000
        %v1040 = vpop.permute.xlu0 %1039
        %1041 = vset.pattern.permute.xlu0 1
        %1042 = vperm.xlu0 %1041, %v1001
        %v1043 = vpop.permute.xlu0 %1042
        %1044 = vset.pattern.permute.xlu0 1
        %1045 = vperm.xlu0 %1044, %v1002
        %v1046 = vpop.permute.xlu0 %1045
        %1047 = vset.pattern.permute.xlu0 1
        %1048 = vperm.xlu0 %1047, %v1003
        %v1049 = vpop.permute.xlu0 %1048
        %1050 = vset.pattern.permute.xlu0 1
        %1051 = vperm.xlu0 %1050, %v1004
        %v1052 = vpop.permute.xlu0 %1051
        %vm1053 = vcmp.eq.s32.totalorder %v423, %v1007
        %vm1054 = vcmp.eq.s32.totalorder %v423, %v1010
        %vm1055 = vcmp.eq.s32.totalorder %v423, %v1013
        %vm1056 = vcmp.eq.s32.totalorder %v423, %v1016
        %vm1057 = vcmp.eq.s32.totalorder %v423, %v1019
        %vm1058 = vcmp.eq.s32.totalorder %v423, %v1022
        %vm1059 = vcmp.eq.s32.totalorder %v423, %v1025
        %vm1060 = vcmp.eq.s32.totalorder %v423, %v1028
        %vm1061 = vcmp.eq.s32.totalorder %v423, %v1031
        %vm1062 = vcmp.eq.s32.totalorder %v423, %v1034
        %vm1063 = vcmp.eq.s32.totalorder %v423, %v1037
        %vm1064 = vcmp.eq.s32.totalorder %v423, %v1040
        %vm1065 = vcmp.eq.s32.totalorder %v423, %v1043
        %vm1066 = vcmp.eq.s32.totalorder %v423, %v1046
        %vm1067 = vcmp.eq.s32.totalorder %v423, %v1049
        %vm1068 = vcmp.eq.s32.totalorder %v423, %v1052
        %1070 = vset.pattern.permute.xlu0 0
        %1071 = vperm.xlu0 %1070, %v925
        %v1072 = vpop.permute.xlu0 %1071
        %1075 = vset.pattern.permute.xlu0 0
        %1076 = vperm.xlu0 %1075, %v926
        %v1077 = vpop.permute.xlu0 %1076
        %1080 = vset.pattern.permute.xlu0 0
        %1081 = vperm.xlu0 %1080, %v927
        %v1082 = vpop.permute.xlu0 %1081
        %1085 = vset.pattern.permute.xlu0 0
        %1086 = vperm.xlu0 %1085, %v928
        %v1087 = vpop.permute.xlu0 %1086
        %1090 = vset.pattern.permute.xlu0 0
        %1091 = vperm.xlu0 %1090, %v929
        %v1092 = vpop.permute.xlu0 %1091
        %1095 = vset.pattern.permute.xlu0 0
        %1096 = vperm.xlu0 %1095, %v930
        %v1097 = vpop.permute.xlu0 %1096
        %1100 = vset.pattern.permute.xlu0 0
        %1101 = vperm.xlu0 %1100, %v931
        %v1102 = vpop.permute.xlu0 %1101
        %1105 = vset.pattern.permute.xlu0 0
        %1106 = vperm.xlu0 %1105, %v932
        %v1107 = vpop.permute.xlu0 %1106
        %1110 = vset.pattern.permute.xlu0 0
        %1111 = vperm.xlu0 %1110, %v933
        %v1112 = vpop.permute.xlu0 %1111
        %1115 = vset.pattern.permute.xlu0 0
        %1116 = vperm.xlu0 %1115, %v934
        %v1117 = vpop.permute.xlu0 %1116
        %1120 = vset.pattern.permute.xlu0 0
        %1121 = vperm.xlu0 %1120, %v935
        %v1122 = vpop.permute.xlu0 %1121
        %1125 = vset.pattern.permute.xlu0 0
        %1126 = vperm.xlu0 %1125, %v936
        %v1127 = vpop.permute.xlu0 %1126
        %1130 = vset.pattern.permute.xlu0 0
        %1131 = vperm.xlu0 %1130, %v937
        %v1132 = vpop.permute.xlu0 %1131
        %1135 = vset.pattern.permute.xlu0 0
        %1136 = vperm.xlu0 %1135, %v938
        %v1137 = vpop.permute.xlu0 %1136
        %1140 = vset.pattern.permute.xlu0 0
        %1141 = vperm.xlu0 %1140, %v939
        %v1142 = vpop.permute.xlu0 %1141
        %1145 = vset.pattern.permute.xlu0 0
        %1146 = vperm.xlu0 %1145, %v940
        %v1147 = vpop.permute.xlu0 %1146
        %v1149 = vsel %vm1053, %v1072, 0.0
        %v1150 = vsel %vm1054, %v1077, 0.0
        %v1151 = vsel %vm1055, %v1082, 0.0
        %v1152 = vsel %vm1056, %v1087, 0.0
        %v1153 = vsel %vm1057, %v1092, 0.0
        %v1154 = vsel %vm1058, %v1097, 0.0
        %v1155 = vsel %vm1059, %v1102, 0.0
        %v1156 = vsel %vm1060, %v1107, 0.0
        %v1157 = vsel %vm1061, %v1112, 0.0
        %v1158 = vsel %vm1062, %v1117, 0.0
        %v1159 = vsel %vm1063, %v1122, 0.0
        %v1160 = vsel %vm1064, %v1127, 0.0
        %v1161 = vsel %vm1065, %v1132, 0.0
        %v1162 = vsel %vm1066, %v1137, 0.0
        %v1163 = vsel %vm1067, %v1142, 0.0
        %v1164 = vsel %vm1068, %v1147, 0.0
        %v1165 = vadd.f32 %v1149, 0.0
        %v1166 = vadd.f32 %v1150, 0.0
        %v1167 = vadd.f32 %v1151, 0.0
        %v1168 = vadd.f32 %v1152, 0.0
        %v1169 = vadd.f32 %v1153, 0.0
        %v1170 = vadd.f32 %v1154, 0.0
        %v1171 = vadd.f32 %v1155, 0.0
        %v1172 = vadd.f32 %v1156, 0.0
        %v1173 = vadd.f32 %v1157, 0.0
        %v1174 = vadd.f32 %v1158, 0.0
        %v1175 = vadd.f32 %v1159, 0.0
        %v1176 = vadd.f32 %v1160, 0.0
        %v1177 = vadd.f32 %v1161, 0.0
        %v1178 = vadd.f32 %v1162, 0.0
        %v1179 = vadd.f32 %v1163, 0.0
        %v1180 = vadd.f32 %v1164, 0.0
        %vm1181 = vcmp.ge.s32.totalorder %v589, 0
        %vm1182 = vcmp.ge.s32.totalorder %v590, 0
        %vm1183 = vcmp.ge.s32.totalorder %v591, 0
        %vm1184 = vcmp.ge.s32.totalorder %v592, 0
        %vm1185 = vcmp.ge.s32.totalorder %v593, 0
        %vm1186 = vcmp.ge.s32.totalorder %v594, 0
        %vm1187 = vcmp.ge.s32.totalorder %v595, 0
        %vm1188 = vcmp.ge.s32.totalorder %v596, 0
        %vm1189 = vcmp.ge.s32.totalorder %v597, 0
        %vm1190 = vcmp.ge.s32.totalorder %v598, 0
        %vm1191 = vcmp.ge.s32.totalorder %v599, 0
        %vm1192 = vcmp.ge.s32.totalorder %v600, 0
        %vm1193 = vcmp.ge.s32.totalorder %v601, 0
        %vm1194 = vcmp.ge.s32.totalorder %v602, 0
        %vm1195 = vcmp.ge.s32.totalorder %v603, 0
        %vm1196 = vcmp.ge.s32.totalorder %v604, 0
        %vm1197 = vcmp.lt.s32.totalorder %v589, 8
        %vm1198 = vcmp.lt.s32.totalorder %v590, 8
        %vm1199 = vcmp.lt.s32.totalorder %v591, 8
        %vm1200 = vcmp.lt.s32.totalorder %v592, 8
        %vm1201 = vcmp.lt.s32.totalorder %v593, 8
        %vm1202 = vcmp.lt.s32.totalorder %v594, 8
        %vm1203 = vcmp.lt.s32.totalorder %v595, 8
        %vm1204 = vcmp.lt.s32.totalorder %v596, 8
        %vm1205 = vcmp.lt.s32.totalorder %v597, 8
        %vm1206 = vcmp.lt.s32.totalorder %v598, 8
        %vm1207 = vcmp.lt.s32.totalorder %v599, 8
        %vm1208 = vcmp.lt.s32.totalorder %v600, 8
        %vm1209 = vcmp.lt.s32.totalorder %v601, 8
        %vm1210 = vcmp.lt.s32.totalorder %v602, 8
        %vm1211 = vcmp.lt.s32.totalorder %v603, 8
        %vm1212 = vcmp.lt.s32.totalorder %v604, 8
        %vm1213 = vmand %vm1181, %vm1197
        %vm1214 = vmand %vm1182, %vm1198
        %vm1215 = vmand %vm1183, %vm1199
        %vm1216 = vmand %vm1184, %vm1200
        %vm1217 = vmand %vm1185, %vm1201
        %vm1218 = vmand %vm1186, %vm1202
        %vm1219 = vmand %vm1187, %vm1203
        %vm1220 = vmand %vm1188, %vm1204
        %vm1221 = vmand %vm1189, %vm1205
        %vm1222 = vmand %vm1190, %vm1206
        %vm1223 = vmand %vm1191, %vm1207
        %vm1224 = vmand %vm1192, %vm1208
        %vm1225 = vmand %vm1193, %vm1209
        %vm1226 = vmand %vm1194, %vm1210
        %vm1227 = vmand %vm1195, %vm1211
        %vm1228 = vmand %vm1196, %vm1212
        %vm1229 = vmand %vm1213, %vm701
        %vm1230 = vmand %vm1214, %vm702
        %vm1231 = vmand %vm1215, %vm703
        %vm1232 = vmand %vm1216, %vm704
        %vm1233 = vmand %vm1217, %vm705
        %vm1234 = vmand %vm1218, %vm706
        %vm1235 = vmand %vm1219, %vm707
        %vm1236 = vmand %vm1220, %vm708
        %vm1237 = vmand %vm1221, %vm709
        %vm1238 = vmand %vm1222, %vm710
        %vm1239 = vmand %vm1223, %vm711
        %vm1240 = vmand %vm1224, %vm712
        %vm1241 = vmand %vm1225, %vm713
        %vm1242 = vmand %vm1226, %vm714
        %vm1243 = vmand %vm1227, %vm715
        %vm1244 = vmand %vm1228, %vm716
        %vm1245 = vmand %vm1229, %vm781
        %vm1246 = vmand %vm1230, %vm782
        %vm1247 = vmand %vm1231, %vm783
        %vm1248 = vmand %vm1232, %vm784
        %vm1249 = vmand %vm1233, %vm785
        %vm1250 = vmand %vm1234, %vm786
        %vm1251 = vmand %vm1235, %vm787
        %vm1252 = vmand %vm1236, %vm788
        %vm1253 = vmand %vm1237, %vm789
        %vm1254 = vmand %vm1238, %vm790
        %vm1255 = vmand %vm1239, %vm791
        %vm1256 = vmand %vm1240, %vm792
        %vm1257 = vmand %vm1241, %vm793
        %vm1258 = vmand %vm1242, %vm794
        %vm1259 = vmand %vm1243, %vm795
        %vm1260 = vmand %vm1244, %vm796
        %v1261 = vmul.f32 %v541, %v830
        %v1262 = vmul.f32 %v542, %v832
        %v1263 = vmul.f32 %v543, %v834
        %v1264 = vmul.f32 %v544, %v836
        %v1265 = vmul.f32 %v545, %v838
        %v1266 = vmul.f32 %v546, %v840
        %v1267 = vmul.f32 %v547, %v842
        %v1268 = vmul.f32 %v548, %v844
        %v1269 = vmul.f32 %v549, %v846
        %v1270 = vmul.f32 %v550, %v848
        %v1271 = vmul.f32 %v551, %v850
        %v1272 = vmul.f32 %v552, %v852
        %v1273 = vmul.f32 %v553, %v854
        %v1274 = vmul.f32 %v554, %v856
        %v1275 = vmul.f32 %v555, %v858
        %v1276 = vmul.f32 %v556, %v860
        %v1277 = vsel %vm1245, 1, 0
        %v1278 = vsel %vm1246, 1, 0
        %v1279 = vsel %vm1247, 1, 0
        %v1280 = vsel %vm1248, 1, 0
        %v1281 = vsel %vm1249, 1, 0
        %v1282 = vsel %vm1250, 1, 0
        %v1283 = vsel %vm1251, 1, 0
        %v1284 = vsel %vm1252, 1, 0
        %v1285 = vsel %vm1253, 1, 0
        %v1286 = vsel %vm1254, 1, 0
        %v1287 = vsel %vm1255, 1, 0
        %v1288 = vsel %vm1256, 1, 0
        %v1289 = vsel %vm1257, 1, 0
        %v1290 = vsel %vm1258, 1, 0
        %v1291 = vsel %vm1259, 1, 0
        %v1292 = vsel %vm1260, 1, 0
        %v1293 = vcvt.s32.f32 %v1277
        %v1294 = vcvt.s32.f32 %v1278
        %v1295 = vcvt.s32.f32 %v1279
        %v1296 = vcvt.s32.f32 %v1280
        %v1297 = vcvt.s32.f32 %v1281
        %v1298 = vcvt.s32.f32 %v1282
        %v1299 = vcvt.s32.f32 %v1283
        %v1300 = vcvt.s32.f32 %v1284
        %v1301 = vcvt.s32.f32 %v1285
        %v1302 = vcvt.s32.f32 %v1286
        %v1303 = vcvt.s32.f32 %v1287
        %v1304 = vcvt.s32.f32 %v1288
        %v1305 = vcvt.s32.f32 %v1289
        %v1306 = vcvt.s32.f32 %v1290
        %v1307 = vcvt.s32.f32 %v1291
        %v1308 = vcvt.s32.f32 %v1292
        %v1309 = vmul.f32 %v1261, %v1293
        %v1310 = vmul.f32 %v1262, %v1294
        %v1311 = vmul.f32 %v1263, %v1295
        %v1312 = vmul.f32 %v1264, %v1296
        %v1313 = vmul.f32 %v1265, %v1297
        %v1314 = vmul.f32 %v1266, %v1298
        %v1315 = vmul.f32 %v1267, %v1299
        %v1316 = vmul.f32 %v1268, %v1300
        %v1317 = vmul.f32 %v1269, %v1301
        %v1318 = vmul.f32 %v1270, %v1302
        %v1319 = vmul.f32 %v1271, %v1303
        %v1320 = vmul.f32 %v1272, %v1304
        %v1321 = vmul.f32 %v1273, %v1305
        %v1322 = vmul.f32 %v1274, %v1306
        %v1323 = vmul.f32 %v1275, %v1307
        %v1324 = vmul.f32 %v1276, %v1308
        %1325 = vrot.lane.b32.xlu0 %v589, 1
        %v1326 = vpop.permute.xlu0 %1325
        %1327 = vrot.lane.b32.xlu0 %v590, 1
        %v1328 = vpop.permute.xlu0 %1327
        %1329 = vrot.lane.b32.xlu0 %v591, 1
        %v1330 = vpop.permute.xlu0 %1329
        %1331 = vrot.lane.b32.xlu0 %v592, 1
        %v1332 = vpop.permute.xlu0 %1331
        %1333 = vrot.lane.b32.xlu0 %v593, 1
        %v1334 = vpop.permute.xlu0 %1333
        %1335 = vrot.lane.b32.xlu0 %v594, 1
        %v1336 = vpop.permute.xlu0 %1335
        %1337 = vrot.lane.b32.xlu0 %v595, 1
        %v1338 = vpop.permute.xlu0 %1337
        %1339 = vrot.lane.b32.xlu0 %v596, 1
        %v1340 = vpop.permute.xlu0 %1339
        %1341 = vrot.lane.b32.xlu0 %v597, 1
        %v1342 = vpop.permute.xlu0 %1341
        %1343 = vrot.lane.b32.xlu0 %v598, 1
        %v1344 = vpop.permute.xlu0 %1343
        %1345 = vrot.lane.b32.xlu0 %v599, 1
        %v1346 = vpop.permute.xlu0 %1345
        %1347 = vrot.lane.b32.xlu0 %v600, 1
        %v1348 = vpop.permute.xlu0 %1347
        %1349 = vrot.lane.b32.xlu0 %v601, 1
        %v1350 = vpop.permute.xlu0 %1349
        %1351 = vrot.lane.b32.xlu0 %v602, 1
        %v1352 = vpop.permute.xlu0 %1351
        %1353 = vrot.lane.b32.xlu0 %v603, 1
        %v1354 = vpop.permute.xlu0 %1353
        %1355 = vrot.lane.b32.xlu0 %v604, 1
        %v1356 = vpop.permute.xlu0 %1355
        %v1357 = vadd.s32 %v941, %v1326
        %v1358 = vadd.s32 %v942, %v1328
        %v1359 = vadd.s32 %v943, %v1330
        %v1360 = vadd.s32 %v944, %v1332
        %v1361 = vadd.s32 %v945, %v1334
        %v1362 = vadd.s32 %v946, %v1336
        %v1363 = vadd.s32 %v947, %v1338
        %v1364 = vadd.s32 %v948, %v1340
        %v1365 = vadd.s32 %v949, %v1342
        %v1366 = vadd.s32 %v950, %v1344
        %v1367 = vadd.s32 %v951, %v1346
        %v1368 = vadd.s32 %v952, %v1348
        %v1369 = vadd.s32 %v953, %v1350
        %v1370 = vadd.s32 %v954, %v1352
        %v1371 = vadd.s32 %v955, %v1354
        %v1372 = vadd.s32 %v956, %v1356
        %1373 = vset.pattern.permute.xlu0 1
        %1374 = vperm.xlu0 %1373, %v1357
        %v1375 = vpop.permute.xlu0 %1374
        %1376 = vset.pattern.permute.xlu0 1
        %1377 = vperm.xlu0 %1376, %v1358
        %v1378 = vpop.permute.xlu0 %1377
        %1379 = vset.pattern.permute.xlu0 1
        %1380 = vperm.xlu0 %1379, %v1359
        %v1381 = vpop.permute.xlu0 %1380
        %1382 = vset.pattern.permute.xlu0 1
        %1383 = vperm.xlu0 %1382, %v1360
        %v1384 = vpop.permute.xlu0 %1383
        %1385 = vset.pattern.permute.xlu0 1
        %1386 = vperm.xlu0 %1385, %v1361
        %v1387 = vpop.permute.xlu0 %1386
        %1388 = vset.pattern.permute.xlu0 1
        %1389 = vperm.xlu0 %1388, %v1362
        %v1390 = vpop.permute.xlu0 %1389
        %1391 = vset.pattern.permute.xlu0 1
        %1392 = vperm.xlu0 %1391, %v1363
        %v1393 = vpop.permute.xlu0 %1392
        %1394 = vset.pattern.permute.xlu0 1
        %1395 = vperm.xlu0 %1394, %v1364
        %v1396 = vpop.permute.xlu0 %1395
        %1397 = vset.pattern.permute.xlu0 1
        %1398 = vperm.xlu0 %1397, %v1365
        %v1399 = vpop.permute.xlu0 %1398
        %1400 = vset.pattern.permute.xlu0 1
        %1401 = vperm.xlu0 %1400, %v1366
        %v1402 = vpop.permute.xlu0 %1401
        %1403 = vset.pattern.permute.xlu0 1
        %1404 = vperm.xlu0 %1403, %v1367
        %v1405 = vpop.permute.xlu0 %1404
        %1406 = vset.pattern.permute.xlu0 1
        %1407 = vperm.xlu0 %1406, %v1368
        %v1408 = vpop.permute.xlu0 %1407
        %1409 = vset.pattern.permute.xlu0 1
        %1410 = vperm.xlu0 %1409, %v1369
        %v1411 = vpop.permute.xlu0 %1410
        %1412 = vset.pattern.permute.xlu0 1
        %1413 = vperm.xlu0 %1412, %v1370
        %v1414 = vpop.permute.xlu0 %1413
        %1415 = vset.pattern.permute.xlu0 1
        %1416 = vperm.xlu0 %1415, %v1371
        %v1417 = vpop.permute.xlu0 %1416
        %1418 = vset.pattern.permute.xlu0 1
        %1419 = vperm.xlu0 %1418, %v1372
        %v1420 = vpop.permute.xlu0 %1419
        %vm1421 = vcmp.eq.s32.totalorder %v423, %v1375
        %vm1422 = vcmp.eq.s32.totalorder %v423, %v1378
        %vm1423 = vcmp.eq.s32.totalorder %v423, %v1381
        %vm1424 = vcmp.eq.s32.totalorder %v423, %v1384
        %vm1425 = vcmp.eq.s32.totalorder %v423, %v1387
        %vm1426 = vcmp.eq.s32.totalorder %v423, %v1390
        %vm1427 = vcmp.eq.s32.totalorder %v423, %v1393
        %vm1428 = vcmp.eq.s32.totalorder %v423, %v1396
        %vm1429 = vcmp.eq.s32.totalorder %v423, %v1399
        %vm1430 = vcmp.eq.s32.totalorder %v423, %v1402
        %vm1431 = vcmp.eq.s32.totalorder %v423, %v1405
        %vm1432 = vcmp.eq.s32.totalorder %v423, %v1408
        %vm1433 = vcmp.eq.s32.totalorder %v423, %v1411
        %vm1434 = vcmp.eq.s32.totalorder %v423, %v1414
        %vm1435 = vcmp.eq.s32.totalorder %v423, %v1417
        %vm1436 = vcmp.eq.s32.totalorder %v423, %v1420
        %1438 = vset.pattern.permute.xlu0 0
        %1439 = vperm.xlu0 %1438, %v1309
        %v1440 = vpop.permute.xlu0 %1439
        %1443 = vset.pattern.permute.xlu0 0
        %1444 = vperm.xlu0 %1443, %v1310
        %v1445 = vpop.permute.xlu0 %1444
        %1448 = vset.pattern.permute.xlu0 0
        %1449 = vperm.xlu0 %1448, %v1311
        %v1450 = vpop.permute.xlu0 %1449
        %1453 = vset.pattern.permute.xlu0 0
        %1454 = vperm.xlu0 %1453, %v1312
        %v1455 = vpop.permute.xlu0 %1454
        %1458 = vset.pattern.permute.xlu0 0
        %1459 = vperm.xlu0 %1458, %v1313
        %v1460 = vpop.permute.xlu0 %1459
        %1463 = vset.pattern.permute.xlu0 0
        %1464 = vperm.xlu0 %1463, %v1314
        %v1465 = vpop.permute.xlu0 %1464
        %1468 = vset.pattern.permute.xlu0 0
        %1469 = vperm.xlu0 %1468, %v1315
        %v1470 = vpop.permute.xlu0 %1469
        %1473 = vset.pattern.permute.xlu0 0
        %1474 = vperm.xlu0 %1473, %v1316
        %v1475 = vpop.permute.xlu0 %1474
        %1478 = vset.pattern.permute.xlu0 0
        %1479 = vperm.xlu0 %1478, %v1317
        %v1480 = vpop.permute.xlu0 %1479
        %1483 = vset.pattern.permute.xlu0 0
        %1484 = vperm.xlu0 %1483, %v1318
        %v1485 = vpop.permute.xlu0 %1484
        %1488 = vset.pattern.permute.xlu0 0
        %1489 = vperm.xlu0 %1488, %v1319
        %v1490 = vpop.permute.xlu0 %1489
        %1493 = vset.pattern.permute.xlu0 0
        %1494 = vperm.xlu0 %1493, %v1320
        %v1495 = vpop.permute.xlu0 %1494
        %1498 = vset.pattern.permute.xlu0 0
        %1499 = vperm.xlu0 %1498, %v1321
        %v1500 = vpop.permute.xlu0 %1499
        %1503 = vset.pattern.permute.xlu0 0
        %1504 = vperm.xlu0 %1503, %v1322
        %v1505 = vpop.permute.xlu0 %1504
        %1508 = vset.pattern.permute.xlu0 0
        %1509 = vperm.xlu0 %1508, %v1323
        %v1510 = vpop.permute.xlu0 %1509
        %1513 = vset.pattern.permute.xlu0 0
        %1514 = vperm.xlu0 %1513, %v1324
        %v1515 = vpop.permute.xlu0 %1514
        %v1517 = vsel %vm1421, %v1440, 0.0
        %v1518 = vsel %vm1422, %v1445, 0.0
        %v1519 = vsel %vm1423, %v1450, 0.0
        %v1520 = vsel %vm1424, %v1455, 0.0
        %v1521 = vsel %vm1425, %v1460, 0.0
        %v1522 = vsel %vm1426, %v1465, 0.0
        %v1523 = vsel %vm1427, %v1470, 0.0
        %v1524 = vsel %vm1428, %v1475, 0.0
        %v1525 = vsel %vm1429, %v1480, 0.0
        %v1526 = vsel %vm1430, %v1485, 0.0
        %v1527 = vsel %vm1431, %v1490, 0.0
        %v1528 = vsel %vm1432, %v1495, 0.0
        %v1529 = vsel %vm1433, %v1500, 0.0
        %v1530 = vsel %vm1434, %v1505, 0.0
        %v1531 = vsel %vm1435, %v1510, 0.0
        %v1532 = vsel %vm1436, %v1515, 0.0
        %v1533 = vadd.f32 %v1165, %v1517
        %v1534 = vadd.f32 %v1166, %v1518
        %v1535 = vadd.f32 %v1167, %v1519
        %v1536 = vadd.f32 %v1168, %v1520
        %v1537 = vadd.f32 %v1169, %v1521
        %v1538 = vadd.f32 %v1170, %v1522
        %v1539 = vadd.f32 %v1171, %v1523
        %v1540 = vadd.f32 %v1172, %v1524
        %v1541 = vadd.f32 %v1173, %v1525
        %v1542 = vadd.f32 %v1174, %v1526
        %v1543 = vadd.f32 %v1175, %v1527
        %v1544 = vadd.f32 %v1176, %v1528
        %v1545 = vadd.f32 %v1177, %v1529
        %v1546 = vadd.f32 %v1178, %v1530
        %v1547 = vadd.f32 %v1179, %v1531
        %v1548 = vadd.f32 %v1180, %v1532
        %v1549 = vsel %vm1181, 1, 0
        %v1550 = vsel %vm1182, 1, 0
        %v1551 = vsel %vm1183, 1, 0
        %v1552 = vsel %vm1184, 1, 0
        %v1553 = vsel %vm1185, 1, 0
        %v1554 = vsel %vm1186, 1, 0
        %v1555 = vsel %vm1187, 1, 0
        %v1556 = vsel %vm1188, 1, 0
        %v1557 = vsel %vm1189, 1, 0
        %v1558 = vsel %vm1190, 1, 0
        %v1559 = vsel %vm1191, 1, 0
        %v1560 = vsel %vm1192, 1, 0
        %v1561 = vsel %vm1193, 1, 0
        %v1562 = vsel %vm1194, 1, 0
        %v1563 = vsel %vm1195, 1, 0
        %v1564 = vsel %vm1196, 1, 0
        %1565 = vrot.lane.b32.xlu0 %v1549, 127
        %v1566 = vpop.permute.xlu0 %1565
        %1567 = vrot.lane.b32.xlu0 %v1550, 127
        %v1568 = vpop.permute.xlu0 %1567
        %1569 = vrot.lane.b32.xlu0 %v1551, 127
        %v1570 = vpop.permute.xlu0 %1569
        %1571 = vrot.lane.b32.xlu0 %v1552, 127
        %v1572 = vpop.permute.xlu0 %1571
        %1573 = vrot.lane.b32.xlu0 %v1553, 127
        %v1574 = vpop.permute.xlu0 %1573
        %1575 = vrot.lane.b32.xlu0 %v1554, 127
        %v1576 = vpop.permute.xlu0 %1575
        %1577 = vrot.lane.b32.xlu0 %v1555, 127
        %v1578 = vpop.permute.xlu0 %1577
        %1579 = vrot.lane.b32.xlu0 %v1556, 127
        %v1580 = vpop.permute.xlu0 %1579
        %1581 = vrot.lane.b32.xlu0 %v1557, 127
        %v1582 = vpop.permute.xlu0 %1581
        %1583 = vrot.lane.b32.xlu0 %v1558, 127
        %v1584 = vpop.permute.xlu0 %1583
        %1585 = vrot.lane.b32.xlu0 %v1559, 127
        %v1586 = vpop.permute.xlu0 %1585
        %1587 = vrot.lane.b32.xlu0 %v1560, 127
        %v1588 = vpop.permute.xlu0 %1587
        %1589 = vrot.lane.b32.xlu0 %v1561, 127
        %v1590 = vpop.permute.xlu0 %1589
        %1591 = vrot.lane.b32.xlu0 %v1562, 127
        %v1592 = vpop.permute.xlu0 %1591
        %1593 = vrot.lane.b32.xlu0 %v1563, 127
        %v1594 = vpop.permute.xlu0 %1593
        %1595 = vrot.lane.b32.xlu0 %v1564, 127
        %v1596 = vpop.permute.xlu0 %1595
        %vm1597 = vcmp.ne.s32.totalorder %v1566, 0
        %vm1598 = vcmp.ne.s32.totalorder %v1568, 0
        %vm1599 = vcmp.ne.s32.totalorder %v1570, 0
        %vm1600 = vcmp.ne.s32.totalorder %v1572, 0
        %vm1601 = vcmp.ne.s32.totalorder %v1574, 0
        %vm1602 = vcmp.ne.s32.totalorder %v1576, 0
        %vm1603 = vcmp.ne.s32.totalorder %v1578, 0
        %vm1604 = vcmp.ne.s32.totalorder %v1580, 0
        %vm1605 = vcmp.ne.s32.totalorder %v1582, 0
        %vm1606 = vcmp.ne.s32.totalorder %v1584, 0
        %vm1607 = vcmp.ne.s32.totalorder %v1586, 0
        %vm1608 = vcmp.ne.s32.totalorder %v1588, 0
        %vm1609 = vcmp.ne.s32.totalorder %v1590, 0
        %vm1610 = vcmp.ne.s32.totalorder %v1592, 0
        %vm1611 = vcmp.ne.s32.totalorder %v1594, 0
        %vm1612 = vcmp.ne.s32.totalorder %v1596, 0
        %vm1613 = vmand %vm637, %vm1597
        %vm1614 = vmand %vm638, %vm1598
        %vm1615 = vmand %vm639, %vm1599
        %vm1616 = vmand %vm640, %vm1600
        %vm1617 = vmand %vm641, %vm1601
        %vm1618 = vmand %vm642, %vm1602
        %vm1619 = vmand %vm643, %vm1603
        %vm1620 = vmand %vm644, %vm1604
        %vm1621 = vmand %vm645, %vm1605
        %vm1622 = vmand %vm646, %vm1606
        %vm1623 = vmand %vm647, %vm1607
        %vm1624 = vmand %vm648, %vm1608
        %vm1625 = vmand %vm649, %vm1609
        %vm1626 = vmand %vm650, %vm1610
        %vm1627 = vmand %vm651, %vm1611
        %vm1628 = vmand %vm652, %vm1612
        %v1629 = vsel %vm1197, 1, 0
        %v1630 = vsel %vm1198, 1, 0
        %v1631 = vsel %vm1199, 1, 0
        %v1632 = vsel %vm1200, 1, 0
        %v1633 = vsel %vm1201, 1, 0
        %v1634 = vsel %vm1202, 1, 0
        %v1635 = vsel %vm1203, 1, 0
        %v1636 = vsel %vm1204, 1, 0
        %v1637 = vsel %vm1205, 1, 0
        %v1638 = vsel %vm1206, 1, 0
        %v1639 = vsel %vm1207, 1, 0
        %v1640 = vsel %vm1208, 1, 0
        %v1641 = vsel %vm1209, 1, 0
        %v1642 = vsel %vm1210, 1, 0
        %v1643 = vsel %vm1211, 1, 0
        %v1644 = vsel %vm1212, 1, 0
        %1645 = vrot.lane.b32.xlu0 %v1629, 127
        %v1646 = vpop.permute.xlu0 %1645
        %1647 = vrot.lane.b32.xlu0 %v1630, 127
        %v1648 = vpop.permute.xlu0 %1647
        %1649 = vrot.lane.b32.xlu0 %v1631, 127
        %v1650 = vpop.permute.xlu0 %1649
        %1651 = vrot.lane.b32.xlu0 %v1632, 127
        %v1652 = vpop.permute.xlu0 %1651
        %1653 = vrot.lane.b32.xlu0 %v1633, 127
        %v1654 = vpop.permute.xlu0 %1653
        %1655 = vrot.lane.b32.xlu0 %v1634, 127
        %v1656 = vpop.permute.xlu0 %1655
        %1657 = vrot.lane.b32.xlu0 %v1635, 127
        %v1658 = vpop.permute.xlu0 %1657
        %1659 = vrot.lane.b32.xlu0 %v1636, 127
        %v1660 = vpop.permute.xlu0 %1659
        %1661 = vrot.lane.b32.xlu0 %v1637, 127
        %v1662 = vpop.permute.xlu0 %1661
        %1663 = vrot.lane.b32.xlu0 %v1638, 127
        %v1664 = vpop.permute.xlu0 %1663
        %1665 = vrot.lane.b32.xlu0 %v1639, 127
        %v1666 = vpop.permute.xlu0 %1665
        %1667 = vrot.lane.b32.xlu0 %v1640, 127
        %v1668 = vpop.permute.xlu0 %1667
        %1669 = vrot.lane.b32.xlu0 %v1641, 127
        %v1670 = vpop.permute.xlu0 %1669
        %1671 = vrot.lane.b32.xlu0 %v1642, 127
        %v1672 = vpop.permute.xlu0 %1671
        %1673 = vrot.lane.b32.xlu0 %v1643, 127
        %v1674 = vpop.permute.xlu0 %1673
        %1675 = vrot.lane.b32.xlu0 %v1644, 127
        %v1676 = vpop.permute.xlu0 %1675
        %vm1677 = vcmp.ne.s32.totalorder %v1646, 0
        %vm1678 = vcmp.ne.s32.totalorder %v1648, 0
        %vm1679 = vcmp.ne.s32.totalorder %v1650, 0
        %vm1680 = vcmp.ne.s32.totalorder %v1652, 0
        %vm1681 = vcmp.ne.s32.totalorder %v1654, 0
        %vm1682 = vcmp.ne.s32.totalorder %v1656, 0
        %vm1683 = vcmp.ne.s32.totalorder %v1658, 0
        %vm1684 = vcmp.ne.s32.totalorder %v1660, 0
        %vm1685 = vcmp.ne.s32.totalorder %v1662, 0
        %vm1686 = vcmp.ne.s32.totalorder %v1664, 0
        %vm1687 = vcmp.ne.s32.totalorder %v1666, 0
        %vm1688 = vcmp.ne.s32.totalorder %v1668, 0
        %vm1689 = vcmp.ne.s32.totalorder %v1670, 0
        %vm1690 = vcmp.ne.s32.totalorder %v1672, 0
        %vm1691 = vcmp.ne.s32.totalorder %v1674, 0
        %vm1692 = vcmp.ne.s32.totalorder %v1676, 0
        %vm1693 = vmand %vm1613, %vm1677
        %vm1694 = vmand %vm1614, %vm1678
        %vm1695 = vmand %vm1615, %vm1679
        %vm1696 = vmand %vm1616, %vm1680
        %vm1697 = vmand %vm1617, %vm1681
        %vm1698 = vmand %vm1618, %vm1682
        %vm1699 = vmand %vm1619, %vm1683
        %vm1700 = vmand %vm1620, %vm1684
        %vm1701 = vmand %vm1621, %vm1685
        %vm1702 = vmand %vm1622, %vm1686
        %vm1703 = vmand %vm1623, %vm1687
        %vm1704 = vmand %vm1624, %vm1688
        %vm1705 = vmand %vm1625, %vm1689
        %vm1706 = vmand %vm1626, %vm1690
        %vm1707 = vmand %vm1627, %vm1691
        %vm1708 = vmand %vm1628, %vm1692
        %1725 = vrot.lane.b32.xlu0 %v541, 127
        %v1726 = vpop.permute.xlu0 %1725
        %1727 = vrot.lane.b32.xlu0 %v542, 127
        %v1728 = vpop.permute.xlu0 %1727
        %1729 = vrot.lane.b32.xlu0 %v543, 127
        %v1730 = vpop.permute.xlu0 %1729
        %1731 = vrot.lane.b32.xlu0 %v544, 127
        %v1732 = vpop.permute.xlu0 %1731
        %1733 = vrot.lane.b32.xlu0 %v545, 127
        %v1734 = vpop.permute.xlu0 %1733
        %1735 = vrot.lane.b32.xlu0 %v546, 127
        %v1736 = vpop.permute.xlu0 %1735
        %1737 = vrot.lane.b32.xlu0 %v547, 127
        %v1738 = vpop.permute.xlu0 %1737
        %1739 = vrot.lane.b32.xlu0 %v548, 127
        %v1740 = vpop.permute.xlu0 %1739
        %1741 = vrot.lane.b32.xlu0 %v549, 127
        %v1742 = vpop.permute.xlu0 %1741
        %1743 = vrot.lane.b32.xlu0 %v550, 127
        %v1744 = vpop.permute.xlu0 %1743
        %1745 = vrot.lane.b32.xlu0 %v551, 127
        %v1746 = vpop.permute.xlu0 %1745
        %1747 = vrot.lane.b32.xlu0 %v552, 127
        %v1748 = vpop.permute.xlu0 %1747
        %1749 = vrot.lane.b32.xlu0 %v553, 127
        %v1750 = vpop.permute.xlu0 %1749
        %1751 = vrot.lane.b32.xlu0 %v554, 127
        %v1752 = vpop.permute.xlu0 %1751
        %1753 = vrot.lane.b32.xlu0 %v555, 127
        %v1754 = vpop.permute.xlu0 %1753
        %1755 = vrot.lane.b32.xlu0 %v556, 127
        %v1756 = vpop.permute.xlu0 %1755
        %v1773 = vmul.f32 %v557, %v1726
        %v1774 = vmul.f32 %v558, %v1728
        %v1775 = vmul.f32 %v559, %v1730
        %v1776 = vmul.f32 %v560, %v1732
        %v1777 = vmul.f32 %v561, %v1734
        %v1778 = vmul.f32 %v562, %v1736
        %v1779 = vmul.f32 %v563, %v1738
        %v1780 = vmul.f32 %v564, %v1740
        %v1781 = vmul.f32 %v565, %v1742
        %v1782 = vmul.f32 %v566, %v1744
        %v1783 = vmul.f32 %v567, %v1746
        %v1784 = vmul.f32 %v568, %v1748
        %v1785 = vmul.f32 %v569, %v1750
        %v1786 = vmul.f32 %v570, %v1752
        %v1787 = vmul.f32 %v571, %v1754
        %v1788 = vmul.f32 %v572, %v1756
        %v1789 = vsel %vm1693, 1, 0
        %v1790 = vsel %vm1694, 1, 0
        %v1791 = vsel %vm1695, 1, 0
        %v1792 = vsel %vm1696, 1, 0
        %v1793 = vsel %vm1697, 1, 0
        %v1794 = vsel %vm1698, 1, 0
        %v1795 = vsel %vm1699, 1, 0
        %v1796 = vsel %vm1700, 1, 0
        %v1797 = vsel %vm1701, 1, 0
        %v1798 = vsel %vm1702, 1, 0
        %v1799 = vsel %vm1703, 1, 0
        %v1800 = vsel %vm1704, 1, 0
        %v1801 = vsel %vm1705, 1, 0
        %v1802 = vsel %vm1706, 1, 0
        %v1803 = vsel %vm1707, 1, 0
        %v1804 = vsel %vm1708, 1, 0
        %v1805 = vcvt.s32.f32 %v1789
        %v1806 = vcvt.s32.f32 %v1790
        %v1807 = vcvt.s32.f32 %v1791
        %v1808 = vcvt.s32.f32 %v1792
        %v1809 = vcvt.s32.f32 %v1793
        %v1810 = vcvt.s32.f32 %v1794
        %v1811 = vcvt.s32.f32 %v1795
        %v1812 = vcvt.s32.f32 %v1796
        %v1813 = vcvt.s32.f32 %v1797
        %v1814 = vcvt.s32.f32 %v1798
        %v1815 = vcvt.s32.f32 %v1799
        %v1816 = vcvt.s32.f32 %v1800
        %v1817 = vcvt.s32.f32 %v1801
        %v1818 = vcvt.s32.f32 %v1802
        %v1819 = vcvt.s32.f32 %v1803
        %v1820 = vcvt.s32.f32 %v1804
        %v1821 = vmul.f32 %v1773, %v1805
        %v1822 = vmul.f32 %v1774, %v1806
        %v1823 = vmul.f32 %v1775, %v1807
        %v1824 = vmul.f32 %v1776, %v1808
        %v1825 = vmul.f32 %v1777, %v1809
        %v1826 = vmul.f32 %v1778, %v1810
        %v1827 = vmul.f32 %v1779, %v1811
        %v1828 = vmul.f32 %v1780, %v1812
        %v1829 = vmul.f32 %v1781, %v1813
        %v1830 = vmul.f32 %v1782, %v1814
        %v1831 = vmul.f32 %v1783, %v1815
        %v1832 = vmul.f32 %v1784, %v1816
        %v1833 = vmul.f32 %v1785, %v1817
        %v1834 = vmul.f32 %v1786, %v1818
        %v1835 = vmul.f32 %v1787, %v1819
        %v1836 = vmul.f32 %v1788, %v1820
        %v1837 = vmul.u32 %v589, 8
        %v1838 = vmul.u32 %v590, 8
        %v1839 = vmul.u32 %v591, 8
        %v1840 = vmul.u32 %v592, 8
        %v1841 = vmul.u32 %v593, 8
        %v1842 = vmul.u32 %v594, 8
        %v1843 = vmul.u32 %v595, 8
        %v1844 = vmul.u32 %v596, 8
        %v1845 = vmul.u32 %v597, 8
        %v1846 = vmul.u32 %v598, 8
        %v1847 = vmul.u32 %v599, 8
        %v1848 = vmul.u32 %v600, 8
        %v1849 = vmul.u32 %v601, 8
        %v1850 = vmul.u32 %v602, 8
        %v1851 = vmul.u32 %v603, 8
        %v1852 = vmul.u32 %v604, 8
        %v1853 = vadd.s32 %v1837, %v958
        %v1854 = vadd.s32 %v1838, %v960
        %v1855 = vadd.s32 %v1839, %v962
        %v1856 = vadd.s32 %v1840, %v964
        %v1857 = vadd.s32 %v1841, %v966
        %v1858 = vadd.s32 %v1842, %v968
        %v1859 = vadd.s32 %v1843, %v970
        %v1860 = vadd.s32 %v1844, %v972
        %v1861 = vadd.s32 %v1845, %v974
        %v1862 = vadd.s32 %v1846, %v976
        %v1863 = vadd.s32 %v1847, %v978
        %v1864 = vadd.s32 %v1848, %v980
        %v1865 = vadd.s32 %v1849, %v982
        %v1866 = vadd.s32 %v1850, %v984
        %v1867 = vadd.s32 %v1851, %v986
        %v1868 = vadd.s32 %v1852, %v988
        %1869 = vset.pattern.permute.xlu0 1
        %1870 = vperm.xlu0 %1869, %v1853
        %v1871 = vpop.permute.xlu0 %1870
        %1872 = vset.pattern.permute.xlu0 1
        %1873 = vperm.xlu0 %1872, %v1854
        %v1874 = vpop.permute.xlu0 %1873
        %1875 = vset.pattern.permute.xlu0 1
        %1876 = vperm.xlu0 %1875, %v1855
        %v1877 = vpop.permute.xlu0 %1876
        %1878 = vset.pattern.permute.xlu0 1
        %1879 = vperm.xlu0 %1878, %v1856
        %v1880 = vpop.permute.xlu0 %1879
        %1881 = vset.pattern.permute.xlu0 1
        %1882 = vperm.xlu0 %1881, %v1857
        %v1883 = vpop.permute.xlu0 %1882
        %1884 = vset.pattern.permute.xlu0 1
        %1885 = vperm.xlu0 %1884, %v1858
        %v1886 = vpop.permute.xlu0 %1885
        %1887 = vset.pattern.permute.xlu0 1
        %1888 = vperm.xlu0 %1887, %v1859
        %v1889 = vpop.permute.xlu0 %1888
        %1890 = vset.pattern.permute.xlu0 1
        %1891 = vperm.xlu0 %1890, %v1860
        %v1892 = vpop.permute.xlu0 %1891
        %1893 = vset.pattern.permute.xlu0 1
        %1894 = vperm.xlu0 %1893, %v1861
        %v1895 = vpop.permute.xlu0 %1894
        %1896 = vset.pattern.permute.xlu0 1
        %1897 = vperm.xlu0 %1896, %v1862
        %v1898 = vpop.permute.xlu0 %1897
        %1899 = vset.pattern.permute.xlu0 1
        %1900 = vperm.xlu0 %1899, %v1863
        %v1901 = vpop.permute.xlu0 %1900
        %1902 = vset.pattern.permute.xlu0 1
        %1903 = vperm.xlu0 %1902, %v1864
        %v1904 = vpop.permute.xlu0 %1903
        %1905 = vset.pattern.permute.xlu0 1
        %1906 = vperm.xlu0 %1905, %v1865
        %v1907 = vpop.permute.xlu0 %1906
        %1908 = vset.pattern.permute.xlu0 1
        %1909 = vperm.xlu0 %1908, %v1866
        %v1910 = vpop.permute.xlu0 %1909
        %1911 = vset.pattern.permute.xlu0 1
        %1912 = vperm.xlu0 %1911, %v1867
        %v1913 = vpop.permute.xlu0 %1912
        %1914 = vset.pattern.permute.xlu0 1
        %1915 = vperm.xlu0 %1914, %v1868
        %v1916 = vpop.permute.xlu0 %1915
        %vm1917 = vcmp.eq.s32.totalorder %v423, %v1871
        %vm1918 = vcmp.eq.s32.totalorder %v423, %v1874
        %vm1919 = vcmp.eq.s32.totalorder %v423, %v1877
        %vm1920 = vcmp.eq.s32.totalorder %v423, %v1880
        %vm1921 = vcmp.eq.s32.totalorder %v423, %v1883
        %vm1922 = vcmp.eq.s32.totalorder %v423, %v1886
        %vm1923 = vcmp.eq.s32.totalorder %v423, %v1889
        %vm1924 = vcmp.eq.s32.totalorder %v423, %v1892
        %vm1925 = vcmp.eq.s32.totalorder %v423, %v1895
        %vm1926 = vcmp.eq.s32.totalorder %v423, %v1898
        %vm1927 = vcmp.eq.s32.totalorder %v423, %v1901
        %vm1928 = vcmp.eq.s32.totalorder %v423, %v1904
        %vm1929 = vcmp.eq.s32.totalorder %v423, %v1907
        %vm1930 = vcmp.eq.s32.totalorder %v423, %v1910
        %vm1931 = vcmp.eq.s32.totalorder %v423, %v1913
        %vm1932 = vcmp.eq.s32.totalorder %v423, %v1916
        %1934 = vset.pattern.permute.xlu0 0
        %1935 = vperm.xlu0 %1934, %v1821
        %v1936 = vpop.permute.xlu0 %1935
        %1939 = vset.pattern.permute.xlu0 0
        %1940 = vperm.xlu0 %1939, %v1822
        %v1941 = vpop.permute.xlu0 %1940
        %1944 = vset.pattern.permute.xlu0 0
        %1945 = vperm.xlu0 %1944, %v1823
        %v1946 = vpop.permute.xlu0 %1945
        %1949 = vset.pattern.permute.xlu0 0
        %1950 = vperm.xlu0 %1949, %v1824
        %v1951 = vpop.permute.xlu0 %1950
        %1954 = vset.pattern.permute.xlu0 0
        %1955 = vperm.xlu0 %1954, %v1825
        %v1956 = vpop.permute.xlu0 %1955
        %1959 = vset.pattern.permute.xlu0 0
        %1960 = vperm.xlu0 %1959, %v1826
        %v1961 = vpop.permute.xlu0 %1960
        %1964 = vset.pattern.permute.xlu0 0
        %1965 = vperm.xlu0 %1964, %v1827
        %v1966 = vpop.permute.xlu0 %1965
        %1969 = vset.pattern.permute.xlu0 0
        %1970 = vperm.xlu0 %1969, %v1828
        %v1971 = vpop.permute.xlu0 %1970
        %1974 = vset.pattern.permute.xlu0 0
        %1975 = vperm.xlu0 %1974, %v1829
        %v1976 = vpop.permute.xlu0 %1975
        %1979 = vset.pattern.permute.xlu0 0
        %1980 = vperm.xlu0 %1979, %v1830
        %v1981 = vpop.permute.xlu0 %1980
        %1984 = vset.pattern.permute.xlu0 0
        %1985 = vperm.xlu0 %1984, %v1831
        %v1986 = vpop.permute.xlu0 %1985
        %1989 = vset.pattern.permute.xlu0 0
        %1990 = vperm.xlu0 %1989, %v1832
        %v1991 = vpop.permute.xlu0 %1990
        %1994 = vset.pattern.permute.xlu0 0
        %1995 = vperm.xlu0 %1994, %v1833
        %v1996 = vpop.permute.xlu0 %1995
        %1999 = vset.pattern.permute.xlu0 0
        %2000 = vperm.xlu0 %1999, %v1834
        %v2001 = vpop.permute.xlu0 %2000
        %2004 = vset.pattern.permute.xlu0 0
        %2005 = vperm.xlu0 %2004, %v1835
        %v2006 = vpop.permute.xlu0 %2005
        %2009 = vset.pattern.permute.xlu0 0
        %2010 = vperm.xlu0 %2009, %v1836
        %v2011 = vpop.permute.xlu0 %2010
        %v2013 = vsel %vm1917, %v1936, 0.0
        %v2014 = vsel %vm1918, %v1941, 0.0
        %v2015 = vsel %vm1919, %v1946, 0.0
        %v2016 = vsel %vm1920, %v1951, 0.0
        %v2017 = vsel %vm1921, %v1956, 0.0
        %v2018 = vsel %vm1922, %v1961, 0.0
        %v2019 = vsel %vm1923, %v1966, 0.0
        %v2020 = vsel %vm1924, %v1971, 0.0
        %v2021 = vsel %vm1925, %v1976, 0.0
        %v2022 = vsel %vm1926, %v1981, 0.0
        %v2023 = vsel %vm1927, %v1986, 0.0
        %v2024 = vsel %vm1928, %v1991, 0.0
        %v2025 = vsel %vm1929, %v1996, 0.0
        %v2026 = vsel %vm1930, %v2001, 0.0
        %v2027 = vsel %vm1931, %v2006, 0.0
        %v2028 = vsel %vm1932, %v2011, 0.0
        %v2029 = vadd.f32 %v1533, %v2013
        %v2030 = vadd.f32 %v1534, %v2014
        %v2031 = vadd.f32 %v1535, %v2015
        %v2032 = vadd.f32 %v1536, %v2016
        %v2033 = vadd.f32 %v1537, %v2017
        %v2034 = vadd.f32 %v1538, %v2018
        %v2035 = vadd.f32 %v1539, %v2019
        %v2036 = vadd.f32 %v1540, %v2020
        %v2037 = vadd.f32 %v1541, %v2021
        %v2038 = vadd.f32 %v1542, %v2022
        %v2039 = vadd.f32 %v1543, %v2023
        %v2040 = vadd.f32 %v1544, %v2024
        %v2041 = vadd.f32 %v1545, %v2025
        %v2042 = vadd.f32 %v1546, %v2026
        %v2043 = vadd.f32 %v1547, %v2027
        %v2044 = vadd.f32 %v1548, %v2028
        %vm2045 = vmand %vm1213, %vm1597
        %vm2046 = vmand %vm1214, %vm1598
        %vm2047 = vmand %vm1215, %vm1599
        %vm2048 = vmand %vm1216, %vm1600
        %vm2049 = vmand %vm1217, %vm1601
        %vm2050 = vmand %vm1218, %vm1602
        %vm2051 = vmand %vm1219, %vm1603
        %vm2052 = vmand %vm1220, %vm1604
        %vm2053 = vmand %vm1221, %vm1605
        %vm2054 = vmand %vm1222, %vm1606
        %vm2055 = vmand %vm1223, %vm1607
        %vm2056 = vmand %vm1224, %vm1608
        %vm2057 = vmand %vm1225, %vm1609
        %vm2058 = vmand %vm1226, %vm1610
        %vm2059 = vmand %vm1227, %vm1611
        %vm2060 = vmand %vm1228, %vm1612
        %vm2061 = vmand %vm2045, %vm1677
        %vm2062 = vmand %vm2046, %vm1678
        %vm2063 = vmand %vm2047, %vm1679
        %vm2064 = vmand %vm2048, %vm1680
        %vm2065 = vmand %vm2049, %vm1681
        %vm2066 = vmand %vm2050, %vm1682
        %vm2067 = vmand %vm2051, %vm1683
        %vm2068 = vmand %vm2052, %vm1684
        %vm2069 = vmand %vm2053, %vm1685
        %vm2070 = vmand %vm2054, %vm1686
        %vm2071 = vmand %vm2055, %vm1687
        %vm2072 = vmand %vm2056, %vm1688
        %vm2073 = vmand %vm2057, %vm1689
        %vm2074 = vmand %vm2058, %vm1690
        %vm2075 = vmand %vm2059, %vm1691
        %vm2076 = vmand %vm2060, %vm1692
        %v2077 = vmul.f32 %v541, %v1726
        %v2078 = vmul.f32 %v542, %v1728
        %v2079 = vmul.f32 %v543, %v1730
        %v2080 = vmul.f32 %v544, %v1732
        %v2081 = vmul.f32 %v545, %v1734
        %v2082 = vmul.f32 %v546, %v1736
        %v2083 = vmul.f32 %v547, %v1738
        %v2084 = vmul.f32 %v548, %v1740
        %v2085 = vmul.f32 %v549, %v1742
        %v2086 = vmul.f32 %v550, %v1744
        %v2087 = vmul.f32 %v551, %v1746
        %v2088 = vmul.f32 %v552, %v1748
        %v2089 = vmul.f32 %v553, %v1750
        %v2090 = vmul.f32 %v554, %v1752
        %v2091 = vmul.f32 %v555, %v1754
        %v2092 = vmul.f32 %v556, %v1756
        %v2093 = vsel %vm2061, 1, 0
        %v2094 = vsel %vm2062, 1, 0
        %v2095 = vsel %vm2063, 1, 0
        %v2096 = vsel %vm2064, 1, 0
        %v2097 = vsel %vm2065, 1, 0
        %v2098 = vsel %vm2066, 1, 0
        %v2099 = vsel %vm2067, 1, 0
        %v2100 = vsel %vm2068, 1, 0
        %v2101 = vsel %vm2069, 1, 0
        %v2102 = vsel %vm2070, 1, 0
        %v2103 = vsel %vm2071, 1, 0
        %v2104 = vsel %vm2072, 1, 0
        %v2105 = vsel %vm2073, 1, 0
        %v2106 = vsel %vm2074, 1, 0
        %v2107 = vsel %vm2075, 1, 0
        %v2108 = vsel %vm2076, 1, 0
        %v2109 = vcvt.s32.f32 %v2093
        %v2110 = vcvt.s32.f32 %v2094
        %v2111 = vcvt.s32.f32 %v2095
        %v2112 = vcvt.s32.f32 %v2096
        %v2113 = vcvt.s32.f32 %v2097
        %v2114 = vcvt.s32.f32 %v2098
        %v2115 = vcvt.s32.f32 %v2099
        %v2116 = vcvt.s32.f32 %v2100
        %v2117 = vcvt.s32.f32 %v2101
        %v2118 = vcvt.s32.f32 %v2102
        %v2119 = vcvt.s32.f32 %v2103
        %v2120 = vcvt.s32.f32 %v2104
        %v2121 = vcvt.s32.f32 %v2105
        %v2122 = vcvt.s32.f32 %v2106
        %v2123 = vcvt.s32.f32 %v2107
        %v2124 = vcvt.s32.f32 %v2108
        %v2125 = vmul.f32 %v2077, %v2109
        %v2126 = vmul.f32 %v2078, %v2110
        %v2127 = vmul.f32 %v2079, %v2111
        %v2128 = vmul.f32 %v2080, %v2112
        %v2129 = vmul.f32 %v2081, %v2113
        %v2130 = vmul.f32 %v2082, %v2114
        %v2131 = vmul.f32 %v2083, %v2115
        %v2132 = vmul.f32 %v2084, %v2116
        %v2133 = vmul.f32 %v2085, %v2117
        %v2134 = vmul.f32 %v2086, %v2118
        %v2135 = vmul.f32 %v2087, %v2119
        %v2136 = vmul.f32 %v2088, %v2120
        %v2137 = vmul.f32 %v2089, %v2121
        %v2138 = vmul.f32 %v2090, %v2122
        %v2139 = vmul.f32 %v2091, %v2123
        %v2140 = vmul.f32 %v2092, %v2124
        %v2141 = vadd.s32 %v1837, %v1326
        %v2142 = vadd.s32 %v1838, %v1328
        %v2143 = vadd.s32 %v1839, %v1330
        %v2144 = vadd.s32 %v1840, %v1332
        %v2145 = vadd.s32 %v1841, %v1334
        %v2146 = vadd.s32 %v1842, %v1336
        %v2147 = vadd.s32 %v1843, %v1338
        %v2148 = vadd.s32 %v1844, %v1340
        %v2149 = vadd.s32 %v1845, %v1342
        %v2150 = vadd.s32 %v1846, %v1344
        %v2151 = vadd.s32 %v1847, %v1346
        %v2152 = vadd.s32 %v1848, %v1348
        %v2153 = vadd.s32 %v1849, %v1350
        %v2154 = vadd.s32 %v1850, %v1352
        %v2155 = vadd.s32 %v1851, %v1354
        %v2156 = vadd.s32 %v1852, %v1356
        %2157 = vset.pattern.permute.xlu0 1
        %2158 = vperm.xlu0 %2157, %v2141
        %v2159 = vpop.permute.xlu0 %2158
        %2160 = vset.pattern.permute.xlu0 1
        %2161 = vperm.xlu0 %2160, %v2142
        %v2162 = vpop.permute.xlu0 %2161
        %2163 = vset.pattern.permute.xlu0 1
        %2164 = vperm.xlu0 %2163, %v2143
        %v2165 = vpop.permute.xlu0 %2164
        %2166 = vset.pattern.permute.xlu0 1
        %2167 = vperm.xlu0 %2166, %v2144
        %v2168 = vpop.permute.xlu0 %2167
        %2169 = vset.pattern.permute.xlu0 1
        %2170 = vperm.xlu0 %2169, %v2145
        %v2171 = vpop.permute.xlu0 %2170
        %2172 = vset.pattern.permute.xlu0 1
        %2173 = vperm.xlu0 %2172, %v2146
        %v2174 = vpop.permute.xlu0 %2173
        %2175 = vset.pattern.permute.xlu0 1
        %2176 = vperm.xlu0 %2175, %v2147
        %v2177 = vpop.permute.xlu0 %2176
        %2178 = vset.pattern.permute.xlu0 1
        %2179 = vperm.xlu0 %2178, %v2148
        %v2180 = vpop.permute.xlu0 %2179
        %2181 = vset.pattern.permute.xlu0 1
        %2182 = vperm.xlu0 %2181, %v2149
        %v2183 = vpop.permute.xlu0 %2182
        %2184 = vset.pattern.permute.xlu0 1
        %2185 = vperm.xlu0 %2184, %v2150
        %v2186 = vpop.permute.xlu0 %2185
        %2187 = vset.pattern.permute.xlu0 1
        %2188 = vperm.xlu0 %2187, %v2151
        %v2189 = vpop.permute.xlu0 %2188
        %2190 = vset.pattern.permute.xlu0 1
        %2191 = vperm.xlu0 %2190, %v2152
        %v2192 = vpop.permute.xlu0 %2191
        %2193 = vset.pattern.permute.xlu0 1
        %2194 = vperm.xlu0 %2193, %v2153
        %v2195 = vpop.permute.xlu0 %2194
        %2196 = vset.pattern.permute.xlu0 1
        %2197 = vperm.xlu0 %2196, %v2154
        %v2198 = vpop.permute.xlu0 %2197
        %2199 = vset.pattern.permute.xlu0 1
        %2200 = vperm.xlu0 %2199, %v2155
        %v2201 = vpop.permute.xlu0 %2200
        %2202 = vset.pattern.permute.xlu0 1
        %2203 = vperm.xlu0 %2202, %v2156
        %v2204 = vpop.permute.xlu0 %2203
        %vm2205 = vcmp.eq.s32.totalorder %v423, %v2159
        %vm2206 = vcmp.eq.s32.totalorder %v423, %v2162
        %vm2207 = vcmp.eq.s32.totalorder %v423, %v2165
        %vm2208 = vcmp.eq.s32.totalorder %v423, %v2168
        %vm2209 = vcmp.eq.s32.totalorder %v423, %v2171
        %vm2210 = vcmp.eq.s32.totalorder %v423, %v2174
        %vm2211 = vcmp.eq.s32.totalorder %v423, %v2177
        %vm2212 = vcmp.eq.s32.totalorder %v423, %v2180
        %vm2213 = vcmp.eq.s32.totalorder %v423, %v2183
        %vm2214 = vcmp.eq.s32.totalorder %v423, %v2186
        %vm2215 = vcmp.eq.s32.totalorder %v423, %v2189
        %vm2216 = vcmp.eq.s32.totalorder %v423, %v2192
        %vm2217 = vcmp.eq.s32.totalorder %v423, %v2195
        %vm2218 = vcmp.eq.s32.totalorder %v423, %v2198
        %vm2219 = vcmp.eq.s32.totalorder %v423, %v2201
        %vm2220 = vcmp.eq.s32.totalorder %v423, %v2204
        %2222 = vset.pattern.permute.xlu0 0
        %2223 = vperm.xlu0 %2222, %v2125
        %v2224 = vpop.permute.xlu0 %2223
        %2227 = vset.pattern.permute.xlu0 0
        %2228 = vperm.xlu0 %2227, %v2126
        %v2229 = vpop.permute.xlu0 %2228
        %2232 = vset.pattern.permute.xlu0 0
        %2233 = vperm.xlu0 %2232, %v2127
        %v2234 = vpop.permute.xlu0 %2233
        %2237 = vset.pattern.permute.xlu0 0
        %2238 = vperm.xlu0 %2237, %v2128
        %v2239 = vpop.permute.xlu0 %2238
        %2242 = vset.pattern.permute.xlu0 0
        %2243 = vperm.xlu0 %2242, %v2129
        %v2244 = vpop.permute.xlu0 %2243
        %2247 = vset.pattern.permute.xlu0 0
        %2248 = vperm.xlu0 %2247, %v2130
        %v2249 = vpop.permute.xlu0 %2248
        %2252 = vset.pattern.permute.xlu0 0
        %2253 = vperm.xlu0 %2252, %v2131
        %v2254 = vpop.permute.xlu0 %2253
        %2257 = vset.pattern.permute.xlu0 0
        %2258 = vperm.xlu0 %2257, %v2132
        %v2259 = vpop.permute.xlu0 %2258
        %2262 = vset.pattern.permute.xlu0 0
        %2263 = vperm.xlu0 %2262, %v2133
        %v2264 = vpop.permute.xlu0 %2263
        %2267 = vset.pattern.permute.xlu0 0
        %2268 = vperm.xlu0 %2267, %v2134
        %v2269 = vpop.permute.xlu0 %2268
        %2272 = vset.pattern.permute.xlu0 0
        %2273 = vperm.xlu0 %2272, %v2135
        %v2274 = vpop.permute.xlu0 %2273
        %2277 = vset.pattern.permute.xlu0 0
        %2278 = vperm.xlu0 %2277, %v2136
        %v2279 = vpop.permute.xlu0 %2278
        %2282 = vset.pattern.permute.xlu0 0
        %2283 = vperm.xlu0 %2282, %v2137
        %v2284 = vpop.permute.xlu0 %2283
        %2287 = vset.pattern.permute.xlu0 0
        %2288 = vperm.xlu0 %2287, %v2138
        %v2289 = vpop.permute.xlu0 %2288
        %2292 = vset.pattern.permute.xlu0 0
        %2293 = vperm.xlu0 %2292, %v2139
        %v2294 = vpop.permute.xlu0 %2293
        %2297 = vset.pattern.permute.xlu0 0
        %2298 = vperm.xlu0 %2297, %v2140
        %v2299 = vpop.permute.xlu0 %2298
        %v2301 = vsel %vm2205, %v2224, 0.0
        %v2302 = vsel %vm2206, %v2229, 0.0
        %v2303 = vsel %vm2207, %v2234, 0.0
        %v2304 = vsel %vm2208, %v2239, 0.0
        %v2305 = vsel %vm2209, %v2244, 0.0
        %v2306 = vsel %vm2210, %v2249, 0.0
        %v2307 = vsel %vm2211, %v2254, 0.0
        %v2308 = vsel %vm2212, %v2259, 0.0
        %v2309 = vsel %vm2213, %v2264, 0.0
        %v2310 = vsel %vm2214, %v2269, 0.0
        %v2311 = vsel %vm2215, %v2274, 0.0
        %v2312 = vsel %vm2216, %v2279, 0.0
        %v2313 = vsel %vm2217, %v2284, 0.0
        %v2314 = vsel %vm2218, %v2289, 0.0
        %v2315 = vsel %vm2219, %v2294, 0.0
        %v2316 = vsel %vm2220, %v2299, 0.0
        %v2317 = vadd.f32 %v2029, %v2301
        %v2318 = vadd.f32 %v2030, %v2302
        %v2319 = vadd.f32 %v2031, %v2303
        %v2320 = vadd.f32 %v2032, %v2304
        %v2321 = vadd.f32 %v2033, %v2305
        %v2322 = vadd.f32 %v2034, %v2306
        %v2323 = vadd.f32 %v2035, %v2307
        %v2324 = vadd.f32 %v2036, %v2308
        %v2325 = vadd.f32 %v2037, %v2309
        %v2326 = vadd.f32 %v2038, %v2310
        %v2327 = vadd.f32 %v2039, %v2311
        %v2328 = vadd.f32 %v2040, %v2312
        %v2329 = vadd.f32 %v2041, %v2313
        %v2330 = vadd.f32 %v2042, %v2314
        %v2331 = vadd.f32 %v2043, %v2315
        %v2332 = vadd.f32 %v2044, %v2316
        %v2333 = vpack.c.bf16 %v2318, %v2317
        %v2334 = vpack.c.bf16 %v2320, %v2319
        %v2335 = vpack.c.bf16 %v2322, %v2321
        %v2336 = vpack.c.bf16 %v2324, %v2323
        %v2337 = vpack.c.bf16 %v2326, %v2325
        %v2338 = vpack.c.bf16 %v2328, %v2327
        %v2339 = vpack.c.bf16 %v2330, %v2329
        %v2340 = vpack.c.bf16 %v2332, %v2331
        %vm2341 = vcmask 523264
        %2342 = vst.msk [vmem:[#allocation2] sm:$0xff] %vm2341, %v2333
        %2343 = vst.msk [vmem:[#allocation2 + $0x8] sm:$0xff] %vm2341, %v2334
        %2344 = vst.msk [vmem:[#allocation2 + $0x10] sm:$0xff] %vm2341, %v2335
        %2345 = vst.msk [vmem:[#allocation2 + $0x18] sm:$0xff] %vm2341, %v2336
        %2346 = vst.msk [vmem:[#allocation2 + $0x20] sm:$0xff] %vm2341, %v2337
        %2347 = vst.msk [vmem:[#allocation2 + $0x28] sm:$0xff] %vm2341, %v2338
        %2348 = vst.msk [vmem:[#allocation2 + $0x30] sm:$0xff] %vm2341, %v2339
        %2349 = vst.msk [vmem:[#allocation2 + $0x38] sm:$0xff] %vm2341, %v2340
      $region64: #{tpu_custom_call.1} parent=59 // pred_fallthru
        _
      %v2350 = vld [vmem:[%s394] sm:$0xf]
      %v2351 = vld [vmem:[%s394 + $0x4] sm:$0xf]
      %v2352 = vld [vmem:[%s394 + $0x8] sm:$0xf]
      %v2353 = vld [vmem:[%s394 + $0xc] sm:$0xf]
      %v2354 = vld [vmem:[%s394 + $0x10] sm:$0xf]
      %v2355 = vld [vmem:[%s394 + $0x14] sm:$0xf]
      %v2356 = vld [vmem:[%s394 + $0x18] sm:$0xf]
      %v2357 = vld [vmem:[%s394 + $0x1c] sm:$0xf]
      %v2358 = vld [vmem:[#allocation2] sm:$0xff]
      %v2359 = vld [vmem:[#allocation2 + $0x8] sm:$0xff]
      %v2360 = vld [vmem:[#allocation2 + $0x10] sm:$0xff]
      %v2361 = vld [vmem:[#allocation2 + $0x18] sm:$0xff]
      %v2362 = vld [vmem:[#allocation2 + $0x20] sm:$0xff]
      %v2363 = vld [vmem:[#allocation2 + $0x28] sm:$0xff]
      %v2364 = vld [vmem:[#allocation2 + $0x30] sm:$0xff]
      %v2365 = vld [vmem:[#allocation2 + $0x38] sm:$0xff]
      %v2374 = vunpack.c.l.b16 %v2350
      %v2375 = vunpack.c.l.b16 %v2351
      %v2376 = vunpack.c.l.b16 %v2352
      %v2377 = vunpack.c.l.b16 %v2353
      %v2378 = vunpack.c.l.b16 %v2354
      %v2379 = vunpack.c.l.b16 %v2355
      %v2380 = vunpack.c.l.b16 %v2356
      %v2381 = vunpack.c.l.b16 %v2357
      %v2382 = vpack.c.b16 %v2375, %v2374
      %v2383 = vpack.c.b16 %v2377, %v2376
      %v2384 = vpack.c.b16 %v2379, %v2378
      %v2385 = vpack.c.b16 %v2381, %v2380
      %vm2386 = vcmask 523264
      %v2388 = vsel %vm2386, %v2358, 0
      %v2391 = vsel %vm2386, %v2359, 0
      %v2394 = vsel %vm2386, %v2360, 0
      %v2397 = vsel %vm2386, %v2361, 0
      %v2400 = vsel %vm2386, %v2362, 0
      %v2403 = vsel %vm2386, %v2363, 0
      %v2406 = vsel %vm2386, %v2364, 0
      %v2409 = vsel %vm2386, %v2365, 0
      %v2412 = vsel %vm2386, %v2382, 0
      %v2415 = vsel %vm2386, %v2383, 0
      %v2418 = vsel %vm2386, %v2384, 0
      %v2421 = vsel %vm2386, %v2385, 0
      %2423 = vmatprep.subr.bf16.mxu0 0
      %2424 = vmatpush1.bf16.xpose.msra.mxu0 %v2412
      %2425 = vmatprep.subr.bf16.mxu0 0
      %2426 = vmatpush1.bf16.xpose.msra.mxu0 %v2415
      %2427 = vmatprep.subr.bf16.mxu0 0
      %2428 = vmatpush1.bf16.xpose.msra.mxu0 %v2418
      %2429 = vmatprep.subr.bf16.mxu0 0
      %2430 = vmatpush1.bf16.xpose.msra.mxu0 %v2421
      %2431 = vmatprep.subr.bf16.mxu0 0
      %2432 = vmatpush1.bf16.xpose.msra.mxu0 0
      %2433 = vmatprep.subr.bf16.mxu0 0
      %2434 = vmatpush1.bf16.xpose.msra.mxu0 0
      %2435 = vmatprep.subr.bf16.mxu0 0
      %2436 = vmatpush1.bf16.xpose.msra.mxu0 0
      %2437 = vmatprep.subr.bf16.mxu0 0
      %2438 = vmatpush1.bf16.xpose.msra.mxu0 0
      %2439 = vmatprep.subr.bf16.mxu0 0
      %2440 = vmatpush1.bf16.xpose.msra.mxu0 0
      %2441 = vmatprep.subr.bf16.mxu0 0
      %2442 = vmatpush1.bf16.xpose.msra.mxu0 0
      %2443 = vmatprep.subr.bf16.mxu0 0
      %2444 = vmatpush1.bf16.xpose.msra.mxu0 0
      %2445 = vmatprep.subr.bf16.mxu0 0
      %2446 = vmatpush1.bf16.xpose.msra.mxu0 0
      %2447 = vmatprep.subr.bf16.mxu0 0
      %2448 = vmatpush1.bf16.xpose.msra.mxu0 0
      %2449 = vmatprep.subr.bf16.mxu0 0
      %2450 = vmatpush1.bf16.xpose.msra.mxu0 0
      %2451 = vmatprep.subr.bf16.mxu0 0
      %2452 = vmatpush1.bf16.xpose.msra.mxu0 0
      %2453 = vmatprep.subr.bf16.mxu0 0
      %2454 = vmatpush1.bf16.xpose.msra.mxu0 0
      %2455 = vmatprep.mubr.bf16.mxu0 0
      %2456 = vmatmul.mubr.bf16.gmra.mrb[0].mxu0 %v2388
      %v2457 = vpop.f32.mrb[0].mxu0
      %v2458 = vadd.f32 0.0, %v2457
      %v2459 = vpop.f32.mrb[0].mxu0
      %v2460 = vpop.f32.mrb[0].mxu0
      %v2461 = vadd.f32 0.0, %v2460
      %v2462 = vpop.f32.mrb[0].mxu0
      %2463 = vmatprep.mubr.bf16.mxu0 0
      %2464 = vmatmul.mubr.bf16.gmra.mrb[0].mxu0 %v2391
      %v2465 = vpop.f32.mrb[0].mxu0
      %v2466 = vadd.f32 0.0, %v2465
      %v2467 = vpop.f32.mrb[0].mxu0
      %v2468 = vpop.f32.mrb[0].mxu0
      %v2469 = vadd.f32 0.0, %v2468
      %v2470 = vpop.f32.mrb[0].mxu0
      %2471 = vmatprep.mubr.bf16.mxu0 0
      %2472 = vmatmul.mubr.bf16.gmra.mrb[0].mxu0 %v2394
      %v2473 = vpop.f32.mrb[0].mxu0
      %v2474 = vadd.f32 0.0, %v2473
      %v2475 = vpop.f32.mrb[0].mxu0
      %v2476 = vpop.f32.mrb[0].mxu0
      %v2477 = vadd.f32 0.0, %v2476
      %v2478 = vpop.f32.mrb[0].mxu0
      %2479 = vmatprep.mubr.bf16.mxu0 0
      %2480 = vmatmul.mubr.bf16.gmra.mrb[0].mxu0 %v2397
      %v2481 = vpop.f32.mrb[0].mxu0
      %v2482 = vadd.f32 0.0, %v2481
      %v2483 = vpop.f32.mrb[0].mxu0
      %v2484 = vpop.f32.mrb[0].mxu0
      %v2485 = vadd.f32 0.0, %v2484
      %v2486 = vpop.f32.mrb[0].mxu0
      %2487 = vmatprep.mubr.bf16.mxu0 0
      %2488 = vmatmul.mubr.bf16.gmra.mrb[0].mxu0 %v2400
      %v2489 = vpop.f32.mrb[0].mxu0
      %v2490 = vadd.f32 0.0, %v2489
      %v2491 = vpop.f32.mrb[0].mxu0
      %v2492 = vpop.f32.mrb[0].mxu0
      %v2493 = vadd.f32 0.0, %v2492
      %v2494 = vpop.f32.mrb[0].mxu0
      %2495 = vmatprep.mubr.bf16.mxu0 0
      %2496 = vmatmul.mubr.bf16.gmra.mrb[0].mxu0 %v2403
      %v2497 = vpop.f32.mrb[0].mxu0
      %v2498 = vadd.f32 0.0, %v2497
      %v2499 = vpop.f32.mrb[0].mxu0
      %v2500 = vpop.f32.mrb[0].mxu0
      %v2501 = vadd.f32 0.0, %v2500
      %v2502 = vpop.f32.mrb[0].mxu0
      %2503 = vmatprep.mubr.bf16.mxu0 0
      %2504 = vmatmul.mubr.bf16.gmra.mrb[0].mxu0 %v2406
      %v2505 = vpop.f32.mrb[0].mxu0
      %v2506 = vadd.f32 0.0, %v2505
      %v2507 = vpop.f32.mrb[0].mxu0
      %v2508 = vpop.f32.mrb[0].mxu0
      %v2509 = vadd.f32 0.0, %v2508
      %v2510 = vpop.f32.mrb[0].mxu0
      %2511 = vmatprep.mubr.bf16.mxu0 0
      %2512 = vmatmul.mubr.bf16.gmra.mrb[0].mxu0 %v2409
      %v2513 = vpop.f32.mrb[0].mxu0
      %v2514 = vadd.f32 0.0, %v2513
      %v2515 = vpop.f32.mrb[0].mxu0
      %v2516 = vpop.f32.mrb[0].mxu0
      %v2517 = vadd.f32 0.0, %v2516
      %v2518 = vpop.f32.mrb[0].mxu0
      %2519 = vdwg.mxu0
      %v2520 = vld [vmem:[%s2] sm:$0xff]
      %v2521 = vld [vmem:[%s2 + $0x8] sm:$0xff]
      %v2522 = vld [vmem:[%s2 + $0x10] sm:$0xff]
      %v2523 = vld [vmem:[%s2 + $0x18] sm:$0xff]
      %v2524 = vld [vmem:[%s2 + $0x20] sm:$0xff]
      %v2525 = vld [vmem:[%s2 + $0x28] sm:$0xff]
      %v2526 = vld [vmem:[%s2 + $0x30] sm:$0xff]
      %v2527 = vld [vmem:[%s2 + $0x38] sm:$0xff]
      %v2528 = vld [vmem:[%s3] sm:$0x1]
      %v2530 = vlaneseq
      %v2531 = vshrl.u32 %v2530, 7
      %v2532 = vsub.s32 0, %v2531
      %v2533 = vrot.slane %v2528, %v2532
      %v2536 = vsel %vm2386, %v2458, 0
      %v2539 = vsel %vm2386, %v2461, 0
      %v2542 = vsel %vm2386, %v2466, 0
      %v2545 = vsel %vm2386, %v2469, 0
      %v2548 = vsel %vm2386, %v2474, 0
      %v2551 = vsel %vm2386, %v2477, 0
      %v2554 = vsel %vm2386, %v2482, 0
      %v2557 = vsel %vm2386, %v2485, 0
      %v2560 = vsel %vm2386, %v2490, 0
      %v2563 = vsel %vm2386, %v2493, 0
      %v2566 = vsel %vm2386, %v2498, 0
      %v2569 = vsel %vm2386, %v2501, 0
      %v2572 = vsel %vm2386, %v2506, 0
      %v2575 = vsel %vm2386, %v2509, 0
      %v2578 = vsel %vm2386, %v2514, 0
      %v2581 = vsel %vm2386, %v2517, 0
      %2583 = vmatprep.subr.mxu0 0.0
      %2584 = vmatpush1.msra.mxu0 %v2520
      %2585 = vmatprep.subr.mxu0 0.0
      %2586 = vmatpush1.msra.mxu0 %v2521
      %2587 = vmatprep.subr.mxu0 0.0
      %2588 = vmatpush1.msra.mxu0 %v2522
      %2589 = vmatprep.subr.mxu0 0.0
      %2590 = vmatpush1.msra.mxu0 %v2523
      %2591 = vmatprep.subr.mxu0 0.0
      %2592 = vmatpush1.msra.mxu0 %v2524
      %2593 = vmatprep.subr.mxu0 0.0
      %2594 = vmatpush1.msra.mxu0 %v2525
      %2595 = vmatprep.subr.mxu0 0.0
      %2596 = vmatpush1.msra.mxu0 %v2526
      %2597 = vmatprep.subr.mxu0 0.0
      %2598 = vmatpush1.msra.mxu0 %v2527
      %2599 = vmatprep.subr.mxu0 0.0
      %2600 = vmatpush1.msra.mxu0 0.0
      %2601 = vmatprep.subr.mxu0 0.0
      %2602 = vmatpush1.msra.mxu0 0.0
      %2603 = vmatprep.subr.mxu0 0.0
      %2604 = vmatpush1.msra.mxu0 0.0
      %2605 = vmatprep.subr.mxu0 0.0
      %2606 = vmatpush1.msra.mxu0 0.0
      %2607 = vmatprep.subr.mxu0 0.0
      %2608 = vmatpush1.msra.mxu0 0.0
      %2609 = vmatprep.subr.mxu0 0.0
      %2610 = vmatpush1.msra.mxu0 0.0
      %2611 = vmatprep.subr.mxu0 0.0
      %2612 = vmatpush1.msra.mxu0 0.0
      %2613 = vmatprep.subr.mxu0 0.0
      %2614 = vmatpush1.msra.mxu0 0.0
      %2615 = vmatprep.subr.mxu0 0.0
      %2616 = vmatpush1.msra.mxu0 0.0
      %2617 = vmatprep.subr.mxu0 0.0
      %2618 = vmatpush1.msra.mxu0 0.0
      %2619 = vmatprep.subr.mxu0 0.0
      %2620 = vmatpush1.msra.mxu0 0.0
      %2621 = vmatprep.subr.mxu0 0.0
      %2622 = vmatpush1.msra.mxu0 0.0
      %2623 = vmatprep.subr.mxu0 0.0
      %2624 = vmatpush1.msra.mxu0 0.0
      %2625 = vmatprep.subr.mxu0 0.0
      %2626 = vmatpush1.msra.mxu0 0.0
      %2627 = vmatprep.subr.mxu0 0.0
      %2628 = vmatpush1.msra.mxu0 0.0
      %2629 = vmatprep.subr.mxu0 0.0
      %2630 = vmatpush1.msra.mxu0 0.0
      %2631 = vmatprep.subr.mxu0 0.0
      %2632 = vmatpush1.msra.mxu0 0.0
      %2633 = vmatprep.subr.mxu0 0.0
      %2634 = vmatpush1.msra.mxu0 0.0
      %2635 = vmatprep.subr.mxu0 0.0
      %2636 = vmatpush1.msra.mxu0 0.0
      %2637 = vmatprep.subr.mxu0 0.0
      %2638 = vmatpush1.msra.mxu0 0.0
      %2639 = vmatprep.subr.mxu0 0.0
      %2640 = vmatpush1.msra.mxu0 0.0
      %2641 = vmatprep.subr.mxu0 0.0
      %2642 = vmatpush1.msra.mxu0 0.0
      %2643 = vmatprep.subr.mxu0 0.0
      %2644 = vmatpush1.msra.mxu0 0.0
      %2645 = vmatprep.subr.mxu0 0.0
      %2646 = vmatpush1.msra.mxu0 0.0
      %2647 = vmatprep.mubr.f32.mxu0 0.0
      %2648 = vmatmul.mubr.f32.gmra.mrb[0].mxu0 %v2536
      %v2649 = vpop.f32.mrb[0].mxu0
      %v2650 = vadd.f32 %v2533, %v2649
      %v2651 = vpop.f32.mrb[0].mxu0
      %2652 = vmatprep.mubr.f32.mxu0 0.0
      %2653 = vmatmul.mubr.f32.gmra.mrb[0].mxu0 %v2539
      %v2654 = vpop.f32.mrb[0].mxu0
      %v2655 = vadd.f32 %v2533, %v2654
      %v2656 = vpop.f32.mrb[0].mxu0
      %2657 = vmatprep.mubr.f32.mxu0 0.0
      %2658 = vmatmul.mubr.f32.gmra.mrb[0].mxu0 %v2542
      %v2659 = vpop.f32.mrb[0].mxu0
      %v2660 = vadd.f32 %v2533, %v2659
      %v2661 = vpop.f32.mrb[0].mxu0
      %2662 = vmatprep.mubr.f32.mxu0 0.0
      %2663 = vmatmul.mubr.f32.gmra.mrb[0].mxu0 %v2545
      %v2664 = vpop.f32.mrb[0].mxu0
      %v2665 = vadd.f32 %v2533, %v2664
      %v2666 = vpop.f32.mrb[0].mxu0
      %2667 = vmatprep.mubr.f32.mxu0 0.0
      %2668 = vmatmul.mubr.f32.gmra.mrb[0].mxu0 %v2548
      %v2669 = vpop.f32.mrb[0].mxu0
      %v2670 = vadd.f32 %v2533, %v2669
      %v2671 = vpop.f32.mrb[0].mxu0
      %2672 = vmatprep.mubr.f32.mxu0 0.0
      %2673 = vmatmul.mubr.f32.gmra.mrb[0].mxu0 %v2551
      %v2674 = vpop.f32.mrb[0].mxu0
      %v2675 = vadd.f32 %v2533, %v2674
      %v2676 = vpop.f32.mrb[0].mxu0
      %2677 = vmatprep.mubr.f32.mxu0 0.0
      %2678 = vmatmul.mubr.f32.gmra.mrb[0].mxu0 %v2554
      %v2679 = vpop.f32.mrb[0].mxu0
      %v2680 = vadd.f32 %v2533, %v2679
      %v2681 = vpop.f32.mrb[0].mxu0
      %2682 = vmatprep.mubr.f32.mxu0 0.0
      %2683 = vmatmul.mubr.f32.gmra.mrb[0].mxu0 %v2557
      %v2684 = vpop.f32.mrb[0].mxu0
      %v2685 = vadd.f32 %v2533, %v2684
      %v2686 = vpop.f32.mrb[0].mxu0
      %2687 = vmatprep.mubr.f32.mxu0 0.0
      %2688 = vmatmul.mubr.f32.gmra.mrb[0].mxu0 %v2560
      %v2689 = vpop.f32.mrb[0].mxu0
      %v2690 = vadd.f32 %v2533, %v2689
      %v2691 = vpop.f32.mrb[0].mxu0
      %2692 = vmatprep.mubr.f32.mxu0 0.0
      %2693 = vmatmul.mubr.f32.gmra.mrb[0].mxu0 %v2563
      %v2694 = vpop.f32.mrb[0].mxu0
      %v2695 = vadd.f32 %v2533, %v2694
      %v2696 = vpop.f32.mrb[0].mxu0
      %2697 = vmatprep.mubr.f32.mxu0 0.0
      %2698 = vmatmul.mubr.f32.gmra.mrb[0].mxu0 %v2566
      %v2699 = vpop.f32.mrb[0].mxu0
      %v2700 = vadd.f32 %v2533, %v2699
      %v2701 = vpop.f32.mrb[0].mxu0
      %2702 = vmatprep.mubr.f32.mxu0 0.0
      %2703 = vmatmul.mubr.f32.gmra.mrb[0].mxu0 %v2569
      %v2704 = vpop.f32.mrb[0].mxu0
      %v2705 = vadd.f32 %v2533, %v2704
      %v2706 = vpop.f32.mrb[0].mxu0
      %2707 = vmatprep.mubr.f32.mxu0 0.0
      %2708 = vmatmul.mubr.f32.gmra.mrb[0].mxu0 %v2572
      %v2709 = vpop.f32.mrb[0].mxu0
      %v2710 = vadd.f32 %v2533, %v2709
      %v2711 = vpop.f32.mrb[0].mxu0
      %2712 = vmatprep.mubr.f32.mxu0 0.0
      %2713 = vmatmul.mubr.f32.gmra.mrb[0].mxu0 %v2575
      %v2714 = vpop.f32.mrb[0].mxu0
      %v2715 = vadd.f32 %v2533, %v2714
      %v2716 = vpop.f32.mrb[0].mxu0
      %2717 = vmatprep.mubr.f32.mxu0 0.0
      %2718 = vmatmul.mubr.f32.gmra.mrb[0].mxu0 %v2578
      %v2719 = vpop.f32.mrb[0].mxu0
      %v2720 = vadd.f32 %v2533, %v2719
      %v2721 = vpop.f32.mrb[0].mxu0
      %2722 = vmatprep.mubr.f32.mxu0 0.0
      %2723 = vmatmul.mubr.f32.gmra.mrb[0].mxu0 %v2581
      %v2724 = vpop.f32.mrb[0].mxu0
      %v2725 = vadd.f32 %v2533, %v2724
      %v2726 = vpop.f32.mrb[0].mxu0
      %2727 = vdwg.mxu0
      %v2728 = vmax.f32 %v2650, 0.0
      %v2729 = vmax.f32 %v2655, 0.0
      %v2730 = vmax.f32 %v2660, 0.0
      %v2731 = vmax.f32 %v2665, 0.0
      %v2732 = vmax.f32 %v2670, 0.0
      %v2733 = vmax.f32 %v2675, 0.0
      %v2734 = vmax.f32 %v2680, 0.0
      %v2735 = vmax.f32 %v2685, 0.0
      %v2736 = vmax.f32 %v2690, 0.0
      %v2737 = vmax.f32 %v2695, 0.0
      %v2738 = vmax.f32 %v2700, 0.0
      %v2739 = vmax.f32 %v2705, 0.0
      %v2740 = vmax.f32 %v2710, 0.0
      %v2741 = vmax.f32 %v2715, 0.0
      %v2742 = vmax.f32 %v2720, 0.0
      %v2743 = vmax.f32 %v2725, 0.0
      %v2744 = vld [vmem:[%s4] sm:$0xff]
      %v2745 = vld [vmem:[%s4 + $0x8] sm:$0xff]
      %v2746 = vld [vmem:[%s4 + $0x10] sm:$0xff]
      %v2747 = vld [vmem:[%s4 + $0x18] sm:$0xff]
      %v2748 = vld [vmem:[%s5] sm:$0x7]
      %vm2749 = vcmask 23552
      %v2751 = vsel %vm2749, %v441, 0
      %v2754 = vsel %vm2749, %v442, 0
      %v2757 = vsel %vm2749, %v443, 0
      %v2760 = vsel %vm2749, %v444, 0
      %v2763 = vsel %vm2749, %v445, 0
      %v2766 = vsel %vm2749, %v446, 0
      %v2769 = vsel %vm2749, %v447, 0
      %v2772 = vsel %vm2749, %v448, 0
      %v2775 = vsel %vm2749, %v449, 0
      %v2778 = vsel %vm2749, %v450, 0
      %v2781 = vsel %vm2749, %v451, 0
      %v2784 = vsel %vm2749, %v452, 0
      %v2787 = vsel %vm2749, %v453, 0
      %v2790 = vsel %vm2749, %v454, 0
      %v2793 = vsel %vm2749, %v455, 0
      %v2796 = vsel %vm2749, %v456, 0
      %vm2798 = vcmask 1042432
      %v2800 = vsel %vm2798, %v2748, 0
      %2802 = vmatprep.subr.mxu0 0.0
      %2803 = vmatpush1.msra.mxu0 %v2800
      %2804 = vmatprep.subr.mxu0 0.0
      %2805 = vmatpush1.msra.mxu0 0.0
      %2806 = vmatprep.subr.mxu0 0.0
      %2807 = vmatpush1.msra.mxu0 0.0
      %2808 = vmatprep.subr.mxu0 0.0
      %2809 = vmatpush1.msra.mxu0 0.0
      %2810 = vmatprep.subr.mxu0 0.0
      %2811 = vmatpush1.msra.mxu0 0.0
      %2812 = vmatprep.subr.mxu0 0.0
      %2813 = vmatpush1.msra.mxu0 0.0
      %2814 = vmatprep.subr.mxu0 0.0
      %2815 = vmatpush1.msra.mxu0 0.0
      %2816 = vmatprep.subr.mxu0 0.0
      %2817 = vmatpush1.msra.mxu0 0.0
      %2818 = vmatprep.subr.mxu0 0.0
      %2819 = vmatpush1.msra.mxu0 0.0
      %2820 = vmatprep.subr.mxu0 0.0
      %2821 = vmatpush1.msra.mxu0 0.0
      %2822 = vmatprep.subr.mxu0 0.0
      %2823 = vmatpush1.msra.mxu0 0.0
      %2824 = vmatprep.subr.mxu0 0.0
      %2825 = vmatpush1.msra.mxu0 0.0
      %2826 = vmatprep.subr.mxu0 0.0
      %2827 = vmatpush1.msra.mxu0 0.0
      %2828 = vmatprep.subr.mxu0 0.0
      %2829 = vmatpush1.msra.mxu0 0.0
      %2830 = vmatprep.subr.mxu0 0.0
      %2831 = vmatpush1.msra.mxu0 0.0
      %2832 = vmatprep.subr.mxu0 0.0
      %2833 = vmatpush1.msra.mxu0 0.0
      %2834 = vmatprep.subr.mxu0 0.0
      %2835 = vmatpush1.msra.mxu0 0.0
      %2836 = vmatprep.subr.mxu0 0.0
      %2837 = vmatpush1.msra.mxu0 0.0
      %2838 = vmatprep.subr.mxu0 0.0
      %2839 = vmatpush1.msra.mxu0 0.0
      %2840 = vmatprep.subr.mxu0 0.0
      %2841 = vmatpush1.msra.mxu0 0.0
      %2842 = vmatprep.subr.mxu0 0.0
      %2843 = vmatpush1.msra.mxu0 0.0
      %2844 = vmatprep.subr.mxu0 0.0
      %2845 = vmatpush1.msra.mxu0 0.0
      %2846 = vmatprep.subr.mxu0 0.0
      %2847 = vmatpush1.msra.mxu0 0.0
      %2848 = vmatprep.subr.mxu0 0.0
      %2849 = vmatpush1.msra.mxu0 0.0
      %2850 = vmatprep.subr.mxu0 0.0
      %2851 = vmatpush1.msra.mxu0 0.0
      %2852 = vmatprep.subr.mxu0 0.0
      %2853 = vmatpush1.msra.mxu0 0.0
      %2854 = vmatprep.subr.mxu0 0.0
      %2855 = vmatpush1.msra.mxu0 0.0
      %2856 = vmatprep.subr.mxu0 0.0
      %2857 = vmatpush1.msra.mxu0 0.0
      %2858 = vmatprep.subr.mxu0 0.0
      %2859 = vmatpush1.msra.mxu0 0.0
      %2860 = vmatprep.subr.mxu0 0.0
      %2861 = vmatpush1.msra.mxu0 0.0
      %2862 = vmatprep.subr.mxu0 0.0
      %2863 = vmatpush1.msra.mxu0 0.0
      %2864 = vmatprep.subr.mxu0 0.0
      %2865 = vmatpush1.msra.mxu0 0.0
      %2866 = vmatprep.mubr.f32.mxu0 0.0
      %2867 = vmatmul.mubr.f32.gmra.mrb[0].mxu0 %v2751
      %v2868 = vpop.f32.mrb[0].mxu0
      %v2869 = vadd.f32 0.0, %v2868
      %v2870 = vpop.f32.mrb[0].mxu0
      %2871 = vmatprep.mubr.f32.mxu0 0.0
      %2872 = vmatmul.mubr.f32.gmra.mrb[0].mxu0 %v2754
      %v2873 = vpop.f32.mrb[0].mxu0
      %v2874 = vadd.f32 0.0, %v2873
      %v2875 = vpop.f32.mrb[0].mxu0
      %2876 = vmatprep.mubr.f32.mxu0 0.0
      %2877 = vmatmul.mubr.f32.gmra.mrb[0].mxu0 %v2757
      %v2878 = vpop.f32.mrb[0].mxu0
      %v2879 = vadd.f32 0.0, %v2878
      %v2880 = vpop.f32.mrb[0].mxu0
      %2881 = vmatprep.mubr.f32.mxu0 0.0
      %2882 = vmatmul.mubr.f32.gmra.mrb[0].mxu0 %v2760
      %v2883 = vpop.f32.mrb[0].mxu0
      %v2884 = vadd.f32 0.0, %v2883
      %v2885 = vpop.f32.mrb[0].mxu0
      %2886 = vmatprep.mubr.f32.mxu0 0.0
      %2887 = vmatmul.mubr.f32.gmra.mrb[0].mxu0 %v2763
      %v2888 = vpop.f32.mrb[0].mxu0
      %v2889 = vadd.f32 0.0, %v2888
      %v2890 = vpop.f32.mrb[0].mxu0
      %2891 = vmatprep.mubr.f32.mxu0 0.0
      %2892 = vmatmul.mubr.f32.gmra.mrb[0].mxu0 %v2766
      %v2893 = vpop.f32.mrb[0].mxu0
      %v2894 = vadd.f32 0.0, %v2893
      %v2895 = vpop.f32.mrb[0].mxu0
      %2896 = vmatprep.mubr.f32.mxu0 0.0
      %2897 = vmatmul.mubr.f32.gmra.mrb[0].mxu0 %v2769
      %v2898 = vpop.f32.mrb[0].mxu0
      %v2899 = vadd.f32 0.0, %v2898
      %v2900 = vpop.f32.mrb[0].mxu0
      %2901 = vmatprep.mubr.f32.mxu0 0.0
      %2902 = vmatmul.mubr.f32.gmra.mrb[0].mxu0 %v2772
      %v2903 = vpop.f32.mrb[0].mxu0
      %v2904 = vadd.f32 0.0, %v2903
      %v2905 = vpop.f32.mrb[0].mxu0
      %2906 = vmatprep.mubr.f32.mxu0 0.0
      %2907 = vmatmul.mubr.f32.gmra.mrb[0].mxu0 %v2775
      %v2908 = vpop.f32.mrb[0].mxu0
      %v2909 = vadd.f32 0.0, %v2908
      %v2910 = vpop.f32.mrb[0].mxu0
      %2911 = vmatprep.mubr.f32.mxu0 0.0
      %2912 = vmatmul.mubr.f32.gmra.mrb[0].mxu0 %v2778
      %v2913 = vpop.f32.mrb[0].mxu0
      %v2914 = vadd.f32 0.0, %v2913
      %v2915 = vpop.f32.mrb[0].mxu0
      %2916 = vmatprep.mubr.f32.mxu0 0.0
      %2917 = vmatmul.mubr.f32.gmra.mrb[0].mxu0 %v2781
      %v2918 = vpop.f32.mrb[0].mxu0
      %v2919 = vadd.f32 0.0, %v2918
      %v2920 = vpop.f32.mrb[0].mxu0
      %2921 = vmatprep.mubr.f32.mxu0 0.0
      %2922 = vmatmul.mubr.f32.gmra.mrb[0].mxu0 %v2784
      %v2923 = vpop.f32.mrb[0].mxu0
      %v2924 = vadd.f32 0.0, %v2923
      %v2925 = vpop.f32.mrb[0].mxu0
      %2926 = vmatprep.mubr.f32.mxu0 0.0
      %2927 = vmatmul.mubr.f32.gmra.mrb[0].mxu0 %v2787
      %v2928 = vpop.f32.mrb[0].mxu0
      %v2929 = vadd.f32 0.0, %v2928
      %v2930 = vpop.f32.mrb[0].mxu0
      %2931 = vmatprep.mubr.f32.mxu0 0.0
      %2932 = vmatmul.mubr.f32.gmra.mrb[0].mxu0 %v2790
      %v2933 = vpop.f32.mrb[0].mxu0
      %v2934 = vadd.f32 0.0, %v2933
      %v2935 = vpop.f32.mrb[0].mxu0
      %2936 = vmatprep.mubr.f32.mxu0 0.0
      %2937 = vmatmul.mubr.f32.gmra.mrb[0].mxu0 %v2793
      %v2938 = vpop.f32.mrb[0].mxu0
      %v2939 = vadd.f32 0.0, %v2938
      %v2940 = vpop.f32.mrb[0].mxu0
      %2941 = vmatprep.mubr.f32.mxu0 0.0
      %2942 = vmatmul.mubr.f32.gmra.mrb[0].mxu0 %v2796
      %v2943 = vpop.f32.mrb[0].mxu0
      %v2944 = vadd.f32 0.0, %v2943
      %v2945 = vpop.f32.mrb[0].mxu0
      %2946 = vdwg.mxu0
      %vm2947 = vcmask 261120
      %v2949 = vsel %vm2947, %v2728, 0
      %v2952 = vsel %vm2947, %v2729, 0
      %v2955 = vsel %vm2947, %v2730, 0
      %v2958 = vsel %vm2947, %v2731, 0
      %v2961 = vsel %vm2947, %v2732, 0
      %v2964 = vsel %vm2947, %v2733, 0
      %v2967 = vsel %vm2947, %v2734, 0
      %v2970 = vsel %vm2947, %v2735, 0
      %v2973 = vsel %vm2947, %v2736, 0
      %v2976 = vsel %vm2947, %v2737, 0
      %v2979 = vsel %vm2947, %v2738, 0
      %v2982 = vsel %vm2947, %v2739, 0
      %v2985 = vsel %vm2947, %v2740, 0
      %v2988 = vsel %vm2947, %v2741, 0
      %v2991 = vsel %vm2947, %v2742, 0
      %v2994 = vsel %vm2947, %v2743, 0
      %2996 = vmatprep.subr.mxu0 0.0
      %2997 = vmatpush1.msra.mxu0 %v2744
      %2998 = vmatprep.subr.mxu0 0.0
      %2999 = vmatpush1.msra.mxu0 %v2745
      %3000 = vmatprep.subr.mxu0 0.0
      %3001 = vmatpush1.msra.mxu0 %v2746
      %3002 = vmatprep.subr.mxu0 0.0
      %3003 = vmatpush1.msra.mxu0 %v2747
      %3004 = vmatprep.subr.mxu0 0.0
      %3005 = vmatpush1.msra.mxu0 0.0
      %3006 = vmatprep.subr.mxu0 0.0
      %3007 = vmatpush1.msra.mxu0 0.0
      %3008 = vmatprep.subr.mxu0 0.0
      %3009 = vmatpush1.msra.mxu0 0.0
      %3010 = vmatprep.subr.mxu0 0.0
      %3011 = vmatpush1.msra.mxu0 0.0
      %3012 = vmatprep.subr.mxu0 0.0
      %3013 = vmatpush1.msra.mxu0 0.0
      %3014 = vmatprep.subr.mxu0 0.0
      %3015 = vmatpush1.msra.mxu0 0.0
      %3016 = vmatprep.subr.mxu0 0.0
      %3017 = vmatpush1.msra.mxu0 0.0
      %3018 = vmatprep.subr.mxu0 0.0
      %3019 = vmatpush1.msra.mxu0 0.0
      %3020 = vmatprep.subr.mxu0 0.0
      %3021 = vmatpush1.msra.mxu0 0.0
      %3022 = vmatprep.subr.mxu0 0.0
      %3023 = vmatpush1.msra.mxu0 0.0
      %3024 = vmatprep.subr.mxu0 0.0
      %3025 = vmatpush1.msra.mxu0 0.0
      %3026 = vmatprep.subr.mxu0 0.0
      %3027 = vmatpush1.msra.mxu0 0.0
      %3028 = vmatprep.subr.mxu0 0.0
      %3029 = vmatpush1.msra.mxu0 0.0
      %3030 = vmatprep.subr.mxu0 0.0
      %3031 = vmatpush1.msra.mxu0 0.0
      %3032 = vmatprep.subr.mxu0 0.0
      %3033 = vmatpush1.msra.mxu0 0.0
      %3034 = vmatprep.subr.mxu0 0.0
      %3035 = vmatpush1.msra.mxu0 0.0
      %3036 = vmatprep.subr.mxu0 0.0
      %3037 = vmatpush1.msra.mxu0 0.0
      %3038 = vmatprep.subr.mxu0 0.0
      %3039 = vmatpush1.msra.mxu0 0.0
      %3040 = vmatprep.subr.mxu0 0.0
      %3041 = vmatpush1.msra.mxu0 0.0
      %3042 = vmatprep.subr.mxu0 0.0
      %3043 = vmatpush1.msra.mxu0 0.0
      %3044 = vmatprep.subr.mxu0 0.0
      %3045 = vmatpush1.msra.mxu0 0.0
      %3046 = vmatprep.subr.mxu0 0.0
      %3047 = vmatpush1.msra.mxu0 0.0
      %3048 = vmatprep.subr.mxu0 0.0
      %3049 = vmatpush1.msra.mxu0 0.0
      %3050 = vmatprep.subr.mxu0 0.0
      %3051 = vmatpush1.msra.mxu0 0.0
      %3052 = vmatprep.subr.mxu0 0.0
      %3053 = vmatpush1.msra.mxu0 0.0
      %3054 = vmatprep.subr.mxu0 0.0
      %3055 = vmatpush1.msra.mxu0 0.0
      %3056 = vmatprep.subr.mxu0 0.0
      %3057 = vmatpush1.msra.mxu0 0.0
      %3058 = vmatprep.subr.mxu0 0.0
      %3059 = vmatpush1.msra.mxu0 0.0
      %3060 = vmatprep.mubr.f32.mxu0 0.0
      %3061 = vmatmul.mubr.f32.gmra.mrb[0].mxu0 %v2949
      %v3062 = vpop.f32.mrb[0].mxu0
      %v3063 = vadd.f32 %v2869, %v3062
      %v3064 = vpop.f32.mrb[0].mxu0
      %3065 = vmatprep.mubr.f32.mxu0 0.0
      %3066 = vmatmul.mubr.f32.gmra.mrb[0].mxu0 %v2952
      %v3067 = vpop.f32.mrb[0].mxu0
      %v3068 = vadd.f32 %v2874, %v3067
      %v3069 = vpop.f32.mrb[0].mxu0
      %3070 = vmatprep.mubr.f32.mxu0 0.0
      %3071 = vmatmul.mubr.f32.gmra.mrb[0].mxu0 %v2955
      %v3072 = vpop.f32.mrb[0].mxu0
      %v3073 = vadd.f32 %v2879, %v3072
      %v3074 = vpop.f32.mrb[0].mxu0
      %3075 = vmatprep.mubr.f32.mxu0 0.0
      %3076 = vmatmul.mubr.f32.gmra.mrb[0].mxu0 %v2958
      %v3077 = vpop.f32.mrb[0].mxu0
      %v3078 = vadd.f32 %v2884, %v3077
      %v3079 = vpop.f32.mrb[0].mxu0
      %3080 = vmatprep.mubr.f32.mxu0 0.0
      %3081 = vmatmul.mubr.f32.gmra.mrb[0].mxu0 %v2961
      %v3082 = vpop.f32.mrb[0].mxu0
      %v3083 = vadd.f32 %v2889, %v3082
      %v3084 = vpop.f32.mrb[0].mxu0
      %3085 = vmatprep.mubr.f32.mxu0 0.0
      %3086 = vmatmul.mubr.f32.gmra.mrb[0].mxu0 %v2964
      %v3087 = vpop.f32.mrb[0].mxu0
      %v3088 = vadd.f32 %v2894, %v3087
      %v3089 = vpop.f32.mrb[0].mxu0
      %3090 = vmatprep.mubr.f32.mxu0 0.0
      %3091 = vmatmul.mubr.f32.gmra.mrb[0].mxu0 %v2967
      %v3092 = vpop.f32.mrb[0].mxu0
      %v3093 = vadd.f32 %v2899, %v3092
      %v3094 = vpop.f32.mrb[0].mxu0
      %3095 = vmatprep.mubr.f32.mxu0 0.0
      %3096 = vmatmul.mubr.f32.gmra.mrb[0].mxu0 %v2970
      %v3097 = vpop.f32.mrb[0].mxu0
      %v3098 = vadd.f32 %v2904, %v3097
      %v3099 = vpop.f32.mrb[0].mxu0
      %3100 = vmatprep.mubr.f32.mxu0 0.0
      %3101 = vmatmul.mubr.f32.gmra.mrb[0].mxu0 %v2973
      %v3102 = vpop.f32.mrb[0].mxu0
      %v3103 = vadd.f32 %v2909, %v3102
      %v3104 = vpop.f32.mrb[0].mxu0
      %3105 = vmatprep.mubr.f32.mxu0 0.0
      %3106 = vmatmul.mubr.f32.gmra.mrb[0].mxu0 %v2976
      %v3107 = vpop.f32.mrb[0].mxu0
      %v3108 = vadd.f32 %v2914, %v3107
      %v3109 = vpop.f32.mrb[0].mxu0
      %3110 = vmatprep.mubr.f32.mxu0 0.0
      %3111 = vmatmul.mubr.f32.gmra.mrb[0].mxu0 %v2979
      %v3112 = vpop.f32.mrb[0].mxu0
      %v3113 = vadd.f32 %v2919, %v3112
      %v3114 = vpop.f32.mrb[0].mxu0
      %3115 = vmatprep.mubr.f32.mxu0 0.0
      %3116 = vmatmul.mubr.f32.gmra.mrb[0].mxu0 %v2982
      %v3117 = vpop.f32.mrb[0].mxu0
      %v3118 = vadd.f32 %v2924, %v3117
      %v3119 = vpop.f32.mrb[0].mxu0
      %3120 = vmatprep.mubr.f32.mxu0 0.0
      %3121 = vmatmul.mubr.f32.gmra.mrb[0].mxu0 %v2985
      %v3122 = vpop.f32.mrb[0].mxu0
      %v3123 = vadd.f32 %v2929, %v3122
      %v3124 = vpop.f32.mrb[0].mxu0
      %3125 = vmatprep.mubr.f32.mxu0 0.0
      %3126 = vmatmul.mubr.f32.gmra.mrb[0].mxu0 %v2988
      %v3127 = vpop.f32.mrb[0].mxu0
      %v3128 = vadd.f32 %v2934, %v3127
      %v3129 = vpop.f32.mrb[0].mxu0
      %3130 = vmatprep.mubr.f32.mxu0 0.0
      %3131 = vmatmul.mubr.f32.gmra.mrb[0].mxu0 %v2991
      %v3132 = vpop.f32.mrb[0].mxu0
      %v3133 = vadd.f32 %v2939, %v3132
      %v3134 = vpop.f32.mrb[0].mxu0
      %3135 = vmatprep.mubr.f32.mxu0 0.0
      %3136 = vmatmul.mubr.f32.gmra.mrb[0].mxu0 %v2994
      %v3137 = vpop.f32.mrb[0].mxu0
      %v3138 = vadd.f32 %v2944, %v3137
      %v3139 = vpop.f32.mrb[0].mxu0
      %3140 = vdwg.mxu0
      %v3141 = vld [vmem:[%s6] sm:$0x1]
      %v3143 = vlaneseq
      %v3144 = vshrl.u32 %v3143, 7
      %v3145 = vsub.s32 0, %v3144
      %v3146 = vrot.slane %v3141, %v3145
      %v3148 = vadd.f32 %v3063, %v3146
      %v3149 = vadd.f32 %v3068, %v3146
      %v3150 = vadd.f32 %v3073, %v3146
      %v3151 = vadd.f32 %v3078, %v3146
      %v3152 = vadd.f32 %v3083, %v3146
      %v3153 = vadd.f32 %v3088, %v3146
      %v3154 = vadd.f32 %v3093, %v3146
      %v3155 = vadd.f32 %v3098, %v3146
      %v3156 = vadd.f32 %v3103, %v3146
      %v3157 = vadd.f32 %v3108, %v3146
      %v3158 = vadd.f32 %v3113, %v3146
      %v3159 = vadd.f32 %v3118, %v3146
      %v3160 = vadd.f32 %v3123, %v3146
      %v3161 = vadd.f32 %v3128, %v3146
      %v3162 = vadd.f32 %v3133, %v3146
      %v3163 = vadd.f32 %v3138, %v3146
      %v3164 = vmax.f32 %v3148, 0.0
      %v3165 = vmax.f32 %v3149, 0.0
      %v3166 = vmax.f32 %v3150, 0.0
      %v3167 = vmax.f32 %v3151, 0.0
      %v3168 = vmax.f32 %v3152, 0.0
      %v3169 = vmax.f32 %v3153, 0.0
      %v3170 = vmax.f32 %v3154, 0.0
      %v3171 = vmax.f32 %v3155, 0.0
      %v3172 = vmax.f32 %v3156, 0.0
      %v3173 = vmax.f32 %v3157, 0.0
      %v3174 = vmax.f32 %v3158, 0.0
      %v3175 = vmax.f32 %v3159, 0.0
      %v3176 = vmax.f32 %v3160, 0.0
      %v3177 = vmax.f32 %v3161, 0.0
      %v3178 = vmax.f32 %v3162, 0.0
      %v3179 = vmax.f32 %v3163, 0.0
      %v3180 = vld [vmem:[%s7] sm:$0xff]
      %v3181 = vld [vmem:[%s7 + $0x8] sm:$0xff]
      %v3182 = vld [vmem:[%s7 + $0x10] sm:$0xff]
      %v3183 = vld [vmem:[%s7 + $0x18] sm:$0xff]
      %v3184 = vld [vmem:[%s8] sm:$0x7]
      %v3186 = vsel %vm2798, %v3184, 0
      %3188 = vmatprep.subr.mxu0 0.0
      %3189 = vmatpush1.msra.mxu0 %v3186
      %3190 = vmatprep.subr.mxu0 0.0
      %3191 = vmatpush1.msra.mxu0 0.0
      %3192 = vmatprep.subr.mxu0 0.0
      %3193 = vmatpush1.msra.mxu0 0.0
      %3194 = vmatprep.subr.mxu0 0.0
      %3195 = vmatpush1.msra.mxu0 0.0
      %3196 = vmatprep.subr.mxu0 0.0
      %3197 = vmatpush1.msra.mxu0 0.0
      %3198 = vmatprep.subr.mxu0 0.0
      %3199 = vmatpush1.msra.mxu0 0.0
      %3200 = vmatprep.subr.mxu0 0.0
      %3201 = vmatpush1.msra.mxu0 0.0
      %3202 = vmatprep.subr.mxu0 0.0
      %3203 = vmatpush1.msra.mxu0 0.0
      %3204 = vmatprep.subr.mxu0 0.0
      %3205 = vmatpush1.msra.mxu0 0.0
      %3206 = vmatprep.subr.mxu0 0.0
      %3207 = vmatpush1.msra.mxu0 0.0
      %3208 = vmatprep.subr.mxu0 0.0
      %3209 = vmatpush1.msra.mxu0 0.0
      %3210 = vmatprep.subr.mxu0 0.0
      %3211 = vmatpush1.msra.mxu0 0.0
      %3212 = vmatprep.subr.mxu0 0.0
      %3213 = vmatpush1.msra.mxu0 0.0
      %3214 = vmatprep.subr.mxu0 0.0
      %3215 = vmatpush1.msra.mxu0 0.0
      %3216 = vmatprep.subr.mxu0 0.0
      %3217 = vmatpush1.msra.mxu0 0.0
      %3218 = vmatprep.subr.mxu0 0.0
      %3219 = vmatpush1.msra.mxu0 0.0
      %3220 = vmatprep.subr.mxu0 0.0
      %3221 = vmatpush1.msra.mxu0 0.0
      %3222 = vmatprep.subr.mxu0 0.0
      %3223 = vmatpush1.msra.mxu0 0.0
      %3224 = vmatprep.subr.mxu0 0.0
      %3225 = vmatpush1.msra.mxu0 0.0
      %3226 = vmatprep.subr.mxu0 0.0
      %3227 = vmatpush1.msra.mxu0 0.0
      %3228 = vmatprep.subr.mxu0 0.0
      %3229 = vmatpush1.msra.mxu0 0.0
      %3230 = vmatprep.subr.mxu0 0.0
      %3231 = vmatpush1.msra.mxu0 0.0
      %3232 = vmatprep.subr.mxu0 0.0
      %3233 = vmatpush1.msra.mxu0 0.0
      %3234 = vmatprep.subr.mxu0 0.0
      %3235 = vmatpush1.msra.mxu0 0.0
      %3236 = vmatprep.subr.mxu0 0.0
      %3237 = vmatpush1.msra.mxu0 0.0
      %3238 = vmatprep.subr.mxu0 0.0
      %3239 = vmatpush1.msra.mxu0 0.0
      %3240 = vmatprep.subr.mxu0 0.0
      %3241 = vmatpush1.msra.mxu0 0.0
      %3242 = vmatprep.subr.mxu0 0.0
      %3243 = vmatpush1.msra.mxu0 0.0
      %3244 = vmatprep.subr.mxu0 0.0
      %3245 = vmatpush1.msra.mxu0 0.0
      %3246 = vmatprep.subr.mxu0 0.0
      %3247 = vmatpush1.msra.mxu0 0.0
      %3248 = vmatprep.subr.mxu0 0.0
      %3249 = vmatpush1.msra.mxu0 0.0
      %3250 = vmatprep.subr.mxu0 0.0
      %3251 = vmatpush1.msra.mxu0 0.0
      %3252 = vmatprep.mubr.f32.mxu0 0.0
      %3253 = vmatmul.mubr.f32.gmra.mrb[0].mxu0 %v2751
      %v3254 = vpop.f32.mrb[0].mxu0
      %v3255 = vadd.f32 0.0, %v3254
      %v3256 = vpop.f32.mrb[0].mxu0
      %3257 = vmatprep.mubr.f32.mxu0 0.0
      %3258 = vmatmul.mubr.f32.gmra.mrb[0].mxu0 %v2754
      %v3259 = vpop.f32.mrb[0].mxu0
      %v3260 = vadd.f32 0.0, %v3259
      %v3261 = vpop.f32.mrb[0].mxu0
      %3262 = vmatprep.mubr.f32.mxu0 0.0
      %3263 = vmatmul.mubr.f32.gmra.mrb[0].mxu0 %v2757
      %v3264 = vpop.f32.mrb[0].mxu0
      %v3265 = vadd.f32 0.0, %v3264
      %v3266 = vpop.f32.mrb[0].mxu0
      %3267 = vmatprep.mubr.f32.mxu0 0.0
      %3268 = vmatmul.mubr.f32.gmra.mrb[0].mxu0 %v2760
      %v3269 = vpop.f32.mrb[0].mxu0
      %v3270 = vadd.f32 0.0, %v3269
      %v3271 = vpop.f32.mrb[0].mxu0
      %3272 = vmatprep.mubr.f32.mxu0 0.0
      %3273 = vmatmul.mubr.f32.gmra.mrb[0].mxu0 %v2763
      %v3274 = vpop.f32.mrb[0].mxu0
      %v3275 = vadd.f32 0.0, %v3274
      %v3276 = vpop.f32.mrb[0].mxu0
      %3277 = vmatprep.mubr.f32.mxu0 0.0
      %3278 = vmatmul.mubr.f32.gmra.mrb[0].mxu0 %v2766
      %v3279 = vpop.f32.mrb[0].mxu0
      %v3280 = vadd.f32 0.0, %v3279
      %v3281 = vpop.f32.mrb[0].mxu0
      %3282 = vmatprep.mubr.f32.mxu0 0.0
      %3283 = vmatmul.mubr.f32.gmra.mrb[0].mxu0 %v2769
      %v3284 = vpop.f32.mrb[0].mxu0
      %v3285 = vadd.f32 0.0, %v3284
      %v3286 = vpop.f32.mrb[0].mxu0
      %3287 = vmatprep.mubr.f32.mxu0 0.0
      %3288 = vmatmul.mubr.f32.gmra.mrb[0].mxu0 %v2772
      %v3289 = vpop.f32.mrb[0].mxu0
      %v3290 = vadd.f32 0.0, %v3289
      %v3291 = vpop.f32.mrb[0].mxu0
      %3292 = vmatprep.mubr.f32.mxu0 0.0
      %3293 = vmatmul.mubr.f32.gmra.mrb[0].mxu0 %v2775
      %v3294 = vpop.f32.mrb[0].mxu0
      %v3295 = vadd.f32 0.0, %v3294
      %v3296 = vpop.f32.mrb[0].mxu0
      %3297 = vmatprep.mubr.f32.mxu0 0.0
      %3298 = vmatmul.mubr.f32.gmra.mrb[0].mxu0 %v2778
      %v3299 = vpop.f32.mrb[0].mxu0
      %v3300 = vadd.f32 0.0, %v3299
      %v3301 = vpop.f32.mrb[0].mxu0
      %3302 = vmatprep.mubr.f32.mxu0 0.0
      %3303 = vmatmul.mubr.f32.gmra.mrb[0].mxu0 %v2781
      %v3304 = vpop.f32.mrb[0].mxu0
      %v3305 = vadd.f32 0.0, %v3304
      %v3306 = vpop.f32.mrb[0].mxu0
      %3307 = vmatprep.mubr.f32.mxu0 0.0
      %3308 = vmatmul.mubr.f32.gmra.mrb[0].mxu0 %v2784
      %v3309 = vpop.f32.mrb[0].mxu0
      %v3310 = vadd.f32 0.0, %v3309
      %v3311 = vpop.f32.mrb[0].mxu0
      %3312 = vmatprep.mubr.f32.mxu0 0.0
      %3313 = vmatmul.mubr.f32.gmra.mrb[0].mxu0 %v2787
      %v3314 = vpop.f32.mrb[0].mxu0
      %v3315 = vadd.f32 0.0, %v3314
      %v3316 = vpop.f32.mrb[0].mxu0
      %3317 = vmatprep.mubr.f32.mxu0 0.0
      %3318 = vmatmul.mubr.f32.gmra.mrb[0].mxu0 %v2790
      %v3319 = vpop.f32.mrb[0].mxu0
      %v3320 = vadd.f32 0.0, %v3319
      %v3321 = vpop.f32.mrb[0].mxu0
      %3322 = vmatprep.mubr.f32.mxu0 0.0
      %3323 = vmatmul.mubr.f32.gmra.mrb[0].mxu0 %v2793
      %v3324 = vpop.f32.mrb[0].mxu0
      %v3325 = vadd.f32 0.0, %v3324
      %v3326 = vpop.f32.mrb[0].mxu0
      %3327 = vmatprep.mubr.f32.mxu0 0.0
      %3328 = vmatmul.mubr.f32.gmra.mrb[0].mxu0 %v2796
      %v3329 = vpop.f32.mrb[0].mxu0
      %v3330 = vadd.f32 0.0, %v3329
      %v3331 = vpop.f32.mrb[0].mxu0
      %3332 = vdwg.mxu0
      %v3334 = vsel %vm2947, %v3164, 0
      %v3337 = vsel %vm2947, %v3165, 0
      %v3340 = vsel %vm2947, %v3166, 0
      %v3343 = vsel %vm2947, %v3167, 0
      %v3346 = vsel %vm2947, %v3168, 0
      %v3349 = vsel %vm2947, %v3169, 0
      %v3352 = vsel %vm2947, %v3170, 0
      %v3355 = vsel %vm2947, %v3171, 0
      %v3358 = vsel %vm2947, %v3172, 0
      %v3361 = vsel %vm2947, %v3173, 0
      %v3364 = vsel %vm2947, %v3174, 0
      %v3367 = vsel %vm2947, %v3175, 0
      %v3370 = vsel %vm2947, %v3176, 0
      %v3373 = vsel %vm2947, %v3177, 0
      %v3376 = vsel %vm2947, %v3178, 0
      %v3379 = vsel %vm2947, %v3179, 0
      %3381 = vmatprep.subr.mxu0 0.0
      %3382 = vmatpush1.msra.mxu0 %v3180
      %3383 = vmatprep.subr.mxu0 0.0
      %3384 = vmatpush1.msra.mxu0 %v3181
      %3385 = vmatprep.subr.mxu0 0.0
      %3386 = vmatpush1.msra.mxu0 %v3182
      %3387 = vmatprep.subr.mxu0 0.0
      %3388 = vmatpush1.msra.mxu0 %v3183
      %3389 = vmatprep.subr.mxu0 0.0
      %3390 = vmatpush1.msra.mxu0 0.0
      %3391 = vmatprep.subr.mxu0 0.0
      %3392 = vmatpush1.msra.mxu0 0.0
      %3393 = vmatprep.subr.mxu0 0.0
      %3394 = vmatpush1.msra.mxu0 0.0
      %3395 = vmatprep.subr.mxu0 0.0
      %3396 = vmatpush1.msra.mxu0 0.0
      %3397 = vmatprep.subr.mxu0 0.0
      %3398 = vmatpush1.msra.mxu0 0.0
      %3399 = vmatprep.subr.mxu0 0.0
      %3400 = vmatpush1.msra.mxu0 0.0
      %3401 = vmatprep.subr.mxu0 0.0
      %3402 = vmatpush1.msra.mxu0 0.0
      %3403 = vmatprep.subr.mxu0 0.0
      %3404 = vmatpush1.msra.mxu0 0.0
      %3405 = vmatprep.subr.mxu0 0.0
      %3406 = vmatpush1.msra.mxu0 0.0
      %3407 = vmatprep.subr.mxu0 0.0
      %3408 = vmatpush1.msra.mxu0 0.0
      %3409 = vmatprep.subr.mxu0 0.0
      %3410 = vmatpush1.msra.mxu0 0.0
      %3411 = vmatprep.subr.mxu0 0.0
      %3412 = vmatpush1.msra.mxu0 0.0
      %3413 = vmatprep.subr.mxu0 0.0
      %3414 = vmatpush1.msra.mxu0 0.0
      %3415 = vmatprep.subr.mxu0 0.0
      %3416 = vmatpush1.msra.mxu0 0.0
      %3417 = vmatprep.subr.mxu0 0.0
      %3418 = vmatpush1.msra.mxu0 0.0
      %3419 = vmatprep.subr.mxu0 0.0
      %3420 = vmatpush1.msra.mxu0 0.0
      %3421 = vmatprep.subr.mxu0 0.0
      %3422 = vmatpush1.msra.mxu0 0.0
      %3423 = vmatprep.subr.mxu0 0.0
      %3424 = vmatpush1.msra.mxu0 0.0
      %3425 = vmatprep.subr.mxu0 0.0
      %3426 = vmatpush1.msra.mxu0 0.0
      %3427 = vmatprep.subr.mxu0 0.0
      %3428 = vmatpush1.msra.mxu0 0.0
      %3429 = vmatprep.subr.mxu0 0.0
      %3430 = vmatpush1.msra.mxu0 0.0
      %3431 = vmatprep.subr.mxu0 0.0
      %3432 = vmatpush1.msra.mxu0 0.0
      %3433 = vmatprep.subr.mxu0 0.0
      %3434 = vmatpush1.msra.mxu0 0.0
      %3435 = vmatprep.subr.mxu0 0.0
      %3436 = vmatpush1.msra.mxu0 0.0
      %3437 = vmatprep.subr.mxu0 0.0
      %3438 = vmatpush1.msra.mxu0 0.0
      %3439 = vmatprep.subr.mxu0 0.0
      %3440 = vmatpush1.msra.mxu0 0.0
      %3441 = vmatprep.subr.mxu0 0.0
      %3442 = vmatpush1.msra.mxu0 0.0
      %3443 = vmatprep.subr.mxu0 0.0
      %3444 = vmatpush1.msra.mxu0 0.0
      %3445 = vmatprep.mubr.f32.mxu0 0.0
      %3446 = vmatmul.mubr.f32.gmra.mrb[0].mxu0 %v3334
      %v3447 = vpop.f32.mrb[0].mxu0
      %v3448 = vadd.f32 %v3255, %v3447
      %v3449 = vpop.f32.mrb[0].mxu0
      %3450 = vmatprep.mubr.f32.mxu0 0.0
      %3451 = vmatmul.mubr.f32.gmra.mrb[0].mxu0 %v3337
      %v3452 = vpop.f32.mrb[0].mxu0
      %v3453 = vadd.f32 %v3260, %v3452
      %v3454 = vpop.f32.mrb[0].mxu0
      %3455 = vmatprep.mubr.f32.mxu0 0.0
      %3456 = vmatmul.mubr.f32.gmra.mrb[0].mxu0 %v3340
      %v3457 = vpop.f32.mrb[0].mxu0
      %v3458 = vadd.f32 %v3265, %v3457
      %v3459 = vpop.f32.mrb[0].mxu0
      %3460 = vmatprep.mubr.f32.mxu0 0.0
      %3461 = vmatmul.mubr.f32.gmra.mrb[0].mxu0 %v3343
      %v3462 = vpop.f32.mrb[0].mxu0
      %v3463 = vadd.f32 %v3270, %v3462
      %v3464 = vpop.f32.mrb[0].mxu0
      %3465 = vmatprep.mubr.f32.mxu0 0.0
      %3466 = vmatmul.mubr.f32.gmra.mrb[0].mxu0 %v3346
      %v3467 = vpop.f32.mrb[0].mxu0
      %v3468 = vadd.f32 %v3275, %v3467
      %v3469 = vpop.f32.mrb[0].mxu0
      %3470 = vmatprep.mubr.f32.mxu0 0.0
      %3471 = vmatmul.mubr.f32.gmra.mrb[0].mxu0 %v3349
      %v3472 = vpop.f32.mrb[0].mxu0
      %v3473 = vadd.f32 %v3280, %v3472
      %v3474 = vpop.f32.mrb[0].mxu0
      %3475 = vmatprep.mubr.f32.mxu0 0.0
      %3476 = vmatmul.mubr.f32.gmra.mrb[0].mxu0 %v3352
      %v3477 = vpop.f32.mrb[0].mxu0
      %v3478 = vadd.f32 %v3285, %v3477
      %v3479 = vpop.f32.mrb[0].mxu0
      %3480 = vmatprep.mubr.f32.mxu0 0.0
      %3481 = vmatmul.mubr.f32.gmra.mrb[0].mxu0 %v3355
      %v3482 = vpop.f32.mrb[0].mxu0
      %v3483 = vadd.f32 %v3290, %v3482
      %v3484 = vpop.f32.mrb[0].mxu0
      %3485 = vmatprep.mubr.f32.mxu0 0.0
      %3486 = vmatmul.mubr.f32.gmra.mrb[0].mxu0 %v3358
      %v3487 = vpop.f32.mrb[0].mxu0
      %v3488 = vadd.f32 %v3295, %v3487
      %v3489 = vpop.f32.mrb[0].mxu0
      %3490 = vmatprep.mubr.f32.mxu0 0.0
      %3491 = vmatmul.mubr.f32.gmra.mrb[0].mxu0 %v3361
      %v3492 = vpop.f32.mrb[0].mxu0
      %v3493 = vadd.f32 %v3300, %v3492
      %v3494 = vpop.f32.mrb[0].mxu0
      %3495 = vmatprep.mubr.f32.mxu0 0.0
      %3496 = vmatmul.mubr.f32.gmra.mrb[0].mxu0 %v3364
      %v3497 = vpop.f32.mrb[0].mxu0
      %v3498 = vadd.f32 %v3305, %v3497
      %v3499 = vpop.f32.mrb[0].mxu0
      %3500 = vmatprep.mubr.f32.mxu0 0.0
      %3501 = vmatmul.mubr.f32.gmra.mrb[0].mxu0 %v3367
      %v3502 = vpop.f32.mrb[0].mxu0
      %v3503 = vadd.f32 %v3310, %v3502
      %v3504 = vpop.f32.mrb[0].mxu0
      %3505 = vmatprep.mubr.f32.mxu0 0.0
      %3506 = vmatmul.mubr.f32.gmra.mrb[0].mxu0 %v3370
      %v3507 = vpop.f32.mrb[0].mxu0
      %v3508 = vadd.f32 %v3315, %v3507
      %v3509 = vpop.f32.mrb[0].mxu0
      %3510 = vmatprep.mubr.f32.mxu0 0.0
      %3511 = vmatmul.mubr.f32.gmra.mrb[0].mxu0 %v3373
      %v3512 = vpop.f32.mrb[0].mxu0
      %v3513 = vadd.f32 %v3320, %v3512
      %v3514 = vpop.f32.mrb[0].mxu0
      %3515 = vmatprep.mubr.f32.mxu0 0.0
      %3516 = vmatmul.mubr.f32.gmra.mrb[0].mxu0 %v3376
      %v3517 = vpop.f32.mrb[0].mxu0
      %v3518 = vadd.f32 %v3325, %v3517
      %v3519 = vpop.f32.mrb[0].mxu0
      %3520 = vmatprep.mubr.f32.mxu0 0.0
      %3521 = vmatmul.mubr.f32.gmra.mrb[0].mxu0 %v3379
      %v3522 = vpop.f32.mrb[0].mxu0
      %v3523 = vadd.f32 %v3330, %v3522
      %v3524 = vpop.f32.mrb[0].mxu0
      %3525 = vdwg.mxu0
      %v3526 = vld [vmem:[%s9] sm:$0x1]
      %v3528 = vlaneseq
      %v3529 = vshrl.u32 %v3528, 7
      %v3530 = vsub.s32 0, %v3529
      %v3531 = vrot.slane %v3526, %v3530
      %v3533 = vadd.f32 %v3448, %v3531
      %v3534 = vadd.f32 %v3453, %v3531
      %v3535 = vadd.f32 %v3458, %v3531
      %v3536 = vadd.f32 %v3463, %v3531
      %v3537 = vadd.f32 %v3468, %v3531
      %v3538 = vadd.f32 %v3473, %v3531
      %v3539 = vadd.f32 %v3478, %v3531
      %v3540 = vadd.f32 %v3483, %v3531
      %v3541 = vadd.f32 %v3488, %v3531
      %v3542 = vadd.f32 %v3493, %v3531
      %v3543 = vadd.f32 %v3498, %v3531
      %v3544 = vadd.f32 %v3503, %v3531
      %v3545 = vadd.f32 %v3508, %v3531
      %v3546 = vadd.f32 %v3513, %v3531
      %v3547 = vadd.f32 %v3518, %v3531
      %v3548 = vadd.f32 %v3523, %v3531
      %v3549 = vtanh.pop %v3533
      %v3550 = vtanh.pop %v3534
      %v3551 = vtanh.pop %v3535
      %v3552 = vtanh.pop %v3536
      %v3553 = vtanh.pop %v3537
      %v3554 = vtanh.pop %v3538
      %v3555 = vtanh.pop %v3539
      %v3556 = vtanh.pop %v3540
      %v3557 = vtanh.pop %v3541
      %v3558 = vtanh.pop %v3542
      %v3559 = vtanh.pop %v3543
      %v3560 = vtanh.pop %v3544
      %v3561 = vtanh.pop %v3545
      %v3562 = vtanh.pop %v3546
      %v3563 = vtanh.pop %v3547
      %v3564 = vtanh.pop %v3548
      %v3565 = vadd.f32 %v441, %v3549
      %v3566 = vadd.f32 %v442, %v3550
      %v3567 = vadd.f32 %v443, %v3551
      %v3568 = vadd.f32 %v444, %v3552
      %v3569 = vadd.f32 %v445, %v3553
      %v3570 = vadd.f32 %v446, %v3554
      %v3571 = vadd.f32 %v447, %v3555
      %v3572 = vadd.f32 %v448, %v3556
      %v3573 = vadd.f32 %v449, %v3557
      %v3574 = vadd.f32 %v450, %v3558
      %v3575 = vadd.f32 %v451, %v3559
      %v3576 = vadd.f32 %v452, %v3560
      %v3577 = vadd.f32 %v453, %v3561
      %v3578 = vadd.f32 %v454, %v3562
      %v3579 = vadd.f32 %v455, %v3563
      %v3580 = vadd.f32 %v456, %v3564
      %3581 = vst.msk [vmem:[%s403] sm:$0xff] %vm2749, %v3565
      %3582 = vst.msk [vmem:[%s403 + $0x8] sm:$0xff] %vm2749, %v3566
      %3583 = vst.msk [vmem:[%s403 + $0x10] sm:$0xff] %vm2749, %v3567
      %3584 = vst.msk [vmem:[%s403 + $0x18] sm:$0xff] %vm2749, %v3568
      %3585 = vst.msk [vmem:[%s403 + $0x20] sm:$0xff] %vm2749, %v3569
      %3586 = vst.msk [vmem:[%s403 + $0x28] sm:$0xff] %vm2749, %v3570
      %3587 = vst.msk [vmem:[%s403 + $0x30] sm:$0xff] %vm2749, %v3571
      %3588 = vst.msk [vmem:[%s403 + $0x38] sm:$0xff] %vm2749, %v3572
      %3589 = vst.msk [vmem:[%s403 + $0x40] sm:$0xff] %vm2749, %v3573
      %3590 = vst.msk [vmem:[%s403 + $0x48] sm:$0xff] %vm2749, %v3574
      %3591 = vst.msk [vmem:[%s403 + $0x50] sm:$0xff] %vm2749, %v3575
      %3592 = vst.msk [vmem:[%s403 + $0x58] sm:$0xff] %vm2749, %v3576
      %3593 = vst.msk [vmem:[%s403 + $0x60] sm:$0xff] %vm2749, %v3577
      %3594 = vst.msk [vmem:[%s403 + $0x68] sm:$0xff] %vm2749, %v3578
      %3595 = vst.msk [vmem:[%s403 + $0x70] sm:$0xff] %vm2749, %v3579
      %3596 = vst.msk [vmem:[%s403 + $0x78] sm:$0xff] %vm2749, %v3580
      %s3597 = smul.u32 16, %s25
      %p3598 = scmp.lt.s32.totalorder %s26, 1
      %s3599 = scalar_select %p3598, %s26, 1
      %p3600 = scmp.lt.s32.totalorder %s3597, 31
      %s3601 = scalar_select %p3600, %s3597, 31
      %s3602 = smul.addr %s3599, 32
      %s3603 = sadd.s32 %s3601, %s3602
      %s3604 = smul.addr %s3603, 8
      %s3605 = scalar_lea.vmem %s10, %s3604
      // Predicated region
      $region65: #{tpu_custom_call.1} parent=59 // pred_check
        %p3606 = pneg %p273
      $region66: #{tpu_custom_call.1} parent=59 // pred_check_branch
        %3608 = sbr.rel (%p3606) target = $region68
      $region67: #{tpu_custom_call.1} parent=59 // pred_region
        %s3609 = smul.u32 16, %s25
      $region68: #{tpu_custom_call.1} parent=59 // pred_fallthru
        _
    $region60: #{tpu_custom_call.1} parent=5 // pred_fallthru
      _
    %p3610 = scmp.le.s32.totalorder 2, %s16
    // Predicated region
    $region69: #{tpu_custom_call.1} parent=5 // pred_check
      %p3611 = pneg %p3610
    $region70: #{tpu_custom_call.1} parent=5 // pred_check_branch
      %3613 = sbr.rel (%p3611) target = $region72
    $region71: #{tpu_custom_call.1} parent=5 // pred_region
      %s3614 = ssub.s32 %s16, 2
      // Predicated region
      $region73: #{tpu_custom_call.1} parent=71 // pred_check
        %p3615 = pneg %p279
      $region74: #{tpu_custom_call.1} parent=71 // pred_check_branch
        %3617 = sbr.rel (%p3615) target = $region76
      $region75: #{tpu_custom_call.1} parent=71 // pred_region
        %s3618 = smul.u32 16, %s27
        %p3619 = scmp.lt.s32.totalorder %s28, 1
        %s3620 = scalar_select %p3619, %s28, 1
        %p3621 = scmp.lt.s32.totalorder %s3618, 31
        %s3622 = scalar_select %p3621, %s3618, 31
        %s3623 = smul.addr %s3620, 32
        %s3624 = sadd.s32 %s3622, %s3623
        %s3625 = smul.addr %s3624, 8
        %s3626 = scalar_lea.vmem %s10, %s3625
      $region76: #{tpu_custom_call.1} parent=71 // pred_fallthru
        _
    $region72: #{tpu_custom_call.1} parent=5 // pred_fallthru
      _
  $region6: #{tpu_custom_call.1} parent=0 // loop_footer
    %s20 = sadd.s32 1, %s16
  $region7: #{tpu_custom_call.1} parent=0 // loop_footer_branch
    %15 = sbr.rel target = $region3
  $region8: #{tpu_custom_call.1} parent=0 // loop_exit
    _

</llo_original>
